<compile_context>
chip_gen: v7x
topology: tpu7x:2x2x1
jax: 0.10.0
libtpu: 0.0.40
codegen_flags: <defaults>
</compile_context>

<pallas_src>
import functools

import jax
import jax.numpy as jnp
from jax.experimental import pallas as pl
from jax.experimental.pallas import tpu as pltpu

_NEG_INF = -1e9                       # f32-safe large negative for masking
_VMEM_LIMIT = 48 * 1024 * 1024        # below v7x's 64 MiB physical VMEM


# --------------------------------------------------------------------------
# In-kernel helpers
# --------------------------------------------------------------------------

def _layernorm(x2, g, b, eps):
    mu = jnp.mean(x2, axis=-1, keepdims=True)
    var = jnp.mean(jnp.square(x2 - mu), axis=-1, keepdims=True)
    return (x2 - mu) * jax.lax.rsqrt(var + eps) * g + b


def _bf16(x):
    return x.astype(jnp.bfloat16)


def _const_spec(shape, grid_rank):
    """Full-array block whose index does not change across the grid (fetched once)."""
    n = len(shape)
    return pl.BlockSpec(shape, lambda *g, _n=n: (0,) * _n)


def _pick_tile(n, cap=256, multiple=8):
    """Largest row tile <= cap that divides n, is a multiple of 8 and yields >=2 steps."""
    t = min(cap, n)
    t -= t % multiple
    while t >= multiple:
        if n % t == 0 and (n // t) >= 2:
            return t
        t -= multiple
    return n


# --------------------------------------------------------------------------
# Kernels
# --------------------------------------------------------------------------

def _vision_input_kernel(*refs, num_layers):
    """pool(pixels) -> per-layer 1x1-conv -> projection -> +pos_emb ; learnable tokens.

    Runs per batch element (grid over B). adaptive_avg_pool2d((1,1)) commutes with
    the 1x1 conv + bias, so pixels are pooled first (pool-folded conv).
    """
    px_ref = refs[0]                                  # (1, C_in, H*W)
    pos_ref = refs[1 + 4 * num_layers]                # (feat_seq_len, D)
    learn_ref = refs[2 + 4 * num_layers]              # (NR, D)
    out_ref = refs[-1]                                # (1, feat_seq_len + NR, D)

    pooled = jnp.mean(px_ref[...], axis=2)            # (1, C_in)

    for i in range(num_layers):
        cw = refs[1 + 4 * i][...]
        cb = refs[2 + 4 * i][...]
        pw = refs[3 + 4 * i][...]
        pb = refs[4 + 4 * i][...]
        f = jnp.dot(pooled, cw, preferred_element_type=jnp.float32) + cb   # pooled 1x1 conv
        p = jnp.dot(f, pw, preferred_element_type=jnp.float32) + pb        # projection to hidden
        p = p + pos_ref[i:i + 1, :]                                        # + position embedding
        out_ref[:, i:i + 1, :] = p[:, None, :]        # direct slice store (no list+concat)

    out_ref[:, num_layers:, :] = learn_ref[...][None, :, :]                # learnable tokens


def _transformer_layer_kernel(*refs, num_heads, eps, masked):
    """One full pre-LN transformer layer (attention + MLP) for one batch element.

    x + Attn(LN1(x)) -> y ; y + MLP(LN2(y)).  All heads handled with batched
    leading-'h' einsums, a single full-D output-projection GEMM, bf16 MXU
    operands with f32 accumulation; mask (causal & key padding) built in-kernel.
    """
    if masked:
        (x_ref, g1_ref, b1_ref, wqkv_ref, bqkv_ref, wo_ref, bo_ref,
         g2_ref, b2_ref, w1_ref, c1_ref, w2_ref, c2_ref, m_ref, o_ref) = refs
    else:
        (x_ref, g1_ref, b1_ref, wqkv_ref, bqkv_ref, wo_ref, bo_ref,
         g2_ref, b2_ref, w1_ref, c1_ref, w2_ref, c2_ref, o_ref) = refs

    x = x_ref[...]                                    # (1, S, D)
    _, S, D = x.shape
    H = num_heads
    Dh = D // H
    x2 = x.reshape(S, D)

    # ---- attention ----
    h = _layernorm(x2, g1_ref[...], b1_ref[...], eps)
    qkv = jnp.dot(h.astype(jnp.bfloat16), wqkv_ref[...],
                  preferred_element_type=jnp.float32) + bqkv_ref[...]      # (S, 3D) f32

    scale = 1.0 / (Dh ** 0.5)
    qs = qkv[:, :D] * scale                            # scale folded into q (S*D muls, not H*S*S)
    q = jnp.stack([qs[:, hh * Dh:(hh + 1) * Dh] for hh in range(H)], axis=0)        # (H,S,Dh)
    k = jnp.stack([qkv[:, D + hh * Dh:D + (hh + 1) * Dh] for hh in range(H)], axis=0)
    v = jnp.stack([qkv[:, 2 * D + hh * Dh:2 * D + (hh + 1) * Dh] for hh in range(H)], axis=0)

    s = jnp.einsum("hqd,hkd->hqk", q.astype(jnp.bfloat16), k.astype(jnp.bfloat16),
                   preferred_element_type=jnp.float32)                     # (H, S, S)
    if masked:
        row = jax.lax.broadcasted_iota(jnp.int32, (S, S), 0)
        col = jax.lax.broadcasted_iota(jnp.int32, (S, S), 1)
        keep = (col <= row) & (m_ref[...].reshape(1, S) > 0.5)             # causal & key pad
        s = jnp.where(keep[None, :, :], s, _NEG_INF)                       # no additive bias tensor

    mx = jnp.max(s, axis=-1, keepdims=True)
    p = jnp.exp(s - mx)
    p = p * pl.reciprocal(jnp.sum(p, axis=-1, keepdims=True), approx=True)
    ctx = jnp.einsum("hqk,hkd->hqd", p.astype(jnp.bfloat16), v.astype(jnp.bfloat16),
                     preferred_element_type=jnp.float32)                   # (H, S, Dh)
    ctx2 = jnp.concatenate([ctx[hh] for hh in range(H)], axis=-1)          # (S, D)
    attn = jnp.dot(ctx2.astype(jnp.bfloat16), wo_ref[...],
                   preferred_element_type=jnp.float32) + bo_ref[...]       # ONE full-D GEMM
    y = x2 + attn

    # ---- MLP ----
    h2 = _layernorm(y, g2_ref[...], b2_ref[...], eps)
    ff = jnp.dot(h2.astype(jnp.bfloat16), w1_ref[...],
                 preferred_element_type=jnp.float32) + c1_ref[...]
    # TODO(synk): PyTorch F.gelu default is exact erf; tanh form used for Mosaic-safe lowering.
    ff = jax.nn.gelu(ff, approximate=True)
    out = jnp.dot(ff.astype(jnp.bfloat16), w2_ref[...],
                  preferred_element_type=jnp.float32) + c2_ref[...]
    o_ref[...] = (y + out).reshape(1, S, D)


def _ln_proj_kernel(x_ref, g_ref, b_ref, w_ref, bo_ref, o_ref, *, eps):
    """Final translation LayerNorm + out_proj for one batch element."""
    x = x_ref[...]                                    # (1, NR, D)
    _, NR, D = x.shape
    h = _layernorm(x.reshape(NR, D), g_ref[...], b_ref[...], eps)
    out = jnp.dot(h.astype(jnp.bfloat16), w_ref[...],
                  preferred_element_type=jnp.float32) + bo_ref[...]
    o_ref[...] = out[None, :, :]


def _lm_head_nll_kernel(h_ref, g_ref, b_ref, wte_ref, lab_ref, nll_ref,
                        m_sc, l_sc, t_sc, *, eps, tv):
    """Final LN + tied LM head, vocab-tiled with an online logsumexp.

    Grid = (row tiles [parallel], vocab tiles [arbitrary]).  Running max / sum /
    target-logit live in VMEM scratch; per-row NLL is written on the last vocab
    tile.  The (row, V) logits and the full wte are never resident at once.
    """
    vi = pl.program_id(1)

    @pl.when(vi == 0)
    def _():
        m_sc[...] = jnp.full_like(m_sc[...], -jnp.inf)
        l_sc[...] = jnp.zeros_like(l_sc[...])
        t_sc[...] = jnp.zeros_like(t_sc[...])

    hn = _layernorm(h_ref[...], g_ref[...], b_ref[...], eps)               # (TM, D)
    logits = jax.lax.dot_general(hn.astype(jnp.bfloat16), wte_ref[...],
                                 (((1,), (1,)), ((), ())),
                                 preferred_element_type=jnp.float32)       # (TM, TV)
    labels = lab_ref[...]                                                  # (TM, 1) int32
    col = jax.lax.broadcasted_iota(jnp.int32, logits.shape, 1) + vi * tv
    onehot = (col == labels).astype(jnp.float32)
    t_sc[...] += jnp.sum(logits * onehot, axis=-1, keepdims=True)

    m_new = jnp.maximum(m_sc[...], jnp.max(logits, axis=-1, keepdims=True))
    l_sc[...] = (l_sc[...] * jnp.exp(m_sc[...] - m_new)
                 + jnp.sum(jnp.exp(logits - m_new), axis=-1, keepdims=True))
    m_sc[...] = m_new

    @pl.when(vi == pl.num_programs(1) - 1)
    def _():
        nll_ref[...] = m_sc[...] + jnp.log(l_sc[...]) - t_sc[...]


# --------------------------------------------------------------------------
# Wrappers (pallas_call plumbing)
# --------------------------------------------------------------------------

def vision_encoder_input(pixel_values, cnn, tr, cfg):
    B, C, H, W = pixel_values.shape
    px = pixel_values.reshape(B, C, H * W)            # NCHW -> (B, C_in, HW); no data movement
    nl = len(cnn["conv_w"])
    args = [px]
    for i in range(nl):
        args += [cnn["conv_w"][i], cnn["conv_b"][i], tr["proj_w"][i], tr["proj_b"][i]]
    args += [tr["pos_emb"], tr["learnable"]]
    S_enc = cfg["feat_seq_len"] + cfg["nr_learnable_tokens"]
    D = cfg["hidden"]

    in_specs = [pl.BlockSpec((1, C, H * W), lambda b: (b, 0, 0))]
    in_specs += [_const_spec(a.shape, 1) for a in args[1:]]

    kern = functools.partial(_vision_input_kernel, num_layers=nl)
    return pl.pallas_call(
        kern,
        grid=(B,),
        in_specs=in_specs,
        out_specs=pl.BlockSpec((1, S_enc, D), lambda b: (b, 0, 0)),
        out_shape=jax.ShapeDtypeStruct((B, S_enc, D), jnp.float32),
        compiler_params=pltpu.CompilerParams(
            dimension_semantics=("parallel",), vmem_limit_bytes=_VMEM_LIMIT),
    )(*args)


def fused_transformer_layer(x, p, num_heads, eps, key_mask=None):
    """One pallas_call per layer: [LN1 -> QKV -> attn -> out_proj -> +res -> LN2 -> MLP -> +res]."""
    B, S, D = x.shape
    masked = key_mask is not None
    args = [x, p["ln1_g"], p["ln1_b"], p["wqkv"], p["bqkv"], p["wo"], p["bo"],
            p["ln2_g"], p["ln2_b"], p["w1"], p["b1"], p["w2"], p["b2"]]
    in_specs = [pl.BlockSpec((1, S, D), lambda b: (b, 0, 0))]
    in_specs += [_const_spec(a.shape, 1) for a in args[1:]]
    if masked:
        args.append(key_mask)                                  # (B, 1, S) f32
        in_specs.append(pl.BlockSpec((1, 1, S), lambda b: (b, 0, 0)))

    kern = functools.partial(_transformer_layer_kernel,
                             num_heads=num_heads, eps=eps, masked=masked)
    return pl.pallas_call(
        kern,
        grid=(B,),
        in_specs=in_specs,
        out_specs=pl.BlockSpec((1, S, D), lambda b: (b, 0, 0)),
        out_shape=jax.ShapeDtypeStruct((B, S, D), jnp.float32),
        compiler_params=pltpu.CompilerParams(
            dimension_semantics=("parallel",), vmem_limit_bytes=_VMEM_LIMIT),
    )(*args)


def ln_out_proj(x, tr, eps):
    B, NR, D = x.shape
    lm_dim = tr["out_w"].shape[1]
    args = [x, tr["ln_g"], tr["ln_b"], tr["out_w"], tr["out_b"]]
    in_specs = [pl.BlockSpec((1, NR, D), lambda b: (b, 0, 0))]
    in_specs += [_const_spec(a.shape, 1) for a in args[1:]]
    return pl.pallas_call(
        functools.partial(_ln_proj_kernel, eps=eps),
        grid=(B,),
        in_specs=in_specs,
        out_specs=pl.BlockSpec((1, NR, lm_dim), lambda b: (b, 0, 0)),
        out_shape=jax.ShapeDtypeStruct((B, NR, lm_dim), jnp.float32),
        compiler_params=pltpu.CompilerParams(
            dimension_semantics=("parallel",), vmem_limit_bytes=_VMEM_LIMIT),
    )(*args)


def lm_head_nll(h2, lm, labels2, eps):
    """Per-row NLL (unmasked); ignore-label masking + mean done in JAX glue."""
    N, D = h2.shape
    V = lm["wte_bf16"].shape[0]
    tm = _pick_tile(N, cap=256)
    tv = 128 if (V % 128 == 0 and V > 128) else V
    grid = (N // tm, V // tv)

    in_specs = [
        pl.BlockSpec((tm, D), lambda r, v: (r, 0)),            # hidden rows
        _const_spec(lm["lnf_g"].shape, 2),
        _const_spec(lm["lnf_b"].shape, 2),
        pl.BlockSpec((tv, D), lambda r, v: (v, 0)),            # streamed wte tile (bf16)
        pl.BlockSpec((tm, 1), lambda r, v: (r, 0)),            # labels
    ]
    return pl.pallas_call(
        functools.partial(_lm_head_nll_kernel, eps=eps, tv=tv),
        grid=grid,
        in_specs=in_specs,
        out_specs=pl.BlockSpec((tm, 1), lambda r, v: (r, 0)),
        out_shape=jax.ShapeDtypeStruct((N, 1), jnp.float32),
        scratch_shapes=[pltpu.VMEM((tm, 1), jnp.float32),      # running max
                        pltpu.VMEM((tm, 1), jnp.float32),      # running sum
                        pltpu.VMEM((tm, 1), jnp.float32)],     # target logit
        compiler_params=pltpu.CompilerParams(
            dimension_semantics=("parallel", "arbitrary"),
            vmem_limit_bytes=_VMEM_LIMIT),
    )(h2, lm["lnf_g"], lm["lnf_b"], lm["wte_bf16"], labels2)


# --------------------------------------------------------------------------
# Features2WordsModel forward (synthetic-weight re-implementation)
# --------------------------------------------------------------------------

def features2words_forward(pixel_values, input_ids, attention_mask, gt_captions, params, cfg):
    tr = params["translation"]
    lm = params["lm"]
    NR = cfg["nr_learnable_tokens"]

    # vision_feat_func == 'avg_pooling', eval-style path (no feature dropout / mask).
    # TODO(synk): full frozen ResNet50 backbone not reproduced; stand-in is one 1x1 conv per layer.
    x = vision_encoder_input(pixel_values, params["cnn"], tr, cfg)         # (B, S_enc, D)

    # TranslationTransformer (norm_first encoder; token_dropout=0 / no forced mask -> unmasked).
    for lp in tr["layers"]:
        x = fused_transformer_layer(x, lp, cfg["enc_heads"], cfg["ln_eps"])

    encoded = ln_out_proj(x[:, -NR:, :], tr, cfg["ln_eps"])                # (B, NR, lm_dim)

    # GPT-2-style frozen LM stand-in: splice visual tokens after BOS embedding.
    inputs_embeds = jnp.take(lm["wte"], input_ids, axis=0)                 # embedding lookup (glue)
    inputs_embeds = jnp.concatenate(
        [inputs_embeds[:, :1, :], encoded, inputs_embeds[:, 1:, :]], axis=1)
    B, S, Dl = inputs_embeds.shape
    h = inputs_embeds + lm["wpe"][:S][None, :, :]
    key_mask = attention_mask.astype(jnp.float32).reshape(B, 1, S)         # causal built in-kernel
    for bp in lm["blocks"]:
        h = fused_transformer_layer(h, bp, cfg["lm_heads"], cfg["lm_ln_eps"], key_mask=key_mask)

    # HF GPT-2 shifted-CE: logits[:, :-1] vs labels[:, 1:]  ==  logits[t] vs labels[t+1].
    shift_labels = jnp.concatenate(
        [gt_captions[:, 1:], jnp.full((B, 1), -100, gt_captions.dtype)], axis=1)
    labels2 = shift_labels.reshape(B * S, 1).astype(jnp.int32)
    nll = lm_head_nll(h.reshape(B * S, Dl), lm, labels2, cfg["lm_ln_eps"])  # (B*S, 1)
    valid = (labels2 != -100).astype(jnp.float32)
    return jnp.sum(nll * valid) / jnp.maximum(jnp.sum(valid), 1.0)


# --------------------------------------------------------------------------
# Deterministic parameter initialization (MXU weights stored once as bf16)
# --------------------------------------------------------------------------

def _normal(key, shape, scale=0.02):
    return jax.random.normal(key, shape, jnp.float32) * scale


def init_prenorm_layer(key, D, FF):
    ks = jax.random.split(key, 4)
    return {
        "ln1_g": jnp.ones((1, D), jnp.float32), "ln1_b": jnp.zeros((1, D), jnp.float32),
        "ln2_g": jnp.ones((1, D), jnp.float32), "ln2_b": jnp.zeros((1, D), jnp.float32),
        "wqkv": _bf16(_normal(ks[0], (D, 3 * D))), "bqkv": jnp.zeros((1, 3 * D), jnp.float32),
        "wo": _bf16(_normal(ks[1], (D, D))), "bo": jnp.zeros((1, D), jnp.float32),
        "w1": _bf16(_normal(ks[2], (D, FF))), "b1": jnp.zeros((1, FF), jnp.float32),
        "w2": _bf16(_normal(ks[3], (FF, D))), "b2": jnp.zeros((1, D), jnp.float32),
    }


def init_params(key, cfg):
    k_cnn, k_tr, k_lm = jax.random.split(key, 3)

    # synthetic CNN: one 1x1 conv per vision feature layer (vision path stays f32; one-time cost)
    cks = jax.random.split(k_cnn, len(cfg["img_embed_dims"]))
    cnn = {
        "conv_w": [_normal(cks[i], (3, c)) for i, c in enumerate(cfg["img_embed_dims"])],
        "conv_b": [jnp.zeros((1, c), jnp.float32) for c in cfg["img_embed_dims"]],
    }

    D = cfg["hidden"]
    nfl = len(cfg["img_embed_dims"])
    tks = jax.random.split(k_tr, 3 + nfl + cfg["enc_layers"])
    translation = {
        "learnable": _normal(tks[0], (cfg["nr_learnable_tokens"], D), 0.1),
        "pos_emb": _normal(tks[1], (cfg["feat_seq_len"], D), 0.1),
        "out_w": _bf16(_normal(tks[2], (D, cfg["lm_dim"]))),
        "out_b": jnp.zeros((1, cfg["lm_dim"]), jnp.float32),
        "proj_w": [_normal(tks[3 + i], (c, D)) for i, c in enumerate(cfg["img_embed_dims"])],
        "proj_b": [jnp.zeros((1, D), jnp.float32) for _ in cfg["img_embed_dims"]],
        "layers": [init_prenorm_layer(tks[3 + nfl + i], D, cfg["enc_ff"])
                   for i in range(cfg["enc_layers"])],
        "ln_g": jnp.ones((1, D), jnp.float32), "ln_b": jnp.zeros((1, D), jnp.float32),
    }

    lks = jax.random.split(k_lm, 2 + cfg["lm_layers"])
    Dl = cfg["lm_dim"]
    wte = _normal(lks[0], (cfg["vocab"], Dl))
    lm = {
        "wte": wte,                         # f32 master copy for the embedding lookup
        "wte_bf16": _bf16(wte),             # bf16 copy streamed by the tied LM head
        "wpe": _normal(lks[1], (cfg["max_pos"], Dl)),
        "blocks": [init_prenorm_layer(lks[2 + i], Dl, cfg["lm_ff"])
                   for i in range(cfg["lm_layers"])],
        "lnf_g": jnp.ones((1, Dl), jnp.float32), "lnf_b": jnp.zeros((1, Dl), jnp.float32),
    }
    return {"cnn": cnn, "translation": translation, "lm": lm}


# --------------------------------------------------------------------------
# Main
# --------------------------------------------------------------------------

if __name__ == "__main__":
    cfg = dict(
        hidden=32, enc_heads=4, enc_layers=2, enc_ff=64,
        nr_learnable_tokens=6, feat_seq_len=2, img_embed_dims=[32, 16],
        lm_dim=32, vocab=256, lm_heads=4, lm_layers=2, lm_ff=64, max_pos=64,
        ln_eps=1e-12, lm_ln_eps=1e-5,
    )

    key = jax.random.PRNGKey(0)
    kp, kx, ki, kg = jax.random.split(key, 4)
    params = init_params(kp, cfg)

    B, L = 2, 10
    S_lm = L + cfg["nr_learnable_tokens"]             # 16

    pixel_values = jax.random.normal(kx, (B, 3, 16, 16), jnp.float32)      # NCHW
    input_ids = jax.random.randint(ki, (B, L), 0, cfg["vocab"], jnp.int32)
    attention_mask = jnp.ones((B, S_lm), jnp.int32)
    gt = jax.random.randint(kg, (B, S_lm), 0, cfg["vocab"], jnp.int32)
    # ignore the visual (learnable-token) positions in the loss
    ignore = jnp.zeros((B, S_lm), bool).at[:, 1:1 + cfg["nr_learnable_tokens"]].set(True)
    gt_captions = jnp.where(ignore, -100, gt)

    fwd = jax.jit(lambda pv, ii, am, gc: features2words_forward(pv, ii, am, gc, params, cfg))
    loss = fwd(pixel_values, input_ids, attention_mask, gt_captions)
    loss = jax.block_until_ready(loss)
    assert loss.shape == () and jnp.isfinite(loss)
    print("KERNEL_OK")
</pallas_src>

<mosaic_0001>
module attributes {stable_mosaic.version = 11 : i64} {
  func.func @_vision_input_kernel(%arg0: i32, %arg1: memref<1x3x256xf32, #tpu.memory_space<vmem>>, %arg2: memref<3x32xf32, #tpu.memory_space<vmem>>, %arg3: memref<1x32xf32, #tpu.memory_space<vmem>>, %arg4: memref<32x32xf32, #tpu.memory_space<vmem>>, %arg5: memref<1x32xf32, #tpu.memory_space<vmem>>, %arg6: memref<3x16xf32, #tpu.memory_space<vmem>>, %arg7: memref<1x16xf32, #tpu.memory_space<vmem>>, %arg8: memref<16x32xf32, #tpu.memory_space<vmem>>, %arg9: memref<1x32xf32, #tpu.memory_space<vmem>>, %arg10: memref<2x32xf32, #tpu.memory_space<vmem>>, %arg11: memref<6x32xf32, #tpu.memory_space<vmem>>, %arg12: memref<1x8x32xf32, #tpu.memory_space<vmem>>) attributes {dimension_semantics = [#tpu.dimension_semantics<parallel>], iteration_bounds = array<i64: 2>, scalar_prefetch = 0 : i64, scratch_operands = 0 : i64, tpu.core_type = #tpu.core_type<tc>, window_params = [{transform_indices = @transform_0, window_bounds = array<i64: 1, 3, 256>}, {pipeline_mode = #tpu.pipeline_mode<synchronous>, transform_indices = @transform_1, window_bounds = array<i64: 3, 32>}, {pipeline_mode = #tpu.pipeline_mode<synchronous>, transform_indices = @transform_2, window_bounds = array<i64: 1, 32>}, {pipeline_mode = #tpu.pipeline_mode<synchronous>, transform_indices = @transform_3, window_bounds = array<i64: 32, 32>}, {pipeline_mode = #tpu.pipeline_mode<synchronous>, transform_indices = @transform_4, window_bounds = array<i64: 1, 32>}, {pipeline_mode = #tpu.pipeline_mode<synchronous>, transform_indices = @transform_5, window_bounds = array<i64: 3, 16>}, {pipeline_mode = #tpu.pipeline_mode<synchronous>, transform_indices = @transform_6, window_bounds = array<i64: 1, 16>}, {pipeline_mode = #tpu.pipeline_mode<synchronous>, transform_indices = @transform_7, window_bounds = array<i64: 16, 32>}, {pipeline_mode = #tpu.pipeline_mode<synchronous>, transform_indices = @transform_8, window_bounds = array<i64: 1, 32>}, {pipeline_mode = #tpu.pipeline_mode<synchronous>, transform_indices = @transform_9, window_bounds = array<i64: 2, 32>}, {pipeline_mode = #tpu.pipeline_mode<synchronous>, transform_indices = @transform_10, window_bounds = array<i64: 6, 32>}, {transform_indices = @transform_11, window_bounds = array<i64: 1, 8, 32>}]} {
    %c0 = arith.constant 0 : index
    %c0_0 = arith.constant 0 : index
    %c0_1 = arith.constant 0 : index
    %0 = vector.load %arg1[%c0, %c0_0, %c0_1] : memref<1x3x256xf32, #tpu.memory_space<vmem>>, vector<1x3x256xf32>
    %cst = arith.constant dense<0.000000e+00> : vector<1x3xf32>
    %1 = vector.multi_reduction <add>, %0, %cst [2] : vector<1x3x256xf32> to vector<1x3xf32>
    %cst_2 = arith.constant 2.560000e+02 : f32
    %2 = vector.broadcast %cst_2 : f32 to vector<1x3xf32>
    %3 = arith.divf %1, %2 : vector<1x3xf32>
    %c0_3 = arith.constant 0 : index
    %c0_4 = arith.constant 0 : index
    %4 = vector.load %arg2[%c0_3, %c0_4] : memref<3x32xf32, #tpu.memory_space<vmem>>, vector<3x32xf32>
    %c0_5 = arith.constant 0 : index
    %c0_6 = arith.constant 0 : index
    %5 = vector.load %arg3[%c0_5, %c0_6] : memref<1x32xf32, #tpu.memory_space<vmem>>, vector<1x32xf32>
    %c0_7 = arith.constant 0 : index
    %c0_8 = arith.constant 0 : index
    %6 = vector.load %arg4[%c0_7, %c0_8] : memref<32x32xf32, #tpu.memory_space<vmem>>, vector<32x32xf32>
    %c0_9 = arith.constant 0 : index
    %c0_10 = arith.constant 0 : index
    %7 = vector.load %arg5[%c0_9, %c0_10] : memref<1x32xf32, #tpu.memory_space<vmem>>, vector<1x32xf32>
    %cst_11 = arith.constant dense<0.000000e+00> : vector<1x32xf32>
    %8 = tpu.matmul %3, %4, %cst_11 {dimension_numbers = #tpu.dot_dimension_numbers<[1], [0], [0], [1], [0, 0, 1, 1], [], []>} : vector<1x3xf32>, vector<3x32xf32>, vector<1x32xf32> -> vector<1x32xf32>
    %9 = arith.addf %8, %5 : vector<1x32xf32>
    %cst_12 = arith.constant dense<0.000000e+00> : vector<1x32xf32>
    %10 = tpu.matmul %9, %6, %cst_12 {dimension_numbers = #tpu.dot_dimension_numbers<[1], [0], [0], [1], [0, 0, 1, 1], [], []>} : vector<1x32xf32>, vector<32x32xf32>, vector<1x32xf32> -> vector<1x32xf32>
    %11 = arith.addf %10, %7 : vector<1x32xf32>
    %c0_13 = arith.constant 0 : index
    %c0_14 = arith.constant 0 : index
    %12 = vector.load %arg10[%c0_13, %c0_14] : memref<2x32xf32, #tpu.memory_space<vmem>>, vector<1x32xf32>
    %13 = arith.addf %11, %12 : vector<1x32xf32>
    %14 = vector.shape_cast %13 : vector<1x32xf32> to vector<1x1x32xf32>
    %c0_15 = arith.constant 0 : index
    %c0_16 = arith.constant 0 : index
    %c0_17 = arith.constant 0 : index
    %15 = vector.load %arg12[%c0_15, %c0_16, %c0_17] : memref<1x8x32xf32, #tpu.memory_space<vmem>>, vector<1x1x32xf32>
    tpu.vector_store %arg12[%c0_15, %c0_16, %c0_17], %14 {strides = array<i32>} : memref<1x8x32xf32, #tpu.memory_space<vmem>>, vector<1x1x32xf32>,
    %c0_18 = arith.constant 0 : index
    %c0_19 = arith.constant 0 : index
    %16 = vector.load %arg6[%c0_18, %c0_19] : memref<3x16xf32, #tpu.memory_space<vmem>>, vector<3x16xf32>
    %c0_20 = arith.constant 0 : index
    %c0_21 = arith.constant 0 : index
    %17 = vector.load %arg7[%c0_20, %c0_21] : memref<1x16xf32, #tpu.memory_space<vmem>>, vector<1x16xf32>
    %c0_22 = arith.constant 0 : index
    %c0_23 = arith.constant 0 : index
    %18 = vector.load %arg8[%c0_22, %c0_23] : memref<16x32xf32, #tpu.memory_space<vmem>>, vector<16x32xf32>
    %c0_24 = arith.constant 0 : index
    %c0_25 = arith.constant 0 : index
    %19 = vector.load %arg9[%c0_24, %c0_25] : memref<1x32xf32, #tpu.memory_space<vmem>>, vector<1x32xf32>
    %cst_26 = arith.constant dense<0.000000e+00> : vector<1x16xf32>
    %20 = tpu.matmul %3, %16, %cst_26 {dimension_numbers = #tpu.dot_dimension_numbers<[1], [0], [0], [1], [0, 0, 1, 1], [], []>} : vector<1x3xf32>, vector<3x16xf32>, vector<1x16xf32> -> vector<1x16xf32>
    %21 = arith.addf %20, %17 : vector<1x16xf32>
    %cst_27 = arith.constant dense<0.000000e+00> : vector<1x32xf32>
    %22 = tpu.matmul %21, %18, %cst_27 {dimension_numbers = #tpu.dot_dimension_numbers<[1], [0], [0], [1], [0, 0, 1, 1], [], []>} : vector<1x16xf32>, vector<16x32xf32>, vector<1x32xf32> -> vector<1x32xf32>
    %23 = arith.addf %22, %19 : vector<1x32xf32>
    %c1 = arith.constant 1 : index
    %c0_28 = arith.constant 0 : index
    %24 = vector.load %arg10[%c1, %c0_28] : memref<2x32xf32, #tpu.memory_space<vmem>>, vector<1x32xf32>
    %25 = arith.addf %23, %24 : vector<1x32xf32>
    %26 = vector.shape_cast %25 : vector<1x32xf32> to vector<1x1x32xf32>
    %c0_29 = arith.constant 0 : index
    %c1_30 = arith.constant 1 : index
    %c0_31 = arith.constant 0 : index
    %27 = vector.load %arg12[%c0_29, %c1_30, %c0_31] : memref<1x8x32xf32, #tpu.memory_space<vmem>>, vector<1x1x32xf32>
    tpu.vector_store %arg12[%c0_29, %c1_30, %c0_31], %26 {strides = array<i32>} : memref<1x8x32xf32, #tpu.memory_space<vmem>>, vector<1x1x32xf32>,
    %c0_32 = arith.constant 0 : index
    %c0_33 = arith.constant 0 : index
    %28 = vector.load %arg11[%c0_32, %c0_33] : memref<6x32xf32, #tpu.memory_space<vmem>>, vector<6x32xf32>
    %29 = vector.shape_cast %28 : vector<6x32xf32> to vector<1x6x32xf32>
    %c0_34 = arith.constant 0 : index
    %c2 = arith.constant 2 : index
    %c0_35 = arith.constant 0 : index
    %30 = vector.load %arg12[%c0_34, %c2, %c0_35] : memref<1x8x32xf32, #tpu.memory_space<vmem>>, vector<1x6x32xf32>
    tpu.vector_store %arg12[%c0_34, %c2, %c0_35], %29 {strides = array<i32>} : memref<1x8x32xf32, #tpu.memory_space<vmem>>, vector<1x6x32xf32>,
    return
  }
  func.func @transform_0(%arg0: i32) -> (i32, i32, i32) {
    %c0_i32 = arith.constant 0 : i32
    %c0_i32_0 = arith.constant 0 : i32
    %c0_i32_1 = arith.constant 0 : i32
    return %arg0, %c0_i32, %c0_i32_0 : i32, i32, i32
  }
  func.func @transform_1(%arg0: i32) -> (i32, i32) {
    %c0_i32 = arith.constant 0 : i32
    %c0_i32_0 = arith.constant 0 : i32
    %c0_i32_1 = arith.constant 0 : i32
    return %c0_i32, %c0_i32_0 : i32, i32
  }
  func.func @transform_2(%arg0: i32) -> (i32, i32) {
    %c0_i32 = arith.constant 0 : i32
    %c0_i32_0 = arith.constant 0 : i32
    %c0_i32_1 = arith.constant 0 : i32
    return %c0_i32, %c0_i32_0 : i32, i32
  }
  func.func @transform_3(%arg0: i32) -> (i32, i32) {
    %c0_i32 = arith.constant 0 : i32
    %c0_i32_0 = arith.constant 0 : i32
    %c0_i32_1 = arith.constant 0 : i32
    return %c0_i32, %c0_i32_0 : i32, i32
  }
  func.func @transform_4(%arg0: i32) -> (i32, i32) {
    %c0_i32 = arith.constant 0 : i32
    %c0_i32_0 = arith.constant 0 : i32
    %c0_i32_1 = arith.constant 0 : i32
    return %c0_i32, %c0_i32_0 : i32, i32
  }
  func.func @transform_5(%arg0: i32) -> (i32, i32) {
    %c0_i32 = arith.constant 0 : i32
    %c0_i32_0 = arith.constant 0 : i32
    %c0_i32_1 = arith.constant 0 : i32
    return %c0_i32, %c0_i32_0 : i32, i32
  }
  func.func @transform_6(%arg0: i32) -> (i32, i32) {
    %c0_i32 = arith.constant 0 : i32
    %c0_i32_0 = arith.constant 0 : i32
    %c0_i32_1 = arith.constant 0 : i32
    return %c0_i32, %c0_i32_0 : i32, i32
  }
  func.func @transform_7(%arg0: i32) -> (i32, i32) {
    %c0_i32 = arith.constant 0 : i32
    %c0_i32_0 = arith.constant 0 : i32
    %c0_i32_1 = arith.constant 0 : i32
    return %c0_i32, %c0_i32_0 : i32, i32
  }
  func.func @transform_8(%arg0: i32) -> (i32, i32) {
    %c0_i32 = arith.constant 0 : i32
    %c0_i32_0 = arith.constant 0 : i32
    %c0_i32_1 = arith.constant 0 : i32
    return %c0_i32, %c0_i32_0 : i32, i32
  }
  func.func @transform_9(%arg0: i32) -> (i32, i32) {
    %c0_i32 = arith.constant 0 : i32
    %c0_i32_0 = arith.constant 0 : i32
    %c0_i32_1 = arith.constant 0 : i32
    return %c0_i32, %c0_i32_0 : i32, i32
  }
  func.func @transform_10(%arg0: i32) -> (i32, i32) {
    %c0_i32 = arith.constant 0 : i32
    %c0_i32_0 = arith.constant 0 : i32
    %c0_i32_1 = arith.constant 0 : i32
    return %c0_i32, %c0_i32_0 : i32, i32
  }
  func.func @transform_11(%arg0: i32) -> (i32, i32, i32) {
    %c0_i32 = arith.constant 0 : i32
    %c0_i32_0 = arith.constant 0 : i32
    %c0_i32_1 = arith.constant 0 : i32
    return %arg0, %c0_i32, %c0_i32_0 : i32, i32, i32
  }
}

module attributes {stable_mosaic.version = 11 : i64} {
  func.func @_transformer_layer_kernel(%arg0: i32, %arg1: memref<1x8x32xf32, #tpu.memory_space<vmem>>, %arg2: memref<1x32xf32, #tpu.memory_space<vmem>>, %arg3: memref<1x32xf32, #tpu.memory_space<vmem>>, %arg4: memref<32x96xbf16, #tpu.memory_space<vmem>>, %arg5: memref<1x96xf32, #tpu.memory_space<vmem>>, %arg6: memref<32x32xbf16, #tpu.memory_space<vmem>>, %arg7: memref<1x32xf32, #tpu.memory_space<vmem>>, %arg8: memref<1x32xf32, #tpu.memory_space<vmem>>, %arg9: memref<1x32xf32, #tpu.memory_space<vmem>>, %arg10: memref<32x64xbf16, #tpu.memory_space<vmem>>, %arg11: memref<1x64xf32, #tpu.memory_space<vmem>>, %arg12: memref<64x32xbf16, #tpu.memory_space<vmem>>, %arg13: memref<1x32xf32, #tpu.memory_space<vmem>>, %arg14: memref<1x8x32xf32, #tpu.memory_space<vmem>>) attributes {dimension_semantics = [#tpu.dimension_semantics<parallel>], iteration_bounds = array<i64: 2>, scalar_prefetch = 0 : i64, scratch_operands = 0 : i64, tpu.core_type = #tpu.core_type<tc>, window_params = [{transform_indices = @transform_0, window_bounds = array<i64: 1, 8, 32>}, {pipeline_mode = #tpu.pipeline_mode<synchronous>, transform_indices = @transform_1, window_bounds = array<i64: 1, 32>}, {pipeline_mode = #tpu.pipeline_mode<synchronous>, transform_indices = @transform_2, window_bounds = array<i64: 1, 32>}, {pipeline_mode = #tpu.pipeline_mode<synchronous>, transform_indices = @transform_3, window_bounds = array<i64: 32, 96>}, {pipeline_mode = #tpu.pipeline_mode<synchronous>, transform_indices = @transform_4, window_bounds = array<i64: 1, 96>}, {pipeline_mode = #tpu.pipeline_mode<synchronous>, transform_indices = @transform_5, window_bounds = array<i64: 32, 32>}, {pipeline_mode = #tpu.pipeline_mode<synchronous>, transform_indices = @transform_6, window_bounds = array<i64: 1, 32>}, {pipeline_mode = #tpu.pipeline_mode<synchronous>, transform_indices = @transform_7, window_bounds = array<i64: 1, 32>}, {pipeline_mode = #tpu.pipeline_mode<synchronous>, transform_indices = @transform_8, window_bounds = array<i64: 1, 32>}, {pipeline_mode = #tpu.pipeline_mode<synchronous>, transform_indices = @transform_9, window_bounds = array<i64: 32, 64>}, {pipeline_mode = #tpu.pipeline_mode<synchronous>, transform_indices = @transform_10, window_bounds = array<i64: 1, 64>}, {pipeline_mode = #tpu.pipeline_mode<synchronous>, transform_indices = @transform_11, window_bounds = array<i64: 64, 32>}, {pipeline_mode = #tpu.pipeline_mode<synchronous>, transform_indices = @transform_12, window_bounds = array<i64: 1, 32>}, {transform_indices = @transform_13, window_bounds = array<i64: 1, 8, 32>}]} {
    %c0 = arith.constant 0 : index
    %c0_0 = arith.constant 0 : index
    %c0_1 = arith.constant 0 : index
    %0 = vector.load %arg1[%c0, %c0_0, %c0_1] : memref<1x8x32xf32, #tpu.memory_space<vmem>>, vector<1x8x32xf32>
    %1 = vector.shape_cast %0 : vector<1x8x32xf32> to vector<8x32xf32>
    %c0_2 = arith.constant 0 : index
    %c0_3 = arith.constant 0 : index
    %2 = vector.load %arg2[%c0_2, %c0_3] : memref<1x32xf32, #tpu.memory_space<vmem>>, vector<1x32xf32>
    %c0_4 = arith.constant 0 : index
    %c0_5 = arith.constant 0 : index
    %3 = vector.load %arg3[%c0_4, %c0_5] : memref<1x32xf32, #tpu.memory_space<vmem>>, vector<1x32xf32>
    %cst = arith.constant dense<0.000000e+00> : vector<8xf32>
    %4 = vector.multi_reduction <add>, %1, %cst [1] : vector<8x32xf32> to vector<8xf32>
    %5 = vector.shape_cast %4 : vector<8xf32> to vector<8x1xf32>
    %cst_6 = arith.constant 3.200000e+01 : f32
    %6 = vector.broadcast %cst_6 : f32 to vector<8x1xf32>
    %7 = arith.divf %5, %6 : vector<8x1xf32>
    %8 = vector.broadcast %7 : vector<8x1xf32> to vector<8x32xf32>
    %9 = arith.subf %1, %8 : vector<8x32xf32>
    %10 = arith.mulf %9, %9 : vector<8x32xf32>
    %cst_7 = arith.constant dense<0.000000e+00> : vector<8xf32>
    %11 = vector.multi_reduction <add>, %10, %cst_7 [1] : vector<8x32xf32> to vector<8xf32>
    %12 = vector.shape_cast %11 : vector<8xf32> to vector<8x1xf32>
    %cst_8 = arith.constant 3.200000e+01 : f32
    %13 = vector.broadcast %cst_8 : f32 to vector<8x1xf32>
    %14 = arith.divf %12, %13 : vector<8x1xf32>
    %15 = vector.broadcast %7 : vector<8x1xf32> to vector<8x32xf32>
    %16 = arith.subf %1, %15 : vector<8x32xf32>
    %cst_9 = arith.constant 9.99999996E-13 : f32
    %17 = vector.broadcast %cst_9 : f32 to vector<8x1xf32>
    %18 = arith.addf %14, %17 : vector<8x1xf32>
    %19 = math.rsqrt %18 : vector<8x1xf32>
    %20 = vector.broadcast %19 : vector<8x1xf32> to vector<8x32xf32>
    %21 = arith.mulf %16, %20 : vector<8x32xf32>
    %22 = vector.broadcast %2 : vector<1x32xf32> to vector<8x32xf32>
    %23 = arith.mulf %21, %22 : vector<8x32xf32>
    %24 = vector.broadcast %3 : vector<1x32xf32> to vector<8x32xf32>
    %25 = arith.addf %23, %24 : vector<8x32xf32>
    %26 = arith.truncf %25 : vector<8x32xf32> to vector<8x32xbf16>
    %c0_10 = arith.constant 0 : index
    %c0_11 = arith.constant 0 : index
    %27 = vector.load %arg4[%c0_10, %c0_11] : memref<32x96xbf16, #tpu.memory_space<vmem>>, vector<32x96xbf16>
    %cst_12 = arith.constant dense<0.000000e+00> : vector<8x96xf32>
    %28 = tpu.matmul %26, %27, %cst_12 {dimension_numbers = #tpu.dot_dimension_numbers<[1], [0], [0], [1], [0, 0, 1, 1], [], []>} : vector<8x32xbf16>, vector<32x96xbf16>, vector<8x96xf32> -> vector<8x96xf32>
    %c0_13 = arith.constant 0 : index
    %c0_14 = arith.constant 0 : index
    %29 = vector.load %arg5[%c0_13, %c0_14] : memref<1x96xf32, #tpu.memory_space<vmem>>, vector<1x96xf32>
    %30 = vector.broadcast %29 : vector<1x96xf32> to vector<8x96xf32>
    %31 = arith.addf %28, %30 : vector<8x96xf32>
    %32 = vector.extract_strided_slice %31 {offsets = [0, 0], sizes = [8, 32], strides = [1, 1]} : vector<8x96xf32> to vector<8x32xf32>
    %cst_15 = arith.constant 0.353553385 : f32
    %33 = vector.broadcast %cst_15 : f32 to vector<8x32xf32>
    %34 = arith.mulf %32, %33 : vector<8x32xf32>
    %35 = vector.extract_strided_slice %34 {offsets = [0, 0], sizes = [8, 8], strides = [1, 1]} : vector<8x32xf32> to vector<8x8xf32>
    %36 = vector.extract_strided_slice %34 {offsets = [0, 8], sizes = [8, 8], strides = [1, 1]} : vector<8x32xf32> to vector<8x8xf32>
    %37 = vector.extract_strided_slice %34 {offsets = [0, 16], sizes = [8, 8], strides = [1, 1]} : vector<8x32xf32> to vector<8x8xf32>
    %38 = vector.extract_strided_slice %34 {offsets = [0, 24], sizes = [8, 8], strides = [1, 1]} : vector<8x32xf32> to vector<8x8xf32>
    %39 = vector.shape_cast %35 : vector<8x8xf32> to vector<1x8x8xf32>
    %40 = vector.shape_cast %36 : vector<8x8xf32> to vector<1x8x8xf32>
    %41 = vector.shape_cast %37 : vector<8x8xf32> to vector<1x8x8xf32>
    %42 = vector.shape_cast %38 : vector<8x8xf32> to vector<1x8x8xf32>
    %43 = tpu.concatenate %39, %40, %41, %42 in 0 : vector<1x8x8xf32>, vector<1x8x8xf32>, vector<1x8x8xf32>, vector<1x8x8xf32> -> vector<4x8x8xf32>
    %44 = vector.extract_strided_slice %31 {offsets = [0, 32], sizes = [8, 8], strides = [1, 1]} : vector<8x96xf32> to vector<8x8xf32>
    %45 = vector.extract_strided_slice %31 {offsets = [0, 40], sizes = [8, 8], strides = [1, 1]} : vector<8x96xf32> to vector<8x8xf32>
    %46 = vector.extract_strided_slice %31 {offsets = [0, 48], sizes = [8, 8], strides = [1, 1]} : vector<8x96xf32> to vector<8x8xf32>
    %47 = vector.extract_strided_slice %31 {offsets = [0, 56], sizes = [8, 8], strides = [1, 1]} : vector<8x96xf32> to vector<8x8xf32>
    %48 = vector.shape_cast %44 : vector<8x8xf32> to vector<1x8x8xf32>
    %49 = vector.shape_cast %45 : vector<8x8xf32> to vector<1x8x8xf32>
    %50 = vector.shape_cast %46 : vector<8x8xf32> to vector<1x8x8xf32>
    %51 = vector.shape_cast %47 : vector<8x8xf32> to vector<1x8x8xf32>
    %52 = tpu.concatenate %48, %49, %50, %51 in 0 : vector<1x8x8xf32>, vector<1x8x8xf32>, vector<1x8x8xf32>, vector<1x8x8xf32> -> vector<4x8x8xf32>
    %53 = vector.extract_strided_slice %31 {offsets = [0, 64], sizes = [8, 8], strides = [1, 1]} : vector<8x96xf32> to vector<8x8xf32>
    %54 = vector.extract_strided_slice %31 {offsets = [0, 72], sizes = [8, 8], strides = [1, 1]} : vector<8x96xf32> to vector<8x8xf32>
    %55 = vector.extract_strided_slice %31 {offsets = [0, 80], sizes = [8, 8], strides = [1, 1]} : vector<8x96xf32> to vector<8x8xf32>
    %56 = vector.extract_strided_slice %31 {offsets = [0, 88], sizes = [8, 8], strides = [1, 1]} : vector<8x96xf32> to vector<8x8xf32>
    %57 = vector.shape_cast %53 : vector<8x8xf32> to vector<1x8x8xf32>
    %58 = vector.shape_cast %54 : vector<8x8xf32> to vector<1x8x8xf32>
    %59 = vector.shape_cast %55 : vector<8x8xf32> to vector<1x8x8xf32>
    %60 = vector.shape_cast %56 : vector<8x8xf32> to vector<1x8x8xf32>
    %61 = tpu.concatenate %57, %58, %59, %60 in 0 : vector<1x8x8xf32>, vector<1x8x8xf32>, vector<1x8x8xf32>, vector<1x8x8xf32> -> vector<4x8x8xf32>
    %62 = arith.truncf %43 : vector<4x8x8xf32> to vector<4x8x8xbf16>
    %63 = arith.truncf %52 : vector<4x8x8xf32> to vector<4x8x8xbf16>
    "tpu.trace_start"() <{level = 10 : i32, message = "hqd,hkd->hqk"}> : () -> ()
    %cst_16 = arith.constant dense<0.000000e+00> : vector<4x8x8xf32>
    %64 = tpu.matmul %62, %63, %cst_16 {dimension_numbers = #tpu.dot_dimension_numbers<[2], [2], [1], [1], [0, 0, 0, 1, 1, 1], [0], [0]>} : vector<4x8x8xbf16>, vector<4x8x8xbf16>, vector<4x8x8xf32> -> vector<4x8x8xf32>
    "tpu.trace_stop"() : () -> ()
    %cst_17 = arith.constant dense<0xFF800000> : vector<4x8xf32>
    %65 = vector.multi_reduction <maximumf>, %64, %cst_17 [2] : vector<4x8x8xf32> to vector<4x8xf32>
    %66 = vector.shape_cast %65 : vector<4x8xf32> to vector<4x8x1xf32>
    %67 = vector.broadcast %66 : vector<4x8x1xf32> to vector<4x8x8xf32>
    %68 = arith.subf %64, %67 : vector<4x8x8xf32>
    %69 = math.exp %68 : vector<4x8x8xf32>
    %cst_18 = arith.constant dense<0.000000e+00> : vector<4x8xf32>
    %70 = vector.multi_reduction <add>, %69, %cst_18 [2] : vector<4x8x8xf32> to vector<4x8xf32>
    %71 = vector.shape_cast %70 : vector<4x8xf32> to vector<4x8x1xf32>
    %72 = tpu.reciprocal %71 {approx = true} : vector<4x8x1xf32> -> vector<4x8x1xf32>
    %73 = vector.broadcast %72 : vector<4x8x1xf32> to vector<4x8x8xf32>
    %74 = arith.mulf %69, %73 : vector<4x8x8xf32>
    %75 = arith.truncf %74 : vector<4x8x8xf32> to vector<4x8x8xbf16>
    %76 = arith.truncf %61 : vector<4x8x8xf32> to vector<4x8x8xbf16>
    "tpu.trace_start"() <{level = 10 : i32, message = "hqk,hkd->hqd"}> : () -> ()
    %cst_19 = arith.constant dense<0.000000e+00> : vector<4x8x8xf32>
    %77 = tpu.matmul %75, %76, %cst_19 {dimension_numbers = #tpu.dot_dimension_numbers<[2], [1], [1], [2], [0, 0, 0, 1, 1, 2], [0], [0]>} : vector<4x8x8xbf16>, vector<4x8x8xbf16>, vector<4x8x8xf32> -> vector<4x8x8xf32>
    "tpu.trace_stop"() : () -> ()
    %78 = vector.extract_strided_slice %77 {offsets = [0, 0, 0], sizes = [1, 8, 8], strides = [1, 1, 1]} : vector<4x8x8xf32> to vector<1x8x8xf32>
    %79 = vector.shape_cast %78 : vector<1x8x8xf32> to vector<8x8xf32>
    %80 = vector.extract_strided_slice %77 {offsets = [1, 0, 0], sizes = [1, 8, 8], strides = [1, 1, 1]} : vector<4x8x8xf32> to vector<1x8x8xf32>
    %81 = vector.shape_cast %80 : vector<1x8x8xf32> to vector<8x8xf32>
    %82 = vector.extract_strided_slice %77 {offsets = [2, 0, 0], sizes = [1, 8, 8], strides = [1, 1, 1]} : vector<4x8x8xf32> to vector<1x8x8xf32>
    %83 = vector.shape_cast %82 : vector<1x8x8xf32> to vector<8x8xf32>
    %84 = vector.extract_strided_slice %77 {offsets = [3, 0, 0], sizes = [1, 8, 8], strides = [1, 1, 1]} : vector<4x8x8xf32> to vector<1x8x8xf32>
    %85 = vector.shape_cast %84 : vector<1x8x8xf32> to vector<8x8xf32>
    %86 = tpu.concatenate %79, %81, %83, %85 in 1 : vector<8x8xf32>, vector<8x8xf32>, vector<8x8xf32>, vector<8x8xf32> -> vector<8x32xf32>
    %87 = arith.truncf %86 : vector<8x32xf32> to vector<8x32xbf16>
    %c0_20 = arith.constant 0 : index
    %c0_21 = arith.constant 0 : index
    %88 = vector.load %arg6[%c0_20, %c0_21] : memref<32x32xbf16, #tpu.memory_space<vmem>>, vector<32x32xbf16>
    %cst_22 = arith.constant dense<0.000000e+00> : vector<8x32xf32>
    %89 = tpu.matmul %87, %88, %cst_22 {dimension_numbers = #tpu.dot_dimension_numbers<[1], [0], [0], [1], [0, 0, 1, 1], [], []>} : vector<8x32xbf16>, vector<32x32xbf16>, vector<8x32xf32> -> vector<8x32xf32>
    %c0_23 = arith.constant 0 : index
    %c0_24 = arith.constant 0 : index
    %90 = vector.load %arg7[%c0_23, %c0_24] : memref<1x32xf32, #tpu.memory_space<vmem>>, vector<1x32xf32>
    %91 = vector.broadcast %90 : vector<1x32xf32> to vector<8x32xf32>
    %92 = arith.addf %89, %91 : vector<8x32xf32>
    %93 = arith.addf %1, %92 : vector<8x32xf32>
    %c0_25 = arith.constant 0 : index
    %c0_26 = arith.constant 0 : index
    %94 = vector.load %arg8[%c0_25, %c0_26] : memref<1x32xf32, #tpu.memory_space<vmem>>, vector<1x32xf32>
    %c0_27 = arith.constant 0 : index
    %c0_28 = arith.constant 0 : index
    %95 = vector.load %arg9[%c0_27, %c0_28] : memref<1x32xf32, #tpu.memory_space<vmem>>, vector<1x32xf32>
    %cst_29 = arith.constant dense<0.000000e+00> : vector<8xf32>
    %96 = vector.multi_reduction <add>, %93, %cst_29 [1] : vector<8x32xf32> to vector<8xf32>
    %97 = vector.shape_cast %96 : vector<8xf32> to vector<8x1xf32>
    %cst_30 = arith.constant 3.200000e+01 : f32
    %98 = vector.broadcast %cst_30 : f32 to vector<8x1xf32>
    %99 = arith.divf %97, %98 : vector<8x1xf32>
    %100 = vector.broadcast %99 : vector<8x1xf32> to vector<8x32xf32>
    %101 = arith.subf %93, %100 : vector<8x32xf32>
    %102 = arith.mulf %101, %101 : vector<8x32xf32>
    %cst_31 = arith.constant dense<0.000000e+00> : vector<8xf32>
    %103 = vector.multi_reduction <add>, %102, %cst_31 [1] : vector<8x32xf32> to vector<8xf32>
    %104 = vector.shape_cast %103 : vector<8xf32> to vector<8x1xf32>
    %cst_32 = arith.constant 3.200000e+01 : f32
    %105 = vector.broadcast %cst_32 : f32 to vector<8x1xf32>
    %106 = arith.divf %104, %105 : vector<8x1xf32>
    %107 = vector.broadcast %99 : vector<8x1xf32> to vector<8x32xf32>
    %108 = arith.subf %93, %107 : vector<8x32xf32>
    %cst_33 = arith.constant 9.99999996E-13 : f32
    %109 = vector.broadcast %cst_33 : f32 to vector<8x1xf32>
    %110 = arith.addf %106, %109 : vector<8x1xf32>
    %111 = math.rsqrt %110 : vector<8x1xf32>
    %112 = vector.broadcast %111 : vector<8x1xf32> to vector<8x32xf32>
    %113 = arith.mulf %108, %112 : vector<8x32xf32>
    %114 = vector.broadcast %94 : vector<1x32xf32> to vector<8x32xf32>
    %115 = arith.mulf %113, %114 : vector<8x32xf32>
    %116 = vector.broadcast %95 : vector<1x32xf32> to vector<8x32xf32>
    %117 = arith.addf %115, %116 : vector<8x32xf32>
    %118 = arith.truncf %117 : vector<8x32xf32> to vector<8x32xbf16>
    %c0_34 = arith.constant 0 : index
    %c0_35 = arith.constant 0 : index
    %119 = vector.load %arg10[%c0_34, %c0_35] : memref<32x64xbf16, #tpu.memory_space<vmem>>, vector<32x64xbf16>
    %cst_36 = arith.constant dense<0.000000e+00> : vector<8x64xf32>
    %120 = tpu.matmul %118, %119, %cst_36 {dimension_numbers = #tpu.dot_dimension_numbers<[1], [0], [0], [1], [0, 0, 1, 1], [], []>} : vector<8x32xbf16>, vector<32x64xbf16>, vector<8x64xf32> -> vector<8x64xf32>
    %c0_37 = arith.constant 0 : index
    %c0_38 = arith.constant 0 : index
    %121 = vector.load %arg11[%c0_37, %c0_38] : memref<1x64xf32, #tpu.memory_space<vmem>>, vector<1x64xf32>
    %122 = vector.broadcast %121 : vector<1x64xf32> to vector<8x64xf32>
    %123 = arith.addf %120, %122 : vector<8x64xf32>
    %124 = arith.mulf %123, %123 : vector<8x64xf32>
    %125 = arith.mulf %123, %124 : vector<8x64xf32>
    %cst_39 = arith.constant 4.471500e-02 : f32
    %126 = vector.broadcast %cst_39 : f32 to vector<8x64xf32>
    %127 = arith.mulf %126, %125 : vector<8x64xf32>
    %128 = arith.addf %123, %127 : vector<8x64xf32>
    %cst_40 = arith.constant 0.797884583 : f32
    %129 = vector.broadcast %cst_40 : f32 to vector<8x64xf32>
    %130 = arith.mulf %129, %128 : vector<8x64xf32>
    %131 = math.tanh %130 : vector<8x64xf32>
    %cst_41 = arith.constant 1.000000e+00 : f32
    %132 = vector.broadcast %cst_41 : f32 to vector<8x64xf32>
    %133 = arith.addf %132, %131 : vector<8x64xf32>
    %cst_42 = arith.constant 5.000000e-01 : f32
    %134 = vector.broadcast %cst_42 : f32 to vector<8x64xf32>
    %135 = arith.mulf %134, %133 : vector<8x64xf32>
    %136 = arith.mulf %123, %135 : vector<8x64xf32>
    %137 = arith.truncf %136 : vector<8x64xf32> to vector<8x64xbf16>
    %c0_43 = arith.constant 0 : index
    %c0_44 = arith.constant 0 : index
    %138 = vector.load %arg12[%c0_43, %c0_44] : memref<64x32xbf16, #tpu.memory_space<vmem>>, vector<64x32xbf16>
    %cst_45 = arith.constant dense<0.000000e+00> : vector<8x32xf32>
    %139 = tpu.matmul %137, %138, %cst_45 {dimension_numbers = #tpu.dot_dimension_numbers<[1], [0], [0], [1], [0, 0, 1, 1], [], []>} : vector<8x64xbf16>, vector<64x32xbf16>, vector<8x32xf32> -> vector<8x32xf32>
    %c0_46 = arith.constant 0 : index
    %c0_47 = arith.constant 0 : index
    %140 = vector.load %arg13[%c0_46, %c0_47] : memref<1x32xf32, #tpu.memory_space<vmem>>, vector<1x32xf32>
    %141 = vector.broadcast %140 : vector<1x32xf32> to vector<8x32xf32>
    %142 = arith.addf %139, %141 : vector<8x32xf32>
    %143 = arith.addf %93, %142 : vector<8x32xf32>
    %144 = vector.shape_cast %143 : vector<8x32xf32> to vector<1x8x32xf32>
    %c0_48 = arith.constant 0 : index
    %c0_49 = arith.constant 0 : index
    %c0_50 = arith.constant 0 : index
    %145 = vector.load %arg14[%c0_48, %c0_49, %c0_50] : memref<1x8x32xf32, #tpu.memory_space<vmem>>, vector<1x8x32xf32>
    tpu.vector_store %arg14[%c0_48, %c0_49, %c0_50], %144 {strides = array<i32>} : memref<1x8x32xf32, #tpu.memory_space<vmem>>, vector<1x8x32xf32>,
    return
  }
  func.func @transform_0(%arg0: i32) -> (i32, i32, i32) {
    %c0_i32 = arith.constant 0 : i32
    %c0_i32_0 = arith.constant 0 : i32
    %c0_i32_1 = arith.constant 0 : i32
    return %arg0, %c0_i32, %c0_i32_0 : i32, i32, i32
  }
  func.func @transform_1(%arg0: i32) -> (i32, i32) {
    %c0_i32 = arith.constant 0 : i32
    %c0_i32_0 = arith.constant 0 : i32
    %c0_i32_1 = arith.constant 0 : i32
    return %c0_i32, %c0_i32_0 : i32, i32
  }
  func.func @transform_2(%arg0: i32) -> (i32, i32) {
    %c0_i32 = arith.constant 0 : i32
    %c0_i32_0 = arith.constant 0 : i32
    %c0_i32_1 = arith.constant 0 : i32
    return %c0_i32, %c0_i32_0 : i32, i32
  }
  func.func @transform_3(%arg0: i32) -> (i32, i32) {
    %c0_i32 = arith.constant 0 : i32
    %c0_i32_0 = arith.constant 0 : i32
    %c0_i32_1 = arith.constant 0 : i32
    return %c0_i32, %c0_i32_0 : i32, i32
  }
  func.func @transform_4(%arg0: i32) -> (i32, i32) {
    %c0_i32 = arith.constant 0 : i32
    %c0_i32_0 = arith.constant 0 : i32
    %c0_i32_1 = arith.constant 0 : i32
    return %c0_i32, %c0_i32_0 : i32, i32
  }
  func.func @transform_5(%arg0: i32) -> (i32, i32) {
    %c0_i32 = arith.constant 0 : i32
    %c0_i32_0 = arith.constant 0 : i32
    %c0_i32_1 = arith.constant 0 : i32
    return %c0_i32, %c0_i32_0 : i32, i32
  }
  func.func @transform_6(%arg0: i32) -> (i32, i32) {
    %c0_i32 = arith.constant 0 : i32
    %c0_i32_0 = arith.constant 0 : i32
    %c0_i32_1 = arith.constant 0 : i32
    return %c0_i32, %c0_i32_0 : i32, i32
  }
  func.func @transform_7(%arg0: i32) -> (i32, i32) {
    %c0_i32 = arith.constant 0 : i32
    %c0_i32_0 = arith.constant 0 : i32
    %c0_i32_1 = arith.constant 0 : i32
    return %c0_i32, %c0_i32_0 : i32, i32
  }
  func.func @transform_8(%arg0: i32) -> (i32, i32) {
    %c0_i32 = arith.constant 0 : i32
    %c0_i32_0 = arith.constant 0 : i32
    %c0_i32_1 = arith.constant 0 : i32
    return %c0_i32, %c0_i32_0 : i32, i32
  }
  func.func @transform_9(%arg0: i32) -> (i32, i32) {
    %c0_i32 = arith.constant 0 : i32
    %c0_i32_0 = arith.constant 0 : i32
    %c0_i32_1 = arith.constant 0 : i32
    return %c0_i32, %c0_i32_0 : i32, i32
  }
  func.func @transform_10(%arg0: i32) -> (i32, i32) {
    %c0_i32 = arith.constant 0 : i32
    %c0_i32_0 = arith.constant 0 : i32
    %c0_i32_1 = arith.constant 0 : i32
    return %c0_i32, %c0_i32_0 : i32, i32
  }
  func.func @transform_11(%arg0: i32) -> (i32, i32) {
    %c0_i32 = arith.constant 0 : i32
    %c0_i32_0 = arith.constant 0 : i32
    %c0_i32_1 = arith.constant 0 : i32
    return %c0_i32, %c0_i32_0 : i32, i32
  }
  func.func @transform_12(%arg0: i32) -> (i32, i32) {
    %c0_i32 = arith.constant 0 : i32
    %c0_i32_0 = arith.constant 0 : i32
    %c0_i32_1 = arith.constant 0 : i32
    return %c0_i32, %c0_i32_0 : i32, i32
  }
  func.func @transform_13(%arg0: i32) -> (i32, i32, i32) {
    %c0_i32 = arith.constant 0 : i32
    %c0_i32_0 = arith.constant 0 : i32
    %c0_i32_1 = arith.constant 0 : i32
    return %arg0, %c0_i32, %c0_i32_0 : i32, i32, i32
  }
}

module attributes {stable_mosaic.version = 11 : i64} {
  func.func @_ln_proj_kernel(%arg0: i32, %arg1: memref<1x6x32xf32, #tpu.memory_space<vmem>>, %arg2: memref<1x32xf32, #tpu.memory_space<vmem>>, %arg3: memref<1x32xf32, #tpu.memory_space<vmem>>, %arg4: memref<32x32xbf16, #tpu.memory_space<vmem>>, %arg5: memref<1x32xf32, #tpu.memory_space<vmem>>, %arg6: memref<1x6x32xf32, #tpu.memory_space<vmem>>) attributes {dimension_semantics = [#tpu.dimension_semantics<parallel>], iteration_bounds = array<i64: 2>, scalar_prefetch = 0 : i64, scratch_operands = 0 : i64, tpu.core_type = #tpu.core_type<tc>, window_params = [{transform_indices = @transform_0, window_bounds = array<i64: 1, 6, 32>}, {pipeline_mode = #tpu.pipeline_mode<synchronous>, transform_indices = @transform_1, window_bounds = array<i64: 1, 32>}, {pipeline_mode = #tpu.pipeline_mode<synchronous>, transform_indices = @transform_2, window_bounds = array<i64: 1, 32>}, {pipeline_mode = #tpu.pipeline_mode<synchronous>, transform_indices = @transform_3, window_bounds = array<i64: 32, 32>}, {pipeline_mode = #tpu.pipeline_mode<synchronous>, transform_indices = @transform_4, window_bounds = array<i64: 1, 32>}, {transform_indices = @transform_5, window_bounds = array<i64: 1, 6, 32>}]} {
    %c0 = arith.constant 0 : index
    %c0_0 = arith.constant 0 : index
    %c0_1 = arith.constant 0 : index
    %0 = vector.load %arg1[%c0, %c0_0, %c0_1] : memref<1x6x32xf32, #tpu.memory_space<vmem>>, vector<1x6x32xf32>
    %1 = vector.shape_cast %0 : vector<1x6x32xf32> to vector<6x32xf32>
    %c0_2 = arith.constant 0 : index
    %c0_3 = arith.constant 0 : index
    %2 = vector.load %arg2[%c0_2, %c0_3] : memref<1x32xf32, #tpu.memory_space<vmem>>, vector<1x32xf32>
    %c0_4 = arith.constant 0 : index
    %c0_5 = arith.constant 0 : index
    %3 = vector.load %arg3[%c0_4, %c0_5] : memref<1x32xf32, #tpu.memory_space<vmem>>, vector<1x32xf32>
    %cst = arith.constant dense<0.000000e+00> : vector<6xf32>
    %4 = vector.multi_reduction <add>, %1, %cst [1] : vector<6x32xf32> to vector<6xf32>
    %5 = vector.shape_cast %4 : vector<6xf32> to vector<6x1xf32>
    %cst_6 = arith.constant 3.200000e+01 : f32
    %6 = vector.broadcast %cst_6 : f32 to vector<6x1xf32>
    %7 = arith.divf %5, %6 : vector<6x1xf32>
    %8 = vector.broadcast %7 : vector<6x1xf32> to vector<6x32xf32>
    %9 = arith.subf %1, %8 : vector<6x32xf32>
    %10 = arith.mulf %9, %9 : vector<6x32xf32>
    %cst_7 = arith.constant dense<0.000000e+00> : vector<6xf32>
    %11 = vector.multi_reduction <add>, %10, %cst_7 [1] : vector<6x32xf32> to vector<6xf32>
    %12 = vector.shape_cast %11 : vector<6xf32> to vector<6x1xf32>
    %cst_8 = arith.constant 3.200000e+01 : f32
    %13 = vector.broadcast %cst_8 : f32 to vector<6x1xf32>
    %14 = arith.divf %12, %13 : vector<6x1xf32>
    %15 = vector.broadcast %7 : vector<6x1xf32> to vector<6x32xf32>
    %16 = arith.subf %1, %15 : vector<6x32xf32>
    %cst_9 = arith.constant 9.99999996E-13 : f32
    %17 = vector.broadcast %cst_9 : f32 to vector<6x1xf32>
    %18 = arith.addf %14, %17 : vector<6x1xf32>
    %19 = math.rsqrt %18 : vector<6x1xf32>
    %20 = vector.broadcast %19 : vector<6x1xf32> to vector<6x32xf32>
    %21 = arith.mulf %16, %20 : vector<6x32xf32>
    %22 = vector.broadcast %2 : vector<1x32xf32> to vector<6x32xf32>
    %23 = arith.mulf %21, %22 : vector<6x32xf32>
    %24 = vector.broadcast %3 : vector<1x32xf32> to vector<6x32xf32>
    %25 = arith.addf %23, %24 : vector<6x32xf32>
    %26 = arith.truncf %25 : vector<6x32xf32> to vector<6x32xbf16>
    %c0_10 = arith.constant 0 : index
    %c0_11 = arith.constant 0 : index
    %27 = vector.load %arg4[%c0_10, %c0_11] : memref<32x32xbf16, #tpu.memory_space<vmem>>, vector<32x32xbf16>
    %cst_12 = arith.constant dense<0.000000e+00> : vector<6x32xf32>
    %28 = tpu.matmul %26, %27, %cst_12 {dimension_numbers = #tpu.dot_dimension_numbers<[1], [0], [0], [1], [0, 0, 1, 1], [], []>} : vector<6x32xbf16>, vector<32x32xbf16>, vector<6x32xf32> -> vector<6x32xf32>
    %c0_13 = arith.constant 0 : index
    %c0_14 = arith.constant 0 : index
    %29 = vector.load %arg5[%c0_13, %c0_14] : memref<1x32xf32, #tpu.memory_space<vmem>>, vector<1x32xf32>
    %30 = vector.broadcast %29 : vector<1x32xf32> to vector<6x32xf32>
    %31 = arith.addf %28, %30 : vector<6x32xf32>
    %32 = vector.shape_cast %31 : vector<6x32xf32> to vector<1x6x32xf32>
    %c0_15 = arith.constant 0 : index
    %c0_16 = arith.constant 0 : index
    %c0_17 = arith.constant 0 : index
    %33 = vector.load %arg6[%c0_15, %c0_16, %c0_17] : memref<1x6x32xf32, #tpu.memory_space<vmem>>, vector<1x6x32xf32>
    tpu.vector_store %arg6[%c0_15, %c0_16, %c0_17], %32 {strides = array<i32>} : memref<1x6x32xf32, #tpu.memory_space<vmem>>, vector<1x6x32xf32>,
    return
  }
  func.func @transform_0(%arg0: i32) -> (i32, i32, i32) {
    %c0_i32 = arith.constant 0 : i32
    %c0_i32_0 = arith.constant 0 : i32
    %c0_i32_1 = arith.constant 0 : i32
    return %arg0, %c0_i32, %c0_i32_0 : i32, i32, i32
  }
  func.func @transform_1(%arg0: i32) -> (i32, i32) {
    %c0_i32 = arith.constant 0 : i32
    %c0_i32_0 = arith.constant 0 : i32
    %c0_i32_1 = arith.constant 0 : i32
    return %c0_i32, %c0_i32_0 : i32, i32
  }
  func.func @transform_2(%arg0: i32) -> (i32, i32) {
    %c0_i32 = arith.constant 0 : i32
    %c0_i32_0 = arith.constant 0 : i32
    %c0_i32_1 = arith.constant 0 : i32
    return %c0_i32, %c0_i32_0 : i32, i32
  }
  func.func @transform_3(%arg0: i32) -> (i32, i32) {
    %c0_i32 = arith.constant 0 : i32
    %c0_i32_0 = arith.constant 0 : i32
    %c0_i32_1 = arith.constant 0 : i32
    return %c0_i32, %c0_i32_0 : i32, i32
  }
  func.func @transform_4(%arg0: i32) -> (i32, i32) {
    %c0_i32 = arith.constant 0 : i32
    %c0_i32_0 = arith.constant 0 : i32
    %c0_i32_1 = arith.constant 0 : i32
    return %c0_i32, %c0_i32_0 : i32, i32
  }
  func.func @transform_5(%arg0: i32) -> (i32, i32, i32) {
    %c0_i32 = arith.constant 0 : i32
    %c0_i32_0 = arith.constant 0 : i32
    %c0_i32_1 = arith.constant 0 : i32
    return %arg0, %c0_i32, %c0_i32_0 : i32, i32, i32
  }
}

module attributes {stable_mosaic.version = 11 : i64} {
  func.func @_transformer_layer_kernel(%arg0: i32, %arg1: memref<1x16x32xf32, #tpu.memory_space<vmem>>, %arg2: memref<1x32xf32, #tpu.memory_space<vmem>>, %arg3: memref<1x32xf32, #tpu.memory_space<vmem>>, %arg4: memref<32x96xbf16, #tpu.memory_space<vmem>>, %arg5: memref<1x96xf32, #tpu.memory_space<vmem>>, %arg6: memref<32x32xbf16, #tpu.memory_space<vmem>>, %arg7: memref<1x32xf32, #tpu.memory_space<vmem>>, %arg8: memref<1x32xf32, #tpu.memory_space<vmem>>, %arg9: memref<1x32xf32, #tpu.memory_space<vmem>>, %arg10: memref<32x64xbf16, #tpu.memory_space<vmem>>, %arg11: memref<1x64xf32, #tpu.memory_space<vmem>>, %arg12: memref<64x32xbf16, #tpu.memory_space<vmem>>, %arg13: memref<1x32xf32, #tpu.memory_space<vmem>>, %arg14: memref<1x1x16xf32, #tpu.memory_space<vmem>>, %arg15: memref<1x16x32xf32, #tpu.memory_space<vmem>>) attributes {dimension_semantics = [#tpu.dimension_semantics<parallel>], iteration_bounds = array<i64: 2>, scalar_prefetch = 0 : i64, scratch_operands = 0 : i64, tpu.core_type = #tpu.core_type<tc>, window_params = [{transform_indices = @transform_0, window_bounds = array<i64: 1, 16, 32>}, {pipeline_mode = #tpu.pipeline_mode<synchronous>, transform_indices = @transform_1, window_bounds = array<i64: 1, 32>}, {pipeline_mode = #tpu.pipeline_mode<synchronous>, transform_indices = @transform_2, window_bounds = array<i64: 1, 32>}, {pipeline_mode = #tpu.pipeline_mode<synchronous>, transform_indices = @transform_3, window_bounds = array<i64: 32, 96>}, {pipeline_mode = #tpu.pipeline_mode<synchronous>, transform_indices = @transform_4, window_bounds = array<i64: 1, 96>}, {pipeline_mode = #tpu.pipeline_mode<synchronous>, transform_indices = @transform_5, window_bounds = array<i64: 32, 32>}, {pipeline_mode = #tpu.pipeline_mode<synchronous>, transform_indices = @transform_6, window_bounds = array<i64: 1, 32>}, {pipeline_mode = #tpu.pipeline_mode<synchronous>, transform_indices = @transform_7, window_bounds = array<i64: 1, 32>}, {pipeline_mode = #tpu.pipeline_mode<synchronous>, transform_indices = @transform_8, window_bounds = array<i64: 1, 32>}, {pipeline_mode = #tpu.pipeline_mode<synchronous>, transform_indices = @transform_9, window_bounds = array<i64: 32, 64>}, {pipeline_mode = #tpu.pipeline_mode<synchronous>, transform_indices = @transform_10, window_bounds = array<i64: 1, 64>}, {pipeline_mode = #tpu.pipeline_mode<synchronous>, transform_indices = @transform_11, window_bounds = array<i64: 64, 32>}, {pipeline_mode = #tpu.pipeline_mode<synchronous>, transform_indices = @transform_12, window_bounds = array<i64: 1, 32>}, {transform_indices = @transform_13, window_bounds = array<i64: 1, 1, 16>}, {transform_indices = @transform_14, window_bounds = array<i64: 1, 16, 32>}]} {
    %c0 = arith.constant 0 : index
    %c0_0 = arith.constant 0 : index
    %c0_1 = arith.constant 0 : index
    %0 = vector.load %arg1[%c0, %c0_0, %c0_1] : memref<1x16x32xf32, #tpu.memory_space<vmem>>, vector<1x16x32xf32>
    %1 = vector.shape_cast %0 : vector<1x16x32xf32> to vector<16x32xf32>
    %c0_2 = arith.constant 0 : index
    %c0_3 = arith.constant 0 : index
    %2 = vector.load %arg2[%c0_2, %c0_3] : memref<1x32xf32, #tpu.memory_space<vmem>>, vector<1x32xf32>
    %c0_4 = arith.constant 0 : index
    %c0_5 = arith.constant 0 : index
    %3 = vector.load %arg3[%c0_4, %c0_5] : memref<1x32xf32, #tpu.memory_space<vmem>>, vector<1x32xf32>
    %cst = arith.constant dense<0.000000e+00> : vector<16xf32>
    %4 = vector.multi_reduction <add>, %1, %cst [1] : vector<16x32xf32> to vector<16xf32>
    %5 = vector.shape_cast %4 : vector<16xf32> to vector<16x1xf32>
    %cst_6 = arith.constant 3.200000e+01 : f32
    %6 = vector.broadcast %cst_6 : f32 to vector<16x1xf32>
    %7 = arith.divf %5, %6 : vector<16x1xf32>
    %8 = vector.broadcast %7 : vector<16x1xf32> to vector<16x32xf32>
    %9 = arith.subf %1, %8 : vector<16x32xf32>
    %10 = arith.mulf %9, %9 : vector<16x32xf32>
    %cst_7 = arith.constant dense<0.000000e+00> : vector<16xf32>
    %11 = vector.multi_reduction <add>, %10, %cst_7 [1] : vector<16x32xf32> to vector<16xf32>
    %12 = vector.shape_cast %11 : vector<16xf32> to vector<16x1xf32>
    %cst_8 = arith.constant 3.200000e+01 : f32
    %13 = vector.broadcast %cst_8 : f32 to vector<16x1xf32>
    %14 = arith.divf %12, %13 : vector<16x1xf32>
    %15 = vector.broadcast %7 : vector<16x1xf32> to vector<16x32xf32>
    %16 = arith.subf %1, %15 : vector<16x32xf32>
    %cst_9 = arith.constant 9.99999974E-6 : f32
    %17 = vector.broadcast %cst_9 : f32 to vector<16x1xf32>
    %18 = arith.addf %14, %17 : vector<16x1xf32>
    %19 = math.rsqrt %18 : vector<16x1xf32>
    %20 = vector.broadcast %19 : vector<16x1xf32> to vector<16x32xf32>
    %21 = arith.mulf %16, %20 : vector<16x32xf32>
    %22 = vector.broadcast %2 : vector<1x32xf32> to vector<16x32xf32>
    %23 = arith.mulf %21, %22 : vector<16x32xf32>
    %24 = vector.broadcast %3 : vector<1x32xf32> to vector<16x32xf32>
    %25 = arith.addf %23, %24 : vector<16x32xf32>
    %26 = arith.truncf %25 : vector<16x32xf32> to vector<16x32xbf16>
    %c0_10 = arith.constant 0 : index
    %c0_11 = arith.constant 0 : index
    %27 = vector.load %arg4[%c0_10, %c0_11] : memref<32x96xbf16, #tpu.memory_space<vmem>>, vector<32x96xbf16>
    %cst_12 = arith.constant dense<0.000000e+00> : vector<16x96xf32>
    %28 = tpu.matmul %26, %27, %cst_12 {dimension_numbers = #tpu.dot_dimension_numbers<[1], [0], [0], [1], [0, 0, 1, 1], [], []>} : vector<16x32xbf16>, vector<32x96xbf16>, vector<16x96xf32> -> vector<16x96xf32>
    %c0_13 = arith.constant 0 : index
    %c0_14 = arith.constant 0 : index
    %29 = vector.load %arg5[%c0_13, %c0_14] : memref<1x96xf32, #tpu.memory_space<vmem>>, vector<1x96xf32>
    %30 = vector.broadcast %29 : vector<1x96xf32> to vector<16x96xf32>
    %31 = arith.addf %28, %30 : vector<16x96xf32>
    %32 = vector.extract_strided_slice %31 {offsets = [0, 0], sizes = [16, 32], strides = [1, 1]} : vector<16x96xf32> to vector<16x32xf32>
    %cst_15 = arith.constant 0.353553385 : f32
    %33 = vector.broadcast %cst_15 : f32 to vector<16x32xf32>
    %34 = arith.mulf %32, %33 : vector<16x32xf32>
    %35 = vector.extract_strided_slice %34 {offsets = [0, 0], sizes = [16, 8], strides = [1, 1]} : vector<16x32xf32> to vector<16x8xf32>
    %36 = vector.extract_strided_slice %34 {offsets = [0, 8], sizes = [16, 8], strides = [1, 1]} : vector<16x32xf32> to vector<16x8xf32>
    %37 = vector.extract_strided_slice %34 {offsets = [0, 16], sizes = [16, 8], strides = [1, 1]} : vector<16x32xf32> to vector<16x8xf32>
    %38 = vector.extract_strided_slice %34 {offsets = [0, 24], sizes = [16, 8], strides = [1, 1]} : vector<16x32xf32> to vector<16x8xf32>
    %39 = vector.shape_cast %35 : vector<16x8xf32> to vector<1x16x8xf32>
    %40 = vector.shape_cast %36 : vector<16x8xf32> to vector<1x16x8xf32>
    %41 = vector.shape_cast %37 : vector<16x8xf32> to vector<1x16x8xf32>
    %42 = vector.shape_cast %38 : vector<16x8xf32> to vector<1x16x8xf32>
    %43 = tpu.concatenate %39, %40, %41, %42 in 0 : vector<1x16x8xf32>, vector<1x16x8xf32>, vector<1x16x8xf32>, vector<1x16x8xf32> -> vector<4x16x8xf32>
    %44 = vector.extract_strided_slice %31 {offsets = [0, 32], sizes = [16, 8], strides = [1, 1]} : vector<16x96xf32> to vector<16x8xf32>
    %45 = vector.extract_strided_slice %31 {offsets = [0, 40], sizes = [16, 8], strides = [1, 1]} : vector<16x96xf32> to vector<16x8xf32>
    %46 = vector.extract_strided_slice %31 {offsets = [0, 48], sizes = [16, 8], strides = [1, 1]} : vector<16x96xf32> to vector<16x8xf32>
    %47 = vector.extract_strided_slice %31 {offsets = [0, 56], sizes = [16, 8], strides = [1, 1]} : vector<16x96xf32> to vector<16x8xf32>
    %48 = vector.shape_cast %44 : vector<16x8xf32> to vector<1x16x8xf32>
    %49 = vector.shape_cast %45 : vector<16x8xf32> to vector<1x16x8xf32>
    %50 = vector.shape_cast %46 : vector<16x8xf32> to vector<1x16x8xf32>
    %51 = vector.shape_cast %47 : vector<16x8xf32> to vector<1x16x8xf32>
    %52 = tpu.concatenate %48, %49, %50, %51 in 0 : vector<1x16x8xf32>, vector<1x16x8xf32>, vector<1x16x8xf32>, vector<1x16x8xf32> -> vector<4x16x8xf32>
    %53 = vector.extract_strided_slice %31 {offsets = [0, 64], sizes = [16, 8], strides = [1, 1]} : vector<16x96xf32> to vector<16x8xf32>
    %54 = vector.extract_strided_slice %31 {offsets = [0, 72], sizes = [16, 8], strides = [1, 1]} : vector<16x96xf32> to vector<16x8xf32>
    %55 = vector.extract_strided_slice %31 {offsets = [0, 80], sizes = [16, 8], strides = [1, 1]} : vector<16x96xf32> to vector<16x8xf32>
    %56 = vector.extract_strided_slice %31 {offsets = [0, 88], sizes = [16, 8], strides = [1, 1]} : vector<16x96xf32> to vector<16x8xf32>
    %57 = vector.shape_cast %53 : vector<16x8xf32> to vector<1x16x8xf32>
    %58 = vector.shape_cast %54 : vector<16x8xf32> to vector<1x16x8xf32>
    %59 = vector.shape_cast %55 : vector<16x8xf32> to vector<1x16x8xf32>
    %60 = vector.shape_cast %56 : vector<16x8xf32> to vector<1x16x8xf32>
    %61 = tpu.concatenate %57, %58, %59, %60 in 0 : vector<1x16x8xf32>, vector<1x16x8xf32>, vector<1x16x8xf32>, vector<1x16x8xf32> -> vector<4x16x8xf32>
    %62 = arith.truncf %43 : vector<4x16x8xf32> to vector<4x16x8xbf16>
    %63 = arith.truncf %52 : vector<4x16x8xf32> to vector<4x16x8xbf16>
    "tpu.trace_start"() <{level = 10 : i32, message = "hqd,hkd->hqk"}> : () -> ()
    %cst_16 = arith.constant dense<0.000000e+00> : vector<4x16x16xf32>
    %64 = tpu.matmul %62, %63, %cst_16 {dimension_numbers = #tpu.dot_dimension_numbers<[2], [2], [1], [1], [0, 0, 0, 1, 1, 1], [0], [0]>} : vector<4x16x8xbf16>, vector<4x16x8xbf16>, vector<4x16x16xf32> -> vector<4x16x16xf32>
    "tpu.trace_stop"() : () -> ()
    %65 = tpu.iota {dimensions = array<i32: 0>} : vector<16x16xi32>
    %66 = tpu.iota {dimensions = array<i32: 1>} : vector<16x16xi32>
    %67 = arith.cmpi sle, %66, %65 : vector<16x16xi32>
    %c0_17 = arith.constant 0 : index
    %c0_18 = arith.constant 0 : index
    %c0_19 = arith.constant 0 : index
    %68 = vector.load %arg14[%c0_17, %c0_18, %c0_19] : memref<1x1x16xf32, #tpu.memory_space<vmem>>, vector<1x1x16xf32>
    %69 = vector.shape_cast %68 : vector<1x1x16xf32> to vector<1x16xf32>
    %cst_20 = arith.constant 5.000000e-01 : f32
    %70 = vector.broadcast %cst_20 : f32 to vector<1x16xf32>
    %71 = arith.cmpf ogt, %69, %70 : vector<1x16xf32>
    %72 = vector.broadcast %71 : vector<1x16xi1> to vector<16x16xi1>
    %73 = arith.andi %67, %72 : vector<16x16xi1>
    %74 = vector.shape_cast %73 : vector<16x16xi1> to vector<1x16x16xi1>
    %cst_21 = arith.constant -1.000000e+09 : f32
    %75 = vector.shape_cast %74 : vector<1x16x16xi1> to vector<1x16x16xi1>
    %76 = vector.broadcast %75 : vector<1x16x16xi1> to vector<4x16x16xi1>
    %77 = vector.broadcast %cst_21 : f32 to vector<4x16x16xf32>
    %78 = arith.select %76, %64, %77 : vector<4x16x16xi1>, vector<4x16x16xf32>
    %cst_22 = arith.constant dense<0xFF800000> : vector<4x16xf32>
    %79 = vector.multi_reduction <maximumf>, %78, %cst_22 [2] : vector<4x16x16xf32> to vector<4x16xf32>
    %80 = vector.shape_cast %79 : vector<4x16xf32> to vector<4x16x1xf32>
    %81 = vector.broadcast %80 : vector<4x16x1xf32> to vector<4x16x16xf32>
    %82 = arith.subf %78, %81 : vector<4x16x16xf32>
    %83 = math.exp %82 : vector<4x16x16xf32>
    %cst_23 = arith.constant dense<0.000000e+00> : vector<4x16xf32>
    %84 = vector.multi_reduction <add>, %83, %cst_23 [2] : vector<4x16x16xf32> to vector<4x16xf32>
    %85 = vector.shape_cast %84 : vector<4x16xf32> to vector<4x16x1xf32>
    %86 = tpu.reciprocal %85 {approx = true} : vector<4x16x1xf32> -> vector<4x16x1xf32>
    %87 = vector.broadcast %86 : vector<4x16x1xf32> to vector<4x16x16xf32>
    %88 = arith.mulf %83, %87 : vector<4x16x16xf32>
    %89 = arith.truncf %88 : vector<4x16x16xf32> to vector<4x16x16xbf16>
    %90 = arith.truncf %61 : vector<4x16x8xf32> to vector<4x16x8xbf16>
    "tpu.trace_start"() <{level = 10 : i32, message = "hqk,hkd->hqd"}> : () -> ()
    %cst_24 = arith.constant dense<0.000000e+00> : vector<4x16x8xf32>
    %91 = tpu.matmul %89, %90, %cst_24 {dimension_numbers = #tpu.dot_dimension_numbers<[2], [1], [1], [2], [0, 0, 0, 1, 1, 2], [0], [0]>} : vector<4x16x16xbf16>, vector<4x16x8xbf16>, vector<4x16x8xf32> -> vector<4x16x8xf32>
    "tpu.trace_stop"() : () -> ()
    %92 = vector.extract_strided_slice %91 {offsets = [0, 0, 0], sizes = [1, 16, 8], strides = [1, 1, 1]} : vector<4x16x8xf32> to vector<1x16x8xf32>
    %93 = vector.shape_cast %92 : vector<1x16x8xf32> to vector<16x8xf32>
    %94 = vector.extract_strided_slice %91 {offsets = [1, 0, 0], sizes = [1, 16, 8], strides = [1, 1, 1]} : vector<4x16x8xf32> to vector<1x16x8xf32>
    %95 = vector.shape_cast %94 : vector<1x16x8xf32> to vector<16x8xf32>
    %96 = vector.extract_strided_slice %91 {offsets = [2, 0, 0], sizes = [1, 16, 8], strides = [1, 1, 1]} : vector<4x16x8xf32> to vector<1x16x8xf32>
    %97 = vector.shape_cast %96 : vector<1x16x8xf32> to vector<16x8xf32>
    %98 = vector.extract_strided_slice %91 {offsets = [3, 0, 0], sizes = [1, 16, 8], strides = [1, 1, 1]} : vector<4x16x8xf32> to vector<1x16x8xf32>
    %99 = vector.shape_cast %98 : vector<1x16x8xf32> to vector<16x8xf32>
    %100 = tpu.concatenate %93, %95, %97, %99 in 1 : vector<16x8xf32>, vector<16x8xf32>, vector<16x8xf32>, vector<16x8xf32> -> vector<16x32xf32>
    %101 = arith.truncf %100 : vector<16x32xf32> to vector<16x32xbf16>
    %c0_25 = arith.constant 0 : index
    %c0_26 = arith.constant 0 : index
    %102 = vector.load %arg6[%c0_25, %c0_26] : memref<32x32xbf16, #tpu.memory_space<vmem>>, vector<32x32xbf16>
    %cst_27 = arith.constant dense<0.000000e+00> : vector<16x32xf32>
    %103 = tpu.matmul %101, %102, %cst_27 {dimension_numbers = #tpu.dot_dimension_numbers<[1], [0], [0], [1], [0, 0, 1, 1], [], []>} : vector<16x32xbf16>, vector<32x32xbf16>, vector<16x32xf32> -> vector<16x32xf32>
    %c0_28 = arith.constant 0 : index
    %c0_29 = arith.constant 0 : index
    %104 = vector.load %arg7[%c0_28, %c0_29] : memref<1x32xf32, #tpu.memory_space<vmem>>, vector<1x32xf32>
    %105 = vector.broadcast %104 : vector<1x32xf32> to vector<16x32xf32>
    %106 = arith.addf %103, %105 : vector<16x32xf32>
    %107 = arith.addf %1, %106 : vector<16x32xf32>
    %c0_30 = arith.constant 0 : index
    %c0_31 = arith.constant 0 : index
    %108 = vector.load %arg8[%c0_30, %c0_31] : memref<1x32xf32, #tpu.memory_space<vmem>>, vector<1x32xf32>
    %c0_32 = arith.constant 0 : index
    %c0_33 = arith.constant 0 : index
    %109 = vector.load %arg9[%c0_32, %c0_33] : memref<1x32xf32, #tpu.memory_space<vmem>>, vector<1x32xf32>
    %cst_34 = arith.constant dense<0.000000e+00> : vector<16xf32>
    %110 = vector.multi_reduction <add>, %107, %cst_34 [1] : vector<16x32xf32> to vector<16xf32>
    %111 = vector.shape_cast %110 : vector<16xf32> to vector<16x1xf32>
    %cst_35 = arith.constant 3.200000e+01 : f32
    %112 = vector.broadcast %cst_35 : f32 to vector<16x1xf32>
    %113 = arith.divf %111, %112 : vector<16x1xf32>
    %114 = vector.broadcast %113 : vector<16x1xf32> to vector<16x32xf32>
    %115 = arith.subf %107, %114 : vector<16x32xf32>
    %116 = arith.mulf %115, %115 : vector<16x32xf32>
    %cst_36 = arith.constant dense<0.000000e+00> : vector<16xf32>
    %117 = vector.multi_reduction <add>, %116, %cst_36 [1] : vector<16x32xf32> to vector<16xf32>
    %118 = vector.shape_cast %117 : vector<16xf32> to vector<16x1xf32>
    %cst_37 = arith.constant 3.200000e+01 : f32
    %119 = vector.broadcast %cst_37 : f32 to vector<16x1xf32>
    %120 = arith.divf %118, %119 : vector<16x1xf32>
    %121 = vector.broadcast %113 : vector<16x1xf32> to vector<16x32xf32>
    %122 = arith.subf %107, %121 : vector<16x32xf32>
    %cst_38 = arith.constant 9.99999974E-6 : f32
    %123 = vector.broadcast %cst_38 : f32 to vector<16x1xf32>
    %124 = arith.addf %120, %123 : vector<16x1xf32>
    %125 = math.rsqrt %124 : vector<16x1xf32>
    %126 = vector.broadcast %125 : vector<16x1xf32> to vector<16x32xf32>
    %127 = arith.mulf %122, %126 : vector<16x32xf32>
    %128 = vector.broadcast %108 : vector<1x32xf32> to vector<16x32xf32>
    %129 = arith.mulf %127, %128 : vector<16x32xf32>
    %130 = vector.broadcast %109 : vector<1x32xf32> to vector<16x32xf32>
    %131 = arith.addf %129, %130 : vector<16x32xf32>
    %132 = arith.truncf %131 : vector<16x32xf32> to vector<16x32xbf16>
    %c0_39 = arith.constant 0 : index
    %c0_40 = arith.constant 0 : index
    %133 = vector.load %arg10[%c0_39, %c0_40] : memref<32x64xbf16, #tpu.memory_space<vmem>>, vector<32x64xbf16>
    %cst_41 = arith.constant dense<0.000000e+00> : vector<16x64xf32>
    %134 = tpu.matmul %132, %133, %cst_41 {dimension_numbers = #tpu.dot_dimension_numbers<[1], [0], [0], [1], [0, 0, 1, 1], [], []>} : vector<16x32xbf16>, vector<32x64xbf16>, vector<16x64xf32> -> vector<16x64xf32>
    %c0_42 = arith.constant 0 : index
    %c0_43 = arith.constant 0 : index
    %135 = vector.load %arg11[%c0_42, %c0_43] : memref<1x64xf32, #tpu.memory_space<vmem>>, vector<1x64xf32>
    %136 = vector.broadcast %135 : vector<1x64xf32> to vector<16x64xf32>
    %137 = arith.addf %134, %136 : vector<16x64xf32>
    %138 = arith.mulf %137, %137 : vector<16x64xf32>
    %139 = arith.mulf %137, %138 : vector<16x64xf32>
    %cst_44 = arith.constant 4.471500e-02 : f32
    %140 = vector.broadcast %cst_44 : f32 to vector<16x64xf32>
    %141 = arith.mulf %140, %139 : vector<16x64xf32>
    %142 = arith.addf %137, %141 : vector<16x64xf32>
    %cst_45 = arith.constant 0.797884583 : f32
    %143 = vector.broadcast %cst_45 : f32 to vector<16x64xf32>
    %144 = arith.mulf %143, %142 : vector<16x64xf32>
    %145 = math.tanh %144 : vector<16x64xf32>
    %cst_46 = arith.constant 1.000000e+00 : f32
    %146 = vector.broadcast %cst_46 : f32 to vector<16x64xf32>
    %147 = arith.addf %146, %145 : vector<16x64xf32>
    %cst_47 = arith.constant 5.000000e-01 : f32
    %148 = vector.broadcast %cst_47 : f32 to vector<16x64xf32>
    %149 = arith.mulf %148, %147 : vector<16x64xf32>
    %150 = arith.mulf %137, %149 : vector<16x64xf32>
    %151 = arith.truncf %150 : vector<16x64xf32> to vector<16x64xbf16>
    %c0_48 = arith.constant 0 : index
    %c0_49 = arith.constant 0 : index
    %152 = vector.load %arg12[%c0_48, %c0_49] : memref<64x32xbf16, #tpu.memory_space<vmem>>, vector<64x32xbf16>
    %cst_50 = arith.constant dense<0.000000e+00> : vector<16x32xf32>
    %153 = tpu.matmul %151, %152, %cst_50 {dimension_numbers = #tpu.dot_dimension_numbers<[1], [0], [0], [1], [0, 0, 1, 1], [], []>} : vector<16x64xbf16>, vector<64x32xbf16>, vector<16x32xf32> -> vector<16x32xf32>
    %c0_51 = arith.constant 0 : index
    %c0_52 = arith.constant 0 : index
    %154 = vector.load %arg13[%c0_51, %c0_52] : memref<1x32xf32, #tpu.memory_space<vmem>>, vector<1x32xf32>
    %155 = vector.broadcast %154 : vector<1x32xf32> to vector<16x32xf32>
    %156 = arith.addf %153, %155 : vector<16x32xf32>
    %157 = arith.addf %107, %156 : vector<16x32xf32>
    %158 = vector.shape_cast %157 : vector<16x32xf32> to vector<1x16x32xf32>
    %c0_53 = arith.constant 0 : index
    %c0_54 = arith.constant 0 : index
    %c0_55 = arith.constant 0 : index
    %159 = vector.load %arg15[%c0_53, %c0_54, %c0_55] : memref<1x16x32xf32, #tpu.memory_space<vmem>>, vector<1x16x32xf32>
    tpu.vector_store %arg15[%c0_53, %c0_54, %c0_55], %158 {strides = array<i32>} : memref<1x16x32xf32, #tpu.memory_space<vmem>>, vector<1x16x32xf32>,
    return
  }
  func.func @transform_0(%arg0: i32) -> (i32, i32, i32) {
    %c0_i32 = arith.constant 0 : i32
    %c0_i32_0 = arith.constant 0 : i32
    %c0_i32_1 = arith.constant 0 : i32
    return %arg0, %c0_i32, %c0_i32_0 : i32, i32, i32
  }
  func.func @transform_1(%arg0: i32) -> (i32, i32) {
    %c0_i32 = arith.constant 0 : i32
    %c0_i32_0 = arith.constant 0 : i32
    %c0_i32_1 = arith.constant 0 : i32
    return %c0_i32, %c0_i32_0 : i32, i32
  }
  func.func @transform_2(%arg0: i32) -> (i32, i32) {
    %c0_i32 = arith.constant 0 : i32
    %c0_i32_0 = arith.constant 0 : i32
    %c0_i32_1 = arith.constant 0 : i32
    return %c0_i32, %c0_i32_0 : i32, i32
  }
  func.func @transform_3(%arg0: i32) -> (i32, i32) {
    %c0_i32 = arith.constant 0 : i32
    %c0_i32_0 = arith.constant 0 : i32
    %c0_i32_1 = arith.constant 0 : i32
    return %c0_i32, %c0_i32_0 : i32, i32
  }
  func.func @transform_4(%arg0: i32) -> (i32, i32) {
    %c0_i32 = arith.constant 0 : i32
    %c0_i32_0 = arith.constant 0 : i32
    %c0_i32_1 = arith.constant 0 : i32
    return %c0_i32, %c0_i32_0 : i32, i32
  }
  func.func @transform_5(%arg0: i32) -> (i32, i32) {
    %c0_i32 = arith.constant 0 : i32
    %c0_i32_0 = arith.constant 0 : i32
    %c0_i32_1 = arith.constant 0 : i32
    return %c0_i32, %c0_i32_0 : i32, i32
  }
  func.func @transform_6(%arg0: i32) -> (i32, i32) {
    %c0_i32 = arith.constant 0 : i32
    %c0_i32_0 = arith.constant 0 : i32
    %c0_i32_1 = arith.constant 0 : i32
    return %c0_i32, %c0_i32_0 : i32, i32
  }
  func.func @transform_7(%arg0: i32) -> (i32, i32) {
    %c0_i32 = arith.constant 0 : i32
    %c0_i32_0 = arith.constant 0 : i32
    %c0_i32_1 = arith.constant 0 : i32
    return %c0_i32, %c0_i32_0 : i32, i32
  }
  func.func @transform_8(%arg0: i32) -> (i32, i32) {
    %c0_i32 = arith.constant 0 : i32
    %c0_i32_0 = arith.constant 0 : i32
    %c0_i32_1 = arith.constant 0 : i32
    return %c0_i32, %c0_i32_0 : i32, i32
  }
  func.func @transform_9(%arg0: i32) -> (i32, i32) {
    %c0_i32 = arith.constant 0 : i32
    %c0_i32_0 = arith.constant 0 : i32
    %c0_i32_1 = arith.constant 0 : i32
    return %c0_i32, %c0_i32_0 : i32, i32
  }
  func.func @transform_10(%arg0: i32) -> (i32, i32) {
    %c0_i32 = arith.constant 0 : i32
    %c0_i32_0 = arith.constant 0 : i32
    %c0_i32_1 = arith.constant 0 : i32
    return %c0_i32, %c0_i32_0 : i32, i32
  }
  func.func @transform_11(%arg0: i32) -> (i32, i32) {
    %c0_i32 = arith.constant 0 : i32
    %c0_i32_0 = arith.constant 0 : i32
    %c0_i32_1 = arith.constant 0 : i32
    return %c0_i32, %c0_i32_0 : i32, i32
  }
  func.func @transform_12(%arg0: i32) -> (i32, i32) {
    %c0_i32 = arith.constant 0 : i32
    %c0_i32_0 = arith.constant 0 : i32
    %c0_i32_1 = arith.constant 0 : i32
    return %c0_i32, %c0_i32_0 : i32, i32
  }
  func.func @transform_13(%arg0: i32) -> (i32, i32, i32) {
    %c0_i32 = arith.constant 0 : i32
    %c0_i32_0 = arith.constant 0 : i32
    %c0_i32_1 = arith.constant 0 : i32
    return %arg0, %c0_i32, %c0_i32_0 : i32, i32, i32
  }
  func.func @transform_14(%arg0: i32) -> (i32, i32, i32) {
    %c0_i32 = arith.constant 0 : i32
    %c0_i32_0 = arith.constant 0 : i32
    %c0_i32_1 = arith.constant 0 : i32
    return %arg0, %c0_i32, %c0_i32_0 : i32, i32, i32
  }
}

module attributes {stable_mosaic.version = 11 : i64} {
  func.func @_lm_head_nll_kernel(%arg0: i32, %arg1: i32, %arg2: memref<16x32xf32, #tpu.memory_space<vmem>>, %arg3: memref<1x32xf32, #tpu.memory_space<vmem>>, %arg4: memref<1x32xf32, #tpu.memory_space<vmem>>, %arg5: memref<128x32xbf16, #tpu.memory_space<vmem>>, %arg6: memref<16x1xi32, #tpu.memory_space<vmem>>, %arg7: memref<16x1xf32, #tpu.memory_space<vmem>>, %arg8: memref<16x1xf32, #tpu.memory_space<vmem>>, %arg9: memref<16x1xf32, #tpu.memory_space<vmem>>, %arg10: memref<16x1xf32, #tpu.memory_space<vmem>>) attributes {dimension_semantics = [#tpu.dimension_semantics<parallel>, #tpu.dimension_semantics<arbitrary>], iteration_bounds = array<i64: 2, 2>, scalar_prefetch = 0 : i64, scratch_operands = 3 : i64, tpu.core_type = #tpu.core_type<tc>, window_params = [{transform_indices = @transform_0, window_bounds = array<i64: 16, 32>}, {pipeline_mode = #tpu.pipeline_mode<synchronous>, transform_indices = @transform_1, window_bounds = array<i64: 1, 32>}, {pipeline_mode = #tpu.pipeline_mode<synchronous>, transform_indices = @transform_2, window_bounds = array<i64: 1, 32>}, {transform_indices = @transform_3, window_bounds = array<i64: 128, 32>}, {transform_indices = @transform_4, window_bounds = array<i64: 16, 1>}, {transform_indices = @transform_5, window_bounds = array<i64: 16, 1>}]} {
    %c0_i32 = arith.constant 0 : i32
    %0 = arith.cmpi eq, %arg1, %c0_i32 : i32
    %1 = arith.extui %0 : i1 to i32
    %c0_i32_0 = arith.constant 0 : i32
    %2 = arith.cmpi ne, %1, %c0_i32_0 : i32
    scf.if %2 {
      %cst_33 = arith.constant 0xFF800000 : f32
      %66 = vector.broadcast %cst_33 : f32 to vector<16x1xf32>
      %c0_34 = arith.constant 0 : index
      %c0_35 = arith.constant 0 : index
      %67 = vector.load %arg8[%c0_34, %c0_35] : memref<16x1xf32, #tpu.memory_space<vmem>>, vector<16x1xf32>
      tpu.vector_store %arg8[%c0_34, %c0_35], %66 {strides = array<i32>} : memref<16x1xf32, #tpu.memory_space<vmem>>, vector<16x1xf32>,
      %cst_36 = arith.constant 0.000000e+00 : f32
      %68 = vector.broadcast %cst_36 : f32 to vector<16x1xf32>
      %c0_37 = arith.constant 0 : index
      %c0_38 = arith.constant 0 : index
      %69 = vector.load %arg9[%c0_37, %c0_38] : memref<16x1xf32, #tpu.memory_space<vmem>>, vector<16x1xf32>
      tpu.vector_store %arg9[%c0_37, %c0_38], %68 {strides = array<i32>} : memref<16x1xf32, #tpu.memory_space<vmem>>, vector<16x1xf32>,
      %cst_39 = arith.constant 0.000000e+00 : f32
      %70 = vector.broadcast %cst_39 : f32 to vector<16x1xf32>
      %c0_40 = arith.constant 0 : index
      %c0_41 = arith.constant 0 : index
      %71 = vector.load %arg10[%c0_40, %c0_41] : memref<16x1xf32, #tpu.memory_space<vmem>>, vector<16x1xf32>
      tpu.vector_store %arg10[%c0_40, %c0_41], %70 {strides = array<i32>} : memref<16x1xf32, #tpu.memory_space<vmem>>, vector<16x1xf32>,
    } else {
    }
    %c0 = arith.constant 0 : index
    %c0_1 = arith.constant 0 : index
    %3 = vector.load %arg2[%c0, %c0_1] : memref<16x32xf32, #tpu.memory_space<vmem>>, vector<16x32xf32>
    %c0_2 = arith.constant 0 : index
    %c0_3 = arith.constant 0 : index
    %4 = vector.load %arg3[%c0_2, %c0_3] : memref<1x32xf32, #tpu.memory_space<vmem>>, vector<1x32xf32>
    %c0_4 = arith.constant 0 : index
    %c0_5 = arith.constant 0 : index
    %5 = vector.load %arg4[%c0_4, %c0_5] : memref<1x32xf32, #tpu.memory_space<vmem>>, vector<1x32xf32>
    %cst = arith.constant dense<0.000000e+00> : vector<16xf32>
    %6 = vector.multi_reduction <add>, %3, %cst [1] : vector<16x32xf32> to vector<16xf32>
    %7 = vector.shape_cast %6 : vector<16xf32> to vector<16x1xf32>
    %cst_6 = arith.constant 3.200000e+01 : f32
    %8 = vector.broadcast %cst_6 : f32 to vector<16x1xf32>
    %9 = arith.divf %7, %8 : vector<16x1xf32>
    %10 = vector.broadcast %9 : vector<16x1xf32> to vector<16x32xf32>
    %11 = arith.subf %3, %10 : vector<16x32xf32>
    %12 = arith.mulf %11, %11 : vector<16x32xf32>
    %cst_7 = arith.constant dense<0.000000e+00> : vector<16xf32>
    %13 = vector.multi_reduction <add>, %12, %cst_7 [1] : vector<16x32xf32> to vector<16xf32>
    %14 = vector.shape_cast %13 : vector<16xf32> to vector<16x1xf32>
    %cst_8 = arith.constant 3.200000e+01 : f32
    %15 = vector.broadcast %cst_8 : f32 to vector<16x1xf32>
    %16 = arith.divf %14, %15 : vector<16x1xf32>
    %17 = vector.broadcast %9 : vector<16x1xf32> to vector<16x32xf32>
    %18 = arith.subf %3, %17 : vector<16x32xf32>
    %cst_9 = arith.constant 9.99999974E-6 : f32
    %19 = vector.broadcast %cst_9 : f32 to vector<16x1xf32>
    %20 = arith.addf %16, %19 : vector<16x1xf32>
    %21 = math.rsqrt %20 : vector<16x1xf32>
    %22 = vector.broadcast %21 : vector<16x1xf32> to vector<16x32xf32>
    %23 = arith.mulf %18, %22 : vector<16x32xf32>
    %24 = vector.broadcast %4 : vector<1x32xf32> to vector<16x32xf32>
    %25 = arith.mulf %23, %24 : vector<16x32xf32>
    %26 = vector.broadcast %5 : vector<1x32xf32> to vector<16x32xf32>
    %27 = arith.addf %25, %26 : vector<16x32xf32>
    %28 = arith.truncf %27 : vector<16x32xf32> to vector<16x32xbf16>
    %c0_10 = arith.constant 0 : index
    %c0_11 = arith.constant 0 : index
    %29 = vector.load %arg5[%c0_10, %c0_11] : memref<128x32xbf16, #tpu.memory_space<vmem>>, vector<128x32xbf16>
    %cst_12 = arith.constant dense<0.000000e+00> : vector<16x128xf32>
    %30 = tpu.matmul %28, %29, %cst_12 {dimension_numbers = #tpu.dot_dimension_numbers<[1], [1], [0], [0], [0, 0, 1, 0], [], []>} : vector<16x32xbf16>, vector<128x32xbf16>, vector<16x128xf32> -> vector<16x128xf32>
    %c0_13 = arith.constant 0 : index
    %c0_14 = arith.constant 0 : index
    %31 = vector.load %arg6[%c0_13, %c0_14] : memref<16x1xi32, #tpu.memory_space<vmem>>, vector<16x1xi32>
    %32 = tpu.iota {dimensions = array<i32: 1>} : vector<16x128xi32>
    %c128_i32 = arith.constant 128 : i32
    %33 = arith.muli %arg1, %c128_i32 : i32
    %34 = vector.broadcast %33 : i32 to vector<16x128xi32>
    %35 = arith.addi %32, %34 : vector<16x128xi32>
    %36 = vector.broadcast %31 : vector<16x1xi32> to vector<16x128xi32>
    %37 = arith.cmpi eq, %35, %36 : vector<16x128xi32>
    %38 = arith.extui %37 : vector<16x128xi1> to vector<16x128xi32>
    %39 = arith.sitofp %38 : vector<16x128xi32> to vector<16x128xf32>
    %c0_15 = arith.constant 0 : index
    %c0_16 = arith.constant 0 : index
    %40 = vector.load %arg10[%c0_15, %c0_16] : memref<16x1xf32, #tpu.memory_space<vmem>>, vector<16x1xf32>
    %41 = arith.mulf %30, %39 : vector<16x128xf32>
    %cst_17 = arith.constant dense<0.000000e+00> : vector<16xf32>
    %42 = vector.multi_reduction <add>, %41, %cst_17 [1] : vector<16x128xf32> to vector<16xf32>
    %43 = vector.shape_cast %42 : vector<16xf32> to vector<16x1xf32>
    %44 = arith.addf %40, %43 : vector<16x1xf32>
    %c0_18 = arith.constant 0 : index
    %c0_19 = arith.constant 0 : index
    %45 = vector.load %arg10[%c0_18, %c0_19] : memref<16x1xf32, #tpu.memory_space<vmem>>, vector<16x1xf32>
    tpu.vector_store %arg10[%c0_18, %c0_19], %44 {strides = array<i32>} : memref<16x1xf32, #tpu.memory_space<vmem>>, vector<16x1xf32>,
    %c0_20 = arith.constant 0 : index
    %c0_21 = arith.constant 0 : index
    %46 = vector.load %arg8[%c0_20, %c0_21] : memref<16x1xf32, #tpu.memory_space<vmem>>, vector<16x1xf32>
    %cst_22 = arith.constant dense<0xFF800000> : vector<16xf32>
    %47 = vector.multi_reduction <maximumf>, %30, %cst_22 [1] : vector<16x128xf32> to vector<16xf32>
    %48 = vector.shape_cast %47 : vector<16xf32> to vector<16x1xf32>
    %49 = arith.maximumf %46, %48 : vector<16x1xf32>
    %c0_23 = arith.constant 0 : index
    %c0_24 = arith.constant 0 : index
    %50 = vector.load %arg9[%c0_23, %c0_24] : memref<16x1xf32, #tpu.memory_space<vmem>>, vector<16x1xf32>
    %c0_25 = arith.constant 0 : index
    %c0_26 = arith.constant 0 : index
    %51 = vector.load %arg8[%c0_25, %c0_26] : memref<16x1xf32, #tpu.memory_space<vmem>>, vector<16x1xf32>
    %52 = arith.subf %51, %49 : vector<16x1xf32>
    %53 = math.exp %52 : vector<16x1xf32>
    %54 = arith.mulf %50, %53 : vector<16x1xf32>
    %55 = vector.broadcast %49 : vector<16x1xf32> to vector<16x128xf32>
    %56 = arith.subf %30, %55 : vector<16x128xf32>
    %57 = math.exp %56 : vector<16x128xf32>
    %cst_27 = arith.constant dense<0.000000e+00> : vector<16xf32>
    %58 = vector.multi_reduction <add>, %57, %cst_27 [1] : vector<16x128xf32> to vector<16xf32>
    %59 = vector.shape_cast %58 : vector<16xf32> to vector<16x1xf32>
    %60 = arith.addf %54, %59 : vector<16x1xf32>
    %c0_28 = arith.constant 0 : index
    %c0_29 = arith.constant 0 : index
    %61 = vector.load %arg9[%c0_28, %c0_29] : memref<16x1xf32, #tpu.memory_space<vmem>>, vector<16x1xf32>
    tpu.vector_store %arg9[%c0_28, %c0_29], %60 {strides = array<i32>} : memref<16x1xf32, #tpu.memory_space<vmem>>, vector<16x1xf32>,
    %c0_30 = arith.constant 0 : index
    %c0_31 = arith.constant 0 : index
    %62 = vector.load %arg8[%c0_30, %c0_31] : memref<16x1xf32, #tpu.memory_space<vmem>>, vector<16x1xf32>
    tpu.vector_store %arg8[%c0_30, %c0_31], %49 {strides = array<i32>} : memref<16x1xf32, #tpu.memory_space<vmem>>, vector<16x1xf32>,
    %c1_i32 = arith.constant 1 : i32
    %63 = arith.cmpi eq, %arg1, %c1_i32 : i32
    %64 = arith.extui %63 : i1 to i32
    %c0_i32_32 = arith.constant 0 : i32
    %65 = arith.cmpi ne, %64, %c0_i32_32 : i32
    scf.if %65 {
      %c0_33 = arith.constant 0 : index
      %c0_34 = arith.constant 0 : index
      %66 = vector.load %arg8[%c0_33, %c0_34] : memref<16x1xf32, #tpu.memory_space<vmem>>, vector<16x1xf32>
      %c0_35 = arith.constant 0 : index
      %c0_36 = arith.constant 0 : index
      %67 = vector.load %arg9[%c0_35, %c0_36] : memref<16x1xf32, #tpu.memory_space<vmem>>, vector<16x1xf32>
      %68 = math.log %67 : vector<16x1xf32>
      %69 = arith.addf %66, %68 : vector<16x1xf32>
      %c0_37 = arith.constant 0 : index
      %c0_38 = arith.constant 0 : index
      %70 = vector.load %arg10[%c0_37, %c0_38] : memref<16x1xf32, #tpu.memory_space<vmem>>, vector<16x1xf32>
      %71 = arith.subf %69, %70 : vector<16x1xf32>
      %c0_39 = arith.constant 0 : index
      %c0_40 = arith.constant 0 : index
      %72 = vector.load %arg7[%c0_39, %c0_40] : memref<16x1xf32, #tpu.memory_space<vmem>>, vector<16x1xf32>
      tpu.vector_store %arg7[%c0_39, %c0_40], %71 {strides = array<i32>} : memref<16x1xf32, #tpu.memory_space<vmem>>, vector<16x1xf32>,
    } else {
    }
    return
  }
  func.func @transform_0(%arg0: i32, %arg1: i32) -> (i32, i32) {
    %c0_i32 = arith.constant 0 : i32
    %c0_i32_0 = arith.constant 0 : i32
    return %arg0, %c0_i32 : i32, i32
  }
  func.func @transform_1(%arg0: i32, %arg1: i32) -> (i32, i32) {
    %c0_i32 = arith.constant 0 : i32
    %c0_i32_0 = arith.constant 0 : i32
    %c0_i32_1 = arith.constant 0 : i32
    return %c0_i32, %c0_i32_0 : i32, i32
  }
  func.func @transform_2(%arg0: i32, %arg1: i32) -> (i32, i32) {
    %c0_i32 = arith.constant 0 : i32
    %c0_i32_0 = arith.constant 0 : i32
    %c0_i32_1 = arith.constant 0 : i32
    return %c0_i32, %c0_i32_0 : i32, i32
  }
  func.func @transform_3(%arg0: i32, %arg1: i32) -> (i32, i32) {
    %c0_i32 = arith.constant 0 : i32
    %c0_i32_0 = arith.constant 0 : i32
    return %arg1, %c0_i32 : i32, i32
  }
  func.func @transform_4(%arg0: i32, %arg1: i32) -> (i32, i32) {
    %c0_i32 = arith.constant 0 : i32
    %c0_i32_0 = arith.constant 0 : i32
    return %arg0, %c0_i32 : i32, i32
  }
  func.func @transform_5(%arg0: i32, %arg1: i32) -> (i32, i32) {
    %c0_i32 = arith.constant 0 : i32
    %c0_i32_0 = arith.constant 0 : i32
    return %arg0, %c0_i32 : i32, i32
  }
}

</mosaic_0001>

<llo_original>
// kernel: _lambda_.7
$region0: #{_lambda_.7}
  #allocation0 [shape = 'u32[]', space=smem, size = 0x4, offset = 0x4, fixed_abs, tag = 'smem constant byte address 0x4 - core index']
  #allocation1 [shape = 'u32[144,128]{1,0:T(1,128)}', space=vmem, size = 0x12000, scoped, tag = 'internal scratch']
  %s0 = inlined_call_operand.vmem [shape: f32[2,3,256], index: 0, kind: input, shape index: {}]
  %s1 = inlined_call_operand.vmem [shape: f32[3,32], index: 1, kind: input, shape index: {}]
  %s2 = inlined_call_operand.vmem [shape: f32[1,32], index: 2, kind: input, shape index: {}, may-alias: {2,4,8}]
  %s3 = inlined_call_operand.vmem [shape: f32[32,32], index: 3, kind: input, shape index: {}]
  %s4 = inlined_call_operand.vmem [shape: f32[1,32], index: 4, kind: input, shape index: {}, may-alias: {2,4,8}]
  %s5 = inlined_call_operand.vmem [shape: f32[3,16], index: 5, kind: input, shape index: {}]
  %s6 = inlined_call_operand.vmem [shape: f32[1,16], index: 6, kind: input, shape index: {}]
  %s7 = inlined_call_operand.vmem [shape: f32[16,32], index: 7, kind: input, shape index: {}]
  %s8 = inlined_call_operand.vmem [shape: f32[1,32], index: 8, kind: input, shape index: {}, may-alias: {2,4,8}]
  %s9 = inlined_call_operand.vmem [shape: f32[2,32], index: 9, kind: input, shape index: {}]
  %s10 = inlined_call_operand.vmem [shape: f32[6,32], index: 10, kind: input, shape index: {}]
  %s11 = inlined_call_operand.vmem [shape: f32[2,8,32], index: 11, kind: output, shape index: {}]
  %s12 = sld [smem:[#allocation0]]
  $region77: #{_lambda_.7} parent=0
    _
  %s14 = ssub.s32 1, %s12
  %s15 = scalar_select 0, %s14, %s12
  loop: start=0, step=1, limit=4
  $region2: #{_lambda_.7} parent=0 // loop_pre_header
    _
  $region3: #{_lambda_.7} parent=0 // loop_header
    %s17 = sphi 0, %s21
    %p18 = scmp.ge.s32.totalorder %s17, 4
    %s27 = sphi 0, %s29
    %s30 = sphi 0, %s27
    %s31 = sphi 0, %s30
    %s47 = sphi 0, %s31
    %s51 = sphi 0, %s51
    %s53 = sphi 0, %s51
    %s54 = sphi 0, %s53
    %s68 = sphi 0, %s54
    %s72 = sphi 0, %s72
    %s74 = sphi 0, %s72
    %s75 = sphi 0, %s74
    %s89 = sphi 0, %s75
    %s93 = sphi 0, %s93
    %s95 = sphi 0, %s93
    %s96 = sphi 0, %s95
    %s110 = sphi 0, %s96
    %s114 = sphi 0, %s114
    %s116 = sphi 0, %s114
    %s117 = sphi 0, %s116
    %s131 = sphi 0, %s117
    %s135 = sphi 0, %s135
    %s137 = sphi 0, %s135
    %s138 = sphi 0, %s137
    %s152 = sphi 0, %s138
    %s156 = sphi 0, %s156
    %s158 = sphi 0, %s156
    %s159 = sphi 0, %s158
    %s173 = sphi 0, %s159
    %s177 = sphi 0, %s177
    %s179 = sphi 0, %s177
    %s180 = sphi 0, %s179
    %s194 = sphi 0, %s180
    %s198 = sphi 0, %s198
    %s200 = sphi 0, %s198
    %s201 = sphi 0, %s200
    %s215 = sphi 0, %s201
    %s219 = sphi 0, %s219
    %s221 = sphi 0, %s219
    %s222 = sphi 0, %s221
    %s236 = sphi 0, %s222
    %s240 = sphi 0, %s240
    %s242 = sphi 0, %s240
    %s243 = sphi 0, %s242
    %s257 = sphi 0, %s243
    %s263 = sphi 0, %s265
    %s266 = sphi 0, %s263
    %s267 = sphi 0, %s266
    %s283 = sphi 0, %s267
  $region4: #{_lambda_.7} parent=0 // loop_header_branch
    %20 = sbr.rel (%p18) target = $region8
  $region5: #{_lambda_.7} parent=0 // loop_body
    %s22 = ssub.s32 %s17, 1
    %s23 = ssub.s32 %s17, 2
    %s24 = sadd.s32 %s17, 1
    %s25 = ssub.s32 %s17, %s24
    %p26 = scmp.eq.s32.totalorder %s25, 0
    %s28 = sadd.s32 %s27, 1
    %s29 = scalar_select %p26, %s27, %s28
    %p32 = pneg %p26
    %p33 = scmp.eq.s32.totalorder %s17, 1
    %p34 = por %p32, %p33
    %p35 = scmp.ne.s32.totalorder %s27, %s30
    %p36 = scmp.eq.s32.totalorder %s17, 0
    %p37 = por %p35, %p36
    %p38 = scmp.ne.s32.totalorder %s27, %s30
    %p39 = scmp.eq.s32.totalorder %s22, 1
    %p40 = por %p38, %p39
    %p41 = scmp.ne.s32.totalorder %s30, %s31
    %p42 = scmp.eq.s32.totalorder %s22, 0
    %p43 = por %p41, %p42
    %p44 = scmp.ne.s32.totalorder %s30, %s31
    %p45 = scmp.eq.s32.totalorder %s23, 1
    %p46 = por %p44, %p45
    %p48 = scmp.ne.s32.totalorder %s31, %s47
    %p49 = scmp.eq.s32.totalorder %s23, 0
    %p50 = por %p48, %p49
    %s52 = sadd.s32 %s51, 1
    %p55 = scmp.eq.s32.totalorder %s17, 1
    %p56 = scmp.ne.s32.totalorder %s51, %s53
    %p57 = scmp.eq.s32.totalorder %s17, 0
    %p58 = por %p56, %p57
    %p59 = scmp.ne.s32.totalorder %s51, %s53
    %p60 = scmp.eq.s32.totalorder %s22, 1
    %p61 = por %p59, %p60
    %p62 = scmp.ne.s32.totalorder %s53, %s54
    %p63 = scmp.eq.s32.totalorder %s22, 0
    %p64 = por %p62, %p63
    %p65 = scmp.ne.s32.totalorder %s53, %s54
    %p66 = scmp.eq.s32.totalorder %s23, 1
    %p67 = por %p65, %p66
    %p69 = scmp.ne.s32.totalorder %s54, %s68
    %p70 = scmp.eq.s32.totalorder %s23, 0
    %p71 = por %p69, %p70
    %s73 = sadd.s32 %s72, 1
    %p76 = scmp.eq.s32.totalorder %s17, 1
    %p77 = scmp.ne.s32.totalorder %s72, %s74
    %p78 = scmp.eq.s32.totalorder %s17, 0
    %p79 = por %p77, %p78
    %p80 = scmp.ne.s32.totalorder %s72, %s74
    %p81 = scmp.eq.s32.totalorder %s22, 1
    %p82 = por %p80, %p81
    %p83 = scmp.ne.s32.totalorder %s74, %s75
    %p84 = scmp.eq.s32.totalorder %s22, 0
    %p85 = por %p83, %p84
    %p86 = scmp.ne.s32.totalorder %s74, %s75
    %p87 = scmp.eq.s32.totalorder %s23, 1
    %p88 = por %p86, %p87
    %p90 = scmp.ne.s32.totalorder %s75, %s89
    %p91 = scmp.eq.s32.totalorder %s23, 0
    %p92 = por %p90, %p91
    %s94 = sadd.s32 %s93, 1
    %p97 = scmp.eq.s32.totalorder %s17, 1
    %p98 = scmp.ne.s32.totalorder %s93, %s95
    %p99 = scmp.eq.s32.totalorder %s17, 0
    %p100 = por %p98, %p99
    %p101 = scmp.ne.s32.totalorder %s93, %s95
    %p102 = scmp.eq.s32.totalorder %s22, 1
    %p103 = por %p101, %p102
    %p104 = scmp.ne.s32.totalorder %s95, %s96
    %p105 = scmp.eq.s32.totalorder %s22, 0
    %p106 = por %p104, %p105
    %p107 = scmp.ne.s32.totalorder %s95, %s96
    %p108 = scmp.eq.s32.totalorder %s23, 1
    %p109 = por %p107, %p108
    %p111 = scmp.ne.s32.totalorder %s96, %s110
    %p112 = scmp.eq.s32.totalorder %s23, 0
    %p113 = por %p111, %p112
    %s115 = sadd.s32 %s114, 1
    %p118 = scmp.eq.s32.totalorder %s17, 1
    %p119 = scmp.ne.s32.totalorder %s114, %s116
    %p120 = scmp.eq.s32.totalorder %s17, 0
    %p121 = por %p119, %p120
    %p122 = scmp.ne.s32.totalorder %s114, %s116
    %p123 = scmp.eq.s32.totalorder %s22, 1
    %p124 = por %p122, %p123
    %p125 = scmp.ne.s32.totalorder %s116, %s117
    %p126 = scmp.eq.s32.totalorder %s22, 0
    %p127 = por %p125, %p126
    %p128 = scmp.ne.s32.totalorder %s116, %s117
    %p129 = scmp.eq.s32.totalorder %s23, 1
    %p130 = por %p128, %p129
    %p132 = scmp.ne.s32.totalorder %s117, %s131
    %p133 = scmp.eq.s32.totalorder %s23, 0
    %p134 = por %p132, %p133
    %s136 = sadd.s32 %s135, 1
    %p139 = scmp.eq.s32.totalorder %s17, 1
    %p140 = scmp.ne.s32.totalorder %s135, %s137
    %p141 = scmp.eq.s32.totalorder %s17, 0
    %p142 = por %p140, %p141
    %p143 = scmp.ne.s32.totalorder %s135, %s137
    %p144 = scmp.eq.s32.totalorder %s22, 1
    %p145 = por %p143, %p144
    %p146 = scmp.ne.s32.totalorder %s137, %s138
    %p147 = scmp.eq.s32.totalorder %s22, 0
    %p148 = por %p146, %p147
    %p149 = scmp.ne.s32.totalorder %s137, %s138
    %p150 = scmp.eq.s32.totalorder %s23, 1
    %p151 = por %p149, %p150
    %p153 = scmp.ne.s32.totalorder %s138, %s152
    %p154 = scmp.eq.s32.totalorder %s23, 0
    %p155 = por %p153, %p154
    %s157 = sadd.s32 %s156, 1
    %p160 = scmp.eq.s32.totalorder %s17, 1
    %p161 = scmp.ne.s32.totalorder %s156, %s158
    %p162 = scmp.eq.s32.totalorder %s17, 0
    %p163 = por %p161, %p162
    %p164 = scmp.ne.s32.totalorder %s156, %s158
    %p165 = scmp.eq.s32.totalorder %s22, 1
    %p166 = por %p164, %p165
    %p167 = scmp.ne.s32.totalorder %s158, %s159
    %p168 = scmp.eq.s32.totalorder %s22, 0
    %p169 = por %p167, %p168
    %p170 = scmp.ne.s32.totalorder %s158, %s159
    %p171 = scmp.eq.s32.totalorder %s23, 1
    %p172 = por %p170, %p171
    %p174 = scmp.ne.s32.totalorder %s159, %s173
    %p175 = scmp.eq.s32.totalorder %s23, 0
    %p176 = por %p174, %p175
    %s178 = sadd.s32 %s177, 1
    %p181 = scmp.eq.s32.totalorder %s17, 1
    %p182 = scmp.ne.s32.totalorder %s177, %s179
    %p183 = scmp.eq.s32.totalorder %s17, 0
    %p184 = por %p182, %p183
    %p185 = scmp.ne.s32.totalorder %s177, %s179
    %p186 = scmp.eq.s32.totalorder %s22, 1
    %p187 = por %p185, %p186
    %p188 = scmp.ne.s32.totalorder %s179, %s180
    %p189 = scmp.eq.s32.totalorder %s22, 0
    %p190 = por %p188, %p189
    %p191 = scmp.ne.s32.totalorder %s179, %s180
    %p192 = scmp.eq.s32.totalorder %s23, 1
    %p193 = por %p191, %p192
    %p195 = scmp.ne.s32.totalorder %s180, %s194
    %p196 = scmp.eq.s32.totalorder %s23, 0
    %p197 = por %p195, %p196
    %s199 = sadd.s32 %s198, 1
    %p202 = scmp.eq.s32.totalorder %s17, 1
    %p203 = scmp.ne.s32.totalorder %s198, %s200
    %p204 = scmp.eq.s32.totalorder %s17, 0
    %p205 = por %p203, %p204
    %p206 = scmp.ne.s32.totalorder %s198, %s200
    %p207 = scmp.eq.s32.totalorder %s22, 1
    %p208 = por %p206, %p207
    %p209 = scmp.ne.s32.totalorder %s200, %s201
    %p210 = scmp.eq.s32.totalorder %s22, 0
    %p211 = por %p209, %p210
    %p212 = scmp.ne.s32.totalorder %s200, %s201
    %p213 = scmp.eq.s32.totalorder %s23, 1
    %p214 = por %p212, %p213
    %p216 = scmp.ne.s32.totalorder %s201, %s215
    %p217 = scmp.eq.s32.totalorder %s23, 0
    %p218 = por %p216, %p217
    %s220 = sadd.s32 %s219, 1
    %p223 = scmp.eq.s32.totalorder %s17, 1
    %p224 = scmp.ne.s32.totalorder %s219, %s221
    %p225 = scmp.eq.s32.totalorder %s17, 0
    %p226 = por %p224, %p225
    %p227 = scmp.ne.s32.totalorder %s219, %s221
    %p228 = scmp.eq.s32.totalorder %s22, 1
    %p229 = por %p227, %p228
    %p230 = scmp.ne.s32.totalorder %s221, %s222
    %p231 = scmp.eq.s32.totalorder %s22, 0
    %p232 = por %p230, %p231
    %p233 = scmp.ne.s32.totalorder %s221, %s222
    %p234 = scmp.eq.s32.totalorder %s23, 1
    %p235 = por %p233, %p234
    %p237 = scmp.ne.s32.totalorder %s222, %s236
    %p238 = scmp.eq.s32.totalorder %s23, 0
    %p239 = por %p237, %p238
    %s241 = sadd.s32 %s240, 1
    %p244 = scmp.eq.s32.totalorder %s17, 1
    %p245 = scmp.ne.s32.totalorder %s240, %s242
    %p246 = scmp.eq.s32.totalorder %s17, 0
    %p247 = por %p245, %p246
    %p248 = scmp.ne.s32.totalorder %s240, %s242
    %p249 = scmp.eq.s32.totalorder %s22, 1
    %p250 = por %p248, %p249
    %p251 = scmp.ne.s32.totalorder %s242, %s243
    %p252 = scmp.eq.s32.totalorder %s22, 0
    %p253 = por %p251, %p252
    %p254 = scmp.ne.s32.totalorder %s242, %s243
    %p255 = scmp.eq.s32.totalorder %s23, 1
    %p256 = por %p254, %p255
    %p258 = scmp.ne.s32.totalorder %s243, %s257
    %p259 = scmp.eq.s32.totalorder %s23, 0
    %p260 = por %p258, %p259
    %s261 = ssub.s32 %s17, %s24
    %p262 = scmp.eq.s32.totalorder %s261, 0
    %s264 = sadd.s32 %s263, 1
    %s265 = scalar_select %p262, %s263, %s264
    %p268 = pneg %p262
    %p269 = scmp.eq.s32.totalorder %s17, 1
    %p270 = por %p268, %p269
    %p271 = scmp.ne.s32.totalorder %s263, %s266
    %p272 = scmp.eq.s32.totalorder %s17, 0
    %p273 = por %p271, %p272
    %p274 = scmp.ne.s32.totalorder %s263, %s266
    %p275 = scmp.eq.s32.totalorder %s22, 1
    %p276 = por %p274, %p275
    %p277 = scmp.ne.s32.totalorder %s266, %s267
    %p278 = scmp.eq.s32.totalorder %s22, 0
    %p279 = por %p277, %p278
    %p280 = scmp.ne.s32.totalorder %s266, %s267
    %p281 = scmp.eq.s32.totalorder %s23, 1
    %p282 = por %p280, %p281
    %p284 = scmp.ne.s32.totalorder %s267, %s283
    %p285 = scmp.eq.s32.totalorder %s23, 0
    %p286 = por %p284, %p285
    %p287 = scmp.le.s32.totalorder 1, %s17
    %p288 = scmp.lt.s32.totalorder %s17, 3
    %p289 = pnand %p287, %p288
    %p290 = pneg %p289
    // Predicated region
    $region9: #{_lambda_.7} parent=5 // pred_check
      _
    $region10: #{_lambda_.7} parent=5 // pred_check_branch
      %292 = sbr.rel (%p289) target = $region12
    $region11: #{_lambda_.7} parent=5 // pred_region
      %s293 = ssub.s32 %s17, 1
      // Predicated region
      $region13: #{_lambda_.7} parent=11 // pred_check
        %p294 = pneg %p64
      $region14: #{_lambda_.7} parent=11 // pred_check_branch
        %296 = sbr.rel (%p294) target = $region16
      $region15: #{_lambda_.7} parent=11 // pred_region
        _
      $region16: #{_lambda_.7} parent=11 // pred_fallthru
        _
      // Predicated region
      $region17: #{_lambda_.7} parent=11 // pred_check
        %p297 = pneg %p85
      $region18: #{_lambda_.7} parent=11 // pred_check_branch
        %299 = sbr.rel (%p297) target = $region20
      $region19: #{_lambda_.7} parent=11 // pred_region
        _
      $region20: #{_lambda_.7} parent=11 // pred_fallthru
        _
      // Predicated region
      $region21: #{_lambda_.7} parent=11 // pred_check
        %p300 = pneg %p106
      $region22: #{_lambda_.7} parent=11 // pred_check_branch
        %302 = sbr.rel (%p300) target = $region24
      $region23: #{_lambda_.7} parent=11 // pred_region
        _
      $region24: #{_lambda_.7} parent=11 // pred_fallthru
        _
      // Predicated region
      $region25: #{_lambda_.7} parent=11 // pred_check
        %p303 = pneg %p127
      $region26: #{_lambda_.7} parent=11 // pred_check_branch
        %305 = sbr.rel (%p303) target = $region28
      $region27: #{_lambda_.7} parent=11 // pred_region
        _
      $region28: #{_lambda_.7} parent=11 // pred_fallthru
        _
      // Predicated region
      $region29: #{_lambda_.7} parent=11 // pred_check
        %p306 = pneg %p148
      $region30: #{_lambda_.7} parent=11 // pred_check_branch
        %308 = sbr.rel (%p306) target = $region32
      $region31: #{_lambda_.7} parent=11 // pred_region
        _
      $region32: #{_lambda_.7} parent=11 // pred_fallthru
        _
      // Predicated region
      $region33: #{_lambda_.7} parent=11 // pred_check
        %p309 = pneg %p169
      $region34: #{_lambda_.7} parent=11 // pred_check_branch
        %311 = sbr.rel (%p309) target = $region36
      $region35: #{_lambda_.7} parent=11 // pred_region
        _
      $region36: #{_lambda_.7} parent=11 // pred_fallthru
        _
      // Predicated region
      $region37: #{_lambda_.7} parent=11 // pred_check
        %p312 = pneg %p190
      $region38: #{_lambda_.7} parent=11 // pred_check_branch
        %314 = sbr.rel (%p312) target = $region40
      $region39: #{_lambda_.7} parent=11 // pred_region
        _
      $region40: #{_lambda_.7} parent=11 // pred_fallthru
        _
      // Predicated region
      $region41: #{_lambda_.7} parent=11 // pred_check
        %p315 = pneg %p211
      $region42: #{_lambda_.7} parent=11 // pred_check_branch
        %317 = sbr.rel (%p315) target = $region44
      $region43: #{_lambda_.7} parent=11 // pred_region
        _
      $region44: #{_lambda_.7} parent=11 // pred_fallthru
        _
      // Predicated region
      $region45: #{_lambda_.7} parent=11 // pred_check
        %p318 = pneg %p232
      $region46: #{_lambda_.7} parent=11 // pred_check_branch
        %320 = sbr.rel (%p318) target = $region48
      $region47: #{_lambda_.7} parent=11 // pred_region
        _
      $region48: #{_lambda_.7} parent=11 // pred_fallthru
        _
      // Predicated region
      $region49: #{_lambda_.7} parent=11 // pred_check
        %p321 = pneg %p253
      $region50: #{_lambda_.7} parent=11 // pred_check_branch
        %323 = sbr.rel (%p321) target = $region52
      $region51: #{_lambda_.7} parent=11 // pred_region
        _
      $region52: #{_lambda_.7} parent=11 // pred_fallthru
        _
    $region12: #{_lambda_.7} parent=5 // pred_fallthru
      _
    %p324 = scmp.lt.s32.totalorder %s17, 2
    // Predicated region
    $region53: #{_lambda_.7} parent=5 // pred_check
      %p325 = pneg %p324
    $region54: #{_lambda_.7} parent=5 // pred_check_branch
      %327 = sbr.rel (%p325) target = $region56
    $region55: #{_lambda_.7} parent=5 // pred_region
      // Predicated region
      $region57: #{_lambda_.7} parent=55 // pred_check
        %p328 = pneg %p37
      $region58: #{_lambda_.7} parent=55 // pred_check_branch
        %330 = sbr.rel (%p328) target = $region60
      $region59: #{_lambda_.7} parent=55 // pred_region
        %p331 = scmp.lt.s32.totalorder %s17, 1
        %s332 = scalar_select %p331, %s17, 1
        %s333 = smul.addr %s332, 2
        %s334 = smul.addr %s333, 4
        %s335 = scalar_lea.vmem %s0, %s334
      $region60: #{_lambda_.7} parent=55 // pred_fallthru
        _
    $region56: #{_lambda_.7} parent=5 // pred_fallthru
      _
    %p336 = scmp.le.s32.totalorder 1, %s17
    %p337 = scmp.lt.s32.totalorder %s17, 3
    %p338 = pnand %p336, %p337
    %p339 = pneg %p338
    // Predicated region
    $region61: #{_lambda_.7} parent=5 // pred_check
      _
    $region62: #{_lambda_.7} parent=5 // pred_check_branch
      %341 = sbr.rel (%p338) target = $region64
    $region63: #{_lambda_.7} parent=5 // pred_region
      %s342 = ssub.s32 %s17, 1
      %p343 = scmp.lt.s32.totalorder %s22, 1
      %s344 = scalar_select %p343, %s22, 1
      %s345 = smul.addr %s344, 2
      %s346 = smul.addr %s345, 4
      %s347 = scalar_lea.vmem %s0, %s346
      %p348 = pneg %p43
      %p349 = pneg %p40
      %p350 = pneg %p64
      %p351 = pneg %p61
      %p352 = pneg %p85
      %p353 = pneg %p82
      %p354 = pneg %p106
      %p355 = pneg %p103
      %p356 = pneg %p127
      %p357 = pneg %p124
      %p358 = pneg %p148
      %p359 = pneg %p145
      %p360 = pneg %p169
      %p361 = pneg %p166
      %p362 = pneg %p190
      %p363 = pneg %p187
      %p364 = pneg %p211
      %p365 = pneg %p208
      %p366 = pneg %p232
      %p367 = pneg %p229
      %p368 = pneg %p253
      %p369 = pneg %p250
      %p370 = pneg %p279
      %p371 = pneg %p276
      %p372 = scmp.lt.s32.totalorder %s22, 1
      %s373 = scalar_select %p372, %s22, 1
      %s374 = smul.addr %s373, 8
      %s375 = scalar_lea.vmem %s11, %s374
      %p376 = scmp.lt.s32.totalorder %s22, 1
      %s377 = scalar_select %p376, %s22, 1
      %s378 = smul.addr %s377, 2
      %s379 = smul.addr %s378, 4
      %s380 = scalar_lea.vmem %s0, %s379
      %p381 = scmp.lt.s32.totalorder %s22, 1
      %s382 = scalar_select %p381, %s22, 1
      %s383 = smul.addr %s382, 8
      %s384 = scalar_lea.vmem %s11, %s383
      %v385 = vld [vmem:[%s380] sm:$0x77]
      %v387 = vcombine.high %v385, %v385
      %vm389 = vcmask 1042432
      %v390 = vsel %vm389, %v385, 0.0
      %v391 = vsel %vm389, %v387, 0.0
      %v392 = vadd.f32 %v390, %v391
      %393 = vadd.xlane.f32.xlu0 %v392
      %v394 = vpop.xlane.xlu0 %393
      %v395 = vrcp.pop 256.0
      %v396 = vmul.f32 %v394, %v395
      %v397 = vld [vmem:[%s1] sm:$0x7]
      %v398 = vld [vmem:[%s2] sm:$0x1]
      %v399 = vld [vmem:[%s3] sm:$0xff]
      %v400 = vld [vmem:[%s3 + $0x8] sm:$0xff]
      %v401 = vld [vmem:[%s3 + $0x10] sm:$0xff]
      %v402 = vld [vmem:[%s3 + $0x18] sm:$0xff]
      %v403 = vld [vmem:[%s4] sm:$0x1]
      %v405 = vlaneseq
      %v406 = vand.u32 %v405, 127
      %v407 = vlaneseq
      %v408 = vshrl.u32 %v407, 7
      %v409 = vsub.s32 %v406, %v408
      %v410 = vrot.slane %v396, %v409
      %vm411 = vcmask 23552
      %v412 = vsel %vm411, %v410, 0
      %v415 = vsel %vm389, %v397, 0
      %417 = vmatprep.subr.mxu0 0.0
      %418 = vmatpush1.msra.mxu0 %v415
      %419 = vmatprep.subr.mxu0 0.0
      %420 = vmatpush1.msra.mxu0 0.0
      %421 = vmatprep.subr.mxu0 0.0
      %422 = vmatpush1.msra.mxu0 0.0
      %423 = vmatprep.subr.mxu0 0.0
      %424 = vmatpush1.msra.mxu0 0.0
      %425 = vmatprep.subr.mxu0 0.0
      %426 = vmatpush1.msra.mxu0 0.0
      %427 = vmatprep.subr.mxu0 0.0
      %428 = vmatpush1.msra.mxu0 0.0
      %429 = vmatprep.subr.mxu0 0.0
      %430 = vmatpush1.msra.mxu0 0.0
      %431 = vmatprep.subr.mxu0 0.0
      %432 = vmatpush1.msra.mxu0 0.0
      %433 = vmatprep.subr.mxu0 0.0
      %434 = vmatpush1.msra.mxu0 0.0
      %435 = vmatprep.subr.mxu0 0.0
      %436 = vmatpush1.msra.mxu0 0.0
      %437 = vmatprep.subr.mxu0 0.0
      %438 = vmatpush1.msra.mxu0 0.0
      %439 = vmatprep.subr.mxu0 0.0
      %440 = vmatpush1.msra.mxu0 0.0
      %441 = vmatprep.subr.mxu0 0.0
      %442 = vmatpush1.msra.mxu0 0.0
      %443 = vmatprep.subr.mxu0 0.0
      %444 = vmatpush1.msra.mxu0 0.0
      %445 = vmatprep.subr.mxu0 0.0
      %446 = vmatpush1.msra.mxu0 0.0
      %447 = vmatprep.subr.mxu0 0.0
      %448 = vmatpush1.msra.mxu0 0.0
      %449 = vmatprep.subr.mxu0 0.0
      %450 = vmatpush1.msra.mxu0 0.0
      %451 = vmatprep.subr.mxu0 0.0
      %452 = vmatpush1.msra.mxu0 0.0
      %453 = vmatprep.subr.mxu0 0.0
      %454 = vmatpush1.msra.mxu0 0.0
      %455 = vmatprep.subr.mxu0 0.0
      %456 = vmatpush1.msra.mxu0 0.0
      %457 = vmatprep.subr.mxu0 0.0
      %458 = vmatpush1.msra.mxu0 0.0
      %459 = vmatprep.subr.mxu0 0.0
      %460 = vmatpush1.msra.mxu0 0.0
      %461 = vmatprep.subr.mxu0 0.0
      %462 = vmatpush1.msra.mxu0 0.0
      %463 = vmatprep.subr.mxu0 0.0
      %464 = vmatpush1.msra.mxu0 0.0
      %465 = vmatprep.subr.mxu0 0.0
      %466 = vmatpush1.msra.mxu0 0.0
      %467 = vmatprep.subr.mxu0 0.0
      %468 = vmatpush1.msra.mxu0 0.0
      %469 = vmatprep.subr.mxu0 0.0
      %470 = vmatpush1.msra.mxu0 0.0
      %471 = vmatprep.subr.mxu0 0.0
      %472 = vmatpush1.msra.mxu0 0.0
      %473 = vmatprep.subr.mxu0 0.0
      %474 = vmatpush1.msra.mxu0 0.0
      %475 = vmatprep.subr.mxu0 0.0
      %476 = vmatpush1.msra.mxu0 0.0
      %477 = vmatprep.subr.mxu0 0.0
      %478 = vmatpush1.msra.mxu0 0.0
      %479 = vmatprep.subr.mxu0 0.0
      %480 = vmatpush1.msra.mxu0 0.0
      %481 = vmatprep.mubr.f32.mxu0 0.0
      %482 = vmatmul.mubr.f32.gmra.mrb[0].mxu0 %v412
      %v483 = vpop.f32.mrb[0].mxu0
      %v484 = vadd.f32 %v398, %v483
      %v485 = vpop.f32.mrb[0].mxu0
      %486 = vdwg.mxu0
      %vm487 = vcmask 261120
      %v489 = vsel %vm487, %v484, 0
      %491 = vmatprep.subr.mxu0 0.0
      %492 = vmatpush1.msra.mxu0 %v399
      %493 = vmatprep.subr.mxu0 0.0
      %494 = vmatpush1.msra.mxu0 %v400
      %495 = vmatprep.subr.mxu0 0.0
      %496 = vmatpush1.msra.mxu0 %v401
      %497 = vmatprep.subr.mxu0 0.0
      %498 = vmatpush1.msra.mxu0 %v402
      %499 = vmatprep.subr.mxu0 0.0
      %500 = vmatpush1.msra.mxu0 0.0
      %501 = vmatprep.subr.mxu0 0.0
      %502 = vmatpush1.msra.mxu0 0.0
      %503 = vmatprep.subr.mxu0 0.0
      %504 = vmatpush1.msra.mxu0 0.0
      %505 = vmatprep.subr.mxu0 0.0
      %506 = vmatpush1.msra.mxu0 0.0
      %507 = vmatprep.subr.mxu0 0.0
      %508 = vmatpush1.msra.mxu0 0.0
      %509 = vmatprep.subr.mxu0 0.0
      %510 = vmatpush1.msra.mxu0 0.0
      %511 = vmatprep.subr.mxu0 0.0
      %512 = vmatpush1.msra.mxu0 0.0
      %513 = vmatprep.subr.mxu0 0.0
      %514 = vmatpush1.msra.mxu0 0.0
      %515 = vmatprep.subr.mxu0 0.0
      %516 = vmatpush1.msra.mxu0 0.0
      %517 = vmatprep.subr.mxu0 0.0
      %518 = vmatpush1.msra.mxu0 0.0
      %519 = vmatprep.subr.mxu0 0.0
      %520 = vmatpush1.msra.mxu0 0.0
      %521 = vmatprep.subr.mxu0 0.0
      %522 = vmatpush1.msra.mxu0 0.0
      %523 = vmatprep.subr.mxu0 0.0
      %524 = vmatpush1.msra.mxu0 0.0
      %525 = vmatprep.subr.mxu0 0.0
      %526 = vmatpush1.msra.mxu0 0.0
      %527 = vmatprep.subr.mxu0 0.0
      %528 = vmatpush1.msra.mxu0 0.0
      %529 = vmatprep.subr.mxu0 0.0
      %530 = vmatpush1.msra.mxu0 0.0
      %531 = vmatprep.subr.mxu0 0.0
      %532 = vmatpush1.msra.mxu0 0.0
      %533 = vmatprep.subr.mxu0 0.0
      %534 = vmatpush1.msra.mxu0 0.0
      %535 = vmatprep.subr.mxu0 0.0
      %536 = vmatpush1.msra.mxu0 0.0
      %537 = vmatprep.subr.mxu0 0.0
      %538 = vmatpush1.msra.mxu0 0.0
      %539 = vmatprep.subr.mxu0 0.0
      %540 = vmatpush1.msra.mxu0 0.0
      %541 = vmatprep.subr.mxu0 0.0
      %542 = vmatpush1.msra.mxu0 0.0
      %543 = vmatprep.subr.mxu0 0.0
      %544 = vmatpush1.msra.mxu0 0.0
      %545 = vmatprep.subr.mxu0 0.0
      %546 = vmatpush1.msra.mxu0 0.0
      %547 = vmatprep.subr.mxu0 0.0
      %548 = vmatpush1.msra.mxu0 0.0
      %549 = vmatprep.subr.mxu0 0.0
      %550 = vmatpush1.msra.mxu0 0.0
      %551 = vmatprep.subr.mxu0 0.0
      %552 = vmatpush1.msra.mxu0 0.0
      %553 = vmatprep.subr.mxu0 0.0
      %554 = vmatpush1.msra.mxu0 0.0
      %555 = vmatprep.mubr.f32.mxu0 0.0
      %556 = vmatmul.mubr.f32.gmra.mrb[0].mxu0 %v489
      %v557 = vpop.f32.mrb[0].mxu0
      %v558 = vadd.f32 %v403, %v557
      %v559 = vpop.f32.mrb[0].mxu0
      %560 = vdwg.mxu0
      %v561 = vld [vmem:[%s9] sm:$0x1]
      %v562 = vadd.f32 %v558, %v561
      %vm563 = vcmask 253952
      %564 = vst.msk [vmem:[%s384] sm:$0x1] %vm563, %v562
      %v565 = vld [vmem:[%s5] sm:$0x7]
      %v566 = vld [vmem:[%s6] sm:$0x1]
      %v567 = vld [vmem:[%s7] sm:$0xff]
      %v568 = vld [vmem:[%s7 + $0x8] sm:$0xff]
      %v569 = vld [vmem:[%s8] sm:$0x1]
      %v571 = vsel %vm389, %v565, 0
      %573 = vmatprep.subr.mxu0 0.0
      %574 = vmatpush1.msra.mxu0 %v571
      %575 = vmatprep.subr.mxu0 0.0
      %576 = vmatpush1.msra.mxu0 0.0
      %577 = vmatprep.subr.mxu0 0.0
      %578 = vmatpush1.msra.mxu0 0.0
      %579 = vmatprep.subr.mxu0 0.0
      %580 = vmatpush1.msra.mxu0 0.0
      %581 = vmatprep.subr.mxu0 0.0
      %582 = vmatpush1.msra.mxu0 0.0
      %583 = vmatprep.subr.mxu0 0.0
      %584 = vmatpush1.msra.mxu0 0.0
      %585 = vmatprep.subr.mxu0 0.0
      %586 = vmatpush1.msra.mxu0 0.0
      %587 = vmatprep.subr.mxu0 0.0
      %588 = vmatpush1.msra.mxu0 0.0
      %589 = vmatprep.subr.mxu0 0.0
      %590 = vmatpush1.msra.mxu0 0.0
      %591 = vmatprep.subr.mxu0 0.0
      %592 = vmatpush1.msra.mxu0 0.0
      %593 = vmatprep.subr.mxu0 0.0
      %594 = vmatpush1.msra.mxu0 0.0
      %595 = vmatprep.subr.mxu0 0.0
      %596 = vmatpush1.msra.mxu0 0.0
      %597 = vmatprep.subr.mxu0 0.0
      %598 = vmatpush1.msra.mxu0 0.0
      %599 = vmatprep.subr.mxu0 0.0
      %600 = vmatpush1.msra.mxu0 0.0
      %601 = vmatprep.subr.mxu0 0.0
      %602 = vmatpush1.msra.mxu0 0.0
      %603 = vmatprep.subr.mxu0 0.0
      %604 = vmatpush1.msra.mxu0 0.0
      %605 = vmatprep.subr.mxu0 0.0
      %606 = vmatpush1.msra.mxu0 0.0
      %607 = vmatprep.subr.mxu0 0.0
      %608 = vmatpush1.msra.mxu0 0.0
      %609 = vmatprep.subr.mxu0 0.0
      %610 = vmatpush1.msra.mxu0 0.0
      %611 = vmatprep.subr.mxu0 0.0
      %612 = vmatpush1.msra.mxu0 0.0
      %613 = vmatprep.subr.mxu0 0.0
      %614 = vmatpush1.msra.mxu0 0.0
      %615 = vmatprep.subr.mxu0 0.0
      %616 = vmatpush1.msra.mxu0 0.0
      %617 = vmatprep.subr.mxu0 0.0
      %618 = vmatpush1.msra.mxu0 0.0
      %619 = vmatprep.subr.mxu0 0.0
      %620 = vmatpush1.msra.mxu0 0.0
      %621 = vmatprep.subr.mxu0 0.0
      %622 = vmatpush1.msra.mxu0 0.0
      %623 = vmatprep.subr.mxu0 0.0
      %624 = vmatpush1.msra.mxu0 0.0
      %625 = vmatprep.subr.mxu0 0.0
      %626 = vmatpush1.msra.mxu0 0.0
      %627 = vmatprep.subr.mxu0 0.0
      %628 = vmatpush1.msra.mxu0 0.0
      %629 = vmatprep.subr.mxu0 0.0
      %630 = vmatpush1.msra.mxu0 0.0
      %631 = vmatprep.subr.mxu0 0.0
      %632 = vmatpush1.msra.mxu0 0.0
      %633 = vmatprep.subr.mxu0 0.0
      %634 = vmatpush1.msra.mxu0 0.0
      %635 = vmatprep.subr.mxu0 0.0
      %636 = vmatpush1.msra.mxu0 0.0
      %637 = vmatprep.mubr.f32.mxu0 0.0
      %638 = vmatmul.mubr.f32.gmra.mrb[0].mxu0 %v412
      %v639 = vpop.f32.mrb[0].mxu0
      %v640 = vadd.f32 %v566, %v639
      %v641 = vpop.f32.mrb[0].mxu0
      %642 = vdwg.mxu0
      %vm643 = vcmask 130048
      %v645 = vsel %vm643, %v640, 0
      %647 = vmatprep.subr.mxu0 0.0
      %648 = vmatpush1.msra.mxu0 %v567
      %649 = vmatprep.subr.mxu0 0.0
      %650 = vmatpush1.msra.mxu0 %v568
      %651 = vmatprep.subr.mxu0 0.0
      %652 = vmatpush1.msra.mxu0 0.0
      %653 = vmatprep.subr.mxu0 0.0
      %654 = vmatpush1.msra.mxu0 0.0
      %655 = vmatprep.subr.mxu0 0.0
      %656 = vmatpush1.msra.mxu0 0.0
      %657 = vmatprep.subr.mxu0 0.0
      %658 = vmatpush1.msra.mxu0 0.0
      %659 = vmatprep.subr.mxu0 0.0
      %660 = vmatpush1.msra.mxu0 0.0
      %661 = vmatprep.subr.mxu0 0.0
      %662 = vmatpush1.msra.mxu0 0.0
      %663 = vmatprep.subr.mxu0 0.0
      %664 = vmatpush1.msra.mxu0 0.0
      %665 = vmatprep.subr.mxu0 0.0
      %666 = vmatpush1.msra.mxu0 0.0
      %667 = vmatprep.subr.mxu0 0.0
      %668 = vmatpush1.msra.mxu0 0.0
      %669 = vmatprep.subr.mxu0 0.0
      %670 = vmatpush1.msra.mxu0 0.0
      %671 = vmatprep.subr.mxu0 0.0
      %672 = vmatpush1.msra.mxu0 0.0
      %673 = vmatprep.subr.mxu0 0.0
      %674 = vmatpush1.msra.mxu0 0.0
      %675 = vmatprep.subr.mxu0 0.0
      %676 = vmatpush1.msra.mxu0 0.0
      %677 = vmatprep.subr.mxu0 0.0
      %678 = vmatpush1.msra.mxu0 0.0
      %679 = vmatprep.subr.mxu0 0.0
      %680 = vmatpush1.msra.mxu0 0.0
      %681 = vmatprep.subr.mxu0 0.0
      %682 = vmatpush1.msra.mxu0 0.0
      %683 = vmatprep.subr.mxu0 0.0
      %684 = vmatpush1.msra.mxu0 0.0
      %685 = vmatprep.subr.mxu0 0.0
      %686 = vmatpush1.msra.mxu0 0.0
      %687 = vmatprep.subr.mxu0 0.0
      %688 = vmatpush1.msra.mxu0 0.0
      %689 = vmatprep.subr.mxu0 0.0
      %690 = vmatpush1.msra.mxu0 0.0
      %691 = vmatprep.subr.mxu0 0.0
      %692 = vmatpush1.msra.mxu0 0.0
      %693 = vmatprep.subr.mxu0 0.0
      %694 = vmatpush1.msra.mxu0 0.0
      %695 = vmatprep.subr.mxu0 0.0
      %696 = vmatpush1.msra.mxu0 0.0
      %697 = vmatprep.subr.mxu0 0.0
      %698 = vmatpush1.msra.mxu0 0.0
      %699 = vmatprep.subr.mxu0 0.0
      %700 = vmatpush1.msra.mxu0 0.0
      %701 = vmatprep.subr.mxu0 0.0
      %702 = vmatpush1.msra.mxu0 0.0
      %703 = vmatprep.subr.mxu0 0.0
      %704 = vmatpush1.msra.mxu0 0.0
      %705 = vmatprep.subr.mxu0 0.0
      %706 = vmatpush1.msra.mxu0 0.0
      %707 = vmatprep.subr.mxu0 0.0
      %708 = vmatpush1.msra.mxu0 0.0
      %709 = vmatprep.subr.mxu0 0.0
      %710 = vmatpush1.msra.mxu0 0.0
      %711 = vmatprep.mubr.f32.mxu0 0.0
      %712 = vmatmul.mubr.f32.gmra.mrb[0].mxu0 %v645
      %v713 = vpop.f32.mrb[0].mxu0
      %v714 = vadd.f32 %v569, %v713
      %v715 = vpop.f32.mrb[0].mxu0
      %716 = vdwg.mxu0
      %v717 = vld [vmem:[%s9 + $0x1] sm:$0x1]
      %v718 = vadd.f32 %v714, %v717
      %719 = vst.msk [vmem:[%s384 + $0x1] sm:$0x1] %vm563, %v718
      %v720 = vld [vmem:[%s10] sm:$0x3f]
      %vm721 = vcmask 259072
      %722 = vst.msk [vmem:[%s384 + $0x2] sm:$0x3f] %vm721, %v720
      %p723 = scmp.lt.s32.totalorder %s22, 1
      %s724 = scalar_select %p723, %s22, 1
      %s725 = smul.addr %s724, 8
      %s726 = scalar_lea.vmem %s11, %s725
      // Predicated region
      $region65: #{_lambda_.7} parent=63 // pred_check
        %p727 = pneg %p276
      $region66: #{_lambda_.7} parent=63 // pred_check_branch
        %729 = sbr.rel (%p727) target = $region68
      $region67: #{_lambda_.7} parent=63 // pred_region
        _
      $region68: #{_lambda_.7} parent=63 // pred_fallthru
        _
    $region64: #{_lambda_.7} parent=5 // pred_fallthru
      _
    %p730 = scmp.le.s32.totalorder 2, %s17
    // Predicated region
    $region69: #{_lambda_.7} parent=5 // pred_check
      %p731 = pneg %p730
    $region70: #{_lambda_.7} parent=5 // pred_check_branch
      %733 = sbr.rel (%p731) target = $region72
    $region71: #{_lambda_.7} parent=5 // pred_region
      %s734 = ssub.s32 %s17, 2
      // Predicated region
      $region73: #{_lambda_.7} parent=71 // pred_check
        %p735 = pneg %p282
      $region74: #{_lambda_.7} parent=71 // pred_check_branch
        %737 = sbr.rel (%p735) target = $region76
      $region75: #{_lambda_.7} parent=71 // pred_region
        %p738 = scmp.lt.s32.totalorder %s23, 1
        %s739 = scalar_select %p738, %s23, 1
        %s740 = smul.addr %s739, 8
        %s741 = scalar_lea.vmem %s11, %s740
      $region76: #{_lambda_.7} parent=71 // pred_fallthru
        _
    $region72: #{_lambda_.7} parent=5 // pred_fallthru
      _
  $region6: #{_lambda_.7} parent=0 // loop_footer
    %s21 = sadd.s32 1, %s17
  $region7: #{_lambda_.7} parent=0 // loop_footer_branch
    %16 = sbr.rel target = $region3
  $region8: #{_lambda_.7} parent=0 // loop_exit
    _

// kernel: _lambda_.10
$region0: #{_lambda_.10}
  #allocation0 [shape = 'u32[]', space=smem, size = 0x4, offset = 0x4, fixed_abs, tag = 'smem constant byte address 0x4 - core index']
  #allocation1 [shape = 'u32[144,128]{1,0:T(1,128)}', space=vmem, size = 0x12000, scoped, tag = 'internal scratch']
  %s0 = inlined_call_operand.vmem [shape: f32[2,6,32], index: 0, kind: input, shape index: {}]
  %s1 = inlined_call_operand.vmem [shape: f32[1,32], index: 1, kind: input, shape index: {}]
  %s2 = inlined_call_operand.vmem [shape: f32[1,32], index: 2, kind: input, shape index: {}, may-alias: {2,4}]
  %s3 = inlined_call_operand.vmem [shape: bf16[32,32], index: 3, kind: input, shape index: {}]
  %s4 = inlined_call_operand.vmem [shape: f32[1,32], index: 4, kind: input, shape index: {}, may-alias: {2,4}]
  %s5 = inlined_call_operand.vmem [shape: f32[2,6,32], index: 5, kind: output, shape index: {}]
  %s6 = sld [smem:[#allocation0]]
  $region53: #{_lambda_.10} parent=0
    _
  %s8 = ssub.s32 1, %s6
  %s9 = scalar_select 0, %s8, %s6
  loop: start=0, step=1, limit=4
  $region2: #{_lambda_.10} parent=0 // loop_pre_header
    _
  $region3: #{_lambda_.10} parent=0 // loop_header
    %s11 = sphi 0, %s15
    %p12 = scmp.ge.s32.totalorder %s11, 4
    %s21 = sphi 0, %s23
    %s24 = sphi 0, %s21
    %s25 = sphi 0, %s24
    %s41 = sphi 0, %s25
    %s45 = sphi 0, %s45
    %s47 = sphi 0, %s45
    %s48 = sphi 0, %s47
    %s62 = sphi 0, %s48
    %s66 = sphi 0, %s66
    %s68 = sphi 0, %s66
    %s69 = sphi 0, %s68
    %s83 = sphi 0, %s69
    %s87 = sphi 0, %s87
    %s89 = sphi 0, %s87
    %s90 = sphi 0, %s89
    %s104 = sphi 0, %s90
    %s108 = sphi 0, %s108
    %s110 = sphi 0, %s108
    %s111 = sphi 0, %s110
    %s125 = sphi 0, %s111
    %s131 = sphi 0, %s133
    %s134 = sphi 0, %s131
    %s135 = sphi 0, %s134
    %s151 = sphi 0, %s135
  $region4: #{_lambda_.10} parent=0 // loop_header_branch
    %14 = sbr.rel (%p12) target = $region8
  $region5: #{_lambda_.10} parent=0 // loop_body
    %s16 = ssub.s32 %s11, 1
    %s17 = ssub.s32 %s11, 2
    %s18 = sadd.s32 %s11, 1
    %s19 = ssub.s32 %s11, %s18
    %p20 = scmp.eq.s32.totalorder %s19, 0
    %s22 = sadd.s32 %s21, 1
    %s23 = scalar_select %p20, %s21, %s22
    %p26 = pneg %p20
    %p27 = scmp.eq.s32.totalorder %s11, 1
    %p28 = por %p26, %p27
    %p29 = scmp.ne.s32.totalorder %s21, %s24
    %p30 = scmp.eq.s32.totalorder %s11, 0
    %p31 = por %p29, %p30
    %p32 = scmp.ne.s32.totalorder %s21, %s24
    %p33 = scmp.eq.s32.totalorder %s16, 1
    %p34 = por %p32, %p33
    %p35 = scmp.ne.s32.totalorder %s24, %s25
    %p36 = scmp.eq.s32.totalorder %s16, 0
    %p37 = por %p35, %p36
    %p38 = scmp.ne.s32.totalorder %s24, %s25
    %p39 = scmp.eq.s32.totalorder %s17, 1
    %p40 = por %p38, %p39
    %p42 = scmp.ne.s32.totalorder %s25, %s41
    %p43 = scmp.eq.s32.totalorder %s17, 0
    %p44 = por %p42, %p43
    %s46 = sadd.s32 %s45, 1
    %p49 = scmp.eq.s32.totalorder %s11, 1
    %p50 = scmp.ne.s32.totalorder %s45, %s47
    %p51 = scmp.eq.s32.totalorder %s11, 0
    %p52 = por %p50, %p51
    %p53 = scmp.ne.s32.totalorder %s45, %s47
    %p54 = scmp.eq.s32.totalorder %s16, 1
    %p55 = por %p53, %p54
    %p56 = scmp.ne.s32.totalorder %s47, %s48
    %p57 = scmp.eq.s32.totalorder %s16, 0
    %p58 = por %p56, %p57
    %p59 = scmp.ne.s32.totalorder %s47, %s48
    %p60 = scmp.eq.s32.totalorder %s17, 1
    %p61 = por %p59, %p60
    %p63 = scmp.ne.s32.totalorder %s48, %s62
    %p64 = scmp.eq.s32.totalorder %s17, 0
    %p65 = por %p63, %p64
    %s67 = sadd.s32 %s66, 1
    %p70 = scmp.eq.s32.totalorder %s11, 1
    %p71 = scmp.ne.s32.totalorder %s66, %s68
    %p72 = scmp.eq.s32.totalorder %s11, 0
    %p73 = por %p71, %p72
    %p74 = scmp.ne.s32.totalorder %s66, %s68
    %p75 = scmp.eq.s32.totalorder %s16, 1
    %p76 = por %p74, %p75
    %p77 = scmp.ne.s32.totalorder %s68, %s69
    %p78 = scmp.eq.s32.totalorder %s16, 0
    %p79 = por %p77, %p78
    %p80 = scmp.ne.s32.totalorder %s68, %s69
    %p81 = scmp.eq.s32.totalorder %s17, 1
    %p82 = por %p80, %p81
    %p84 = scmp.ne.s32.totalorder %s69, %s83
    %p85 = scmp.eq.s32.totalorder %s17, 0
    %p86 = por %p84, %p85
    %s88 = sadd.s32 %s87, 1
    %p91 = scmp.eq.s32.totalorder %s11, 1
    %p92 = scmp.ne.s32.totalorder %s87, %s89
    %p93 = scmp.eq.s32.totalorder %s11, 0
    %p94 = por %p92, %p93
    %p95 = scmp.ne.s32.totalorder %s87, %s89
    %p96 = scmp.eq.s32.totalorder %s16, 1
    %p97 = por %p95, %p96
    %p98 = scmp.ne.s32.totalorder %s89, %s90
    %p99 = scmp.eq.s32.totalorder %s16, 0
    %p100 = por %p98, %p99
    %p101 = scmp.ne.s32.totalorder %s89, %s90
    %p102 = scmp.eq.s32.totalorder %s17, 1
    %p103 = por %p101, %p102
    %p105 = scmp.ne.s32.totalorder %s90, %s104
    %p106 = scmp.eq.s32.totalorder %s17, 0
    %p107 = por %p105, %p106
    %s109 = sadd.s32 %s108, 1
    %p112 = scmp.eq.s32.totalorder %s11, 1
    %p113 = scmp.ne.s32.totalorder %s108, %s110
    %p114 = scmp.eq.s32.totalorder %s11, 0
    %p115 = por %p113, %p114
    %p116 = scmp.ne.s32.totalorder %s108, %s110
    %p117 = scmp.eq.s32.totalorder %s16, 1
    %p118 = por %p116, %p117
    %p119 = scmp.ne.s32.totalorder %s110, %s111
    %p120 = scmp.eq.s32.totalorder %s16, 0
    %p121 = por %p119, %p120
    %p122 = scmp.ne.s32.totalorder %s110, %s111
    %p123 = scmp.eq.s32.totalorder %s17, 1
    %p124 = por %p122, %p123
    %p126 = scmp.ne.s32.totalorder %s111, %s125
    %p127 = scmp.eq.s32.totalorder %s17, 0
    %p128 = por %p126, %p127
    %s129 = ssub.s32 %s11, %s18
    %p130 = scmp.eq.s32.totalorder %s129, 0
    %s132 = sadd.s32 %s131, 1
    %s133 = scalar_select %p130, %s131, %s132
    %p136 = pneg %p130
    %p137 = scmp.eq.s32.totalorder %s11, 1
    %p138 = por %p136, %p137
    %p139 = scmp.ne.s32.totalorder %s131, %s134
    %p140 = scmp.eq.s32.totalorder %s11, 0
    %p141 = por %p139, %p140
    %p142 = scmp.ne.s32.totalorder %s131, %s134
    %p143 = scmp.eq.s32.totalorder %s16, 1
    %p144 = por %p142, %p143
    %p145 = scmp.ne.s32.totalorder %s134, %s135
    %p146 = scmp.eq.s32.totalorder %s16, 0
    %p147 = por %p145, %p146
    %p148 = scmp.ne.s32.totalorder %s134, %s135
    %p149 = scmp.eq.s32.totalorder %s17, 1
    %p150 = por %p148, %p149
    %p152 = scmp.ne.s32.totalorder %s135, %s151
    %p153 = scmp.eq.s32.totalorder %s17, 0
    %p154 = por %p152, %p153
    %p155 = scmp.le.s32.totalorder 1, %s11
    %p156 = scmp.lt.s32.totalorder %s11, 3
    %p157 = pnand %p155, %p156
    %p158 = pneg %p157
    // Predicated region
    $region9: #{_lambda_.10} parent=5 // pred_check
      _
    $region10: #{_lambda_.10} parent=5 // pred_check_branch
      %160 = sbr.rel (%p157) target = $region12
    $region11: #{_lambda_.10} parent=5 // pred_region
      %s161 = ssub.s32 %s11, 1
      // Predicated region
      $region13: #{_lambda_.10} parent=11 // pred_check
        %p162 = pneg %p58
      $region14: #{_lambda_.10} parent=11 // pred_check_branch
        %164 = sbr.rel (%p162) target = $region16
      $region15: #{_lambda_.10} parent=11 // pred_region
        _
      $region16: #{_lambda_.10} parent=11 // pred_fallthru
        _
      // Predicated region
      $region17: #{_lambda_.10} parent=11 // pred_check
        %p165 = pneg %p79
      $region18: #{_lambda_.10} parent=11 // pred_check_branch
        %167 = sbr.rel (%p165) target = $region20
      $region19: #{_lambda_.10} parent=11 // pred_region
        _
      $region20: #{_lambda_.10} parent=11 // pred_fallthru
        _
      // Predicated region
      $region21: #{_lambda_.10} parent=11 // pred_check
        %p168 = pneg %p100
      $region22: #{_lambda_.10} parent=11 // pred_check_branch
        %170 = sbr.rel (%p168) target = $region24
      $region23: #{_lambda_.10} parent=11 // pred_region
        _
      $region24: #{_lambda_.10} parent=11 // pred_fallthru
        _
      // Predicated region
      $region25: #{_lambda_.10} parent=11 // pred_check
        %p171 = pneg %p121
      $region26: #{_lambda_.10} parent=11 // pred_check_branch
        %173 = sbr.rel (%p171) target = $region28
      $region27: #{_lambda_.10} parent=11 // pred_region
        _
      $region28: #{_lambda_.10} parent=11 // pred_fallthru
        _
    $region12: #{_lambda_.10} parent=5 // pred_fallthru
      _
    %p174 = scmp.lt.s32.totalorder %s11, 2
    // Predicated region
    $region29: #{_lambda_.10} parent=5 // pred_check
      %p175 = pneg %p174
    $region30: #{_lambda_.10} parent=5 // pred_check_branch
      %177 = sbr.rel (%p175) target = $region32
    $region31: #{_lambda_.10} parent=5 // pred_region
      // Predicated region
      $region33: #{_lambda_.10} parent=31 // pred_check
        %p178 = pneg %p31
      $region34: #{_lambda_.10} parent=31 // pred_check_branch
        %180 = sbr.rel (%p178) target = $region36
      $region35: #{_lambda_.10} parent=31 // pred_region
        %p181 = scmp.lt.s32.totalorder %s11, 1
        %s182 = scalar_select %p181, %s11, 1
        %s183 = smul.addr %s182, 8
        %s184 = scalar_lea.vmem %s0, %s183
      $region36: #{_lambda_.10} parent=31 // pred_fallthru
        _
    $region32: #{_lambda_.10} parent=5 // pred_fallthru
      _
    %p185 = scmp.le.s32.totalorder 1, %s11
    %p186 = scmp.lt.s32.totalorder %s11, 3
    %p187 = pnand %p185, %p186
    %p188 = pneg %p187
    // Predicated region
    $region37: #{_lambda_.10} parent=5 // pred_check
      _
    $region38: #{_lambda_.10} parent=5 // pred_check_branch
      %190 = sbr.rel (%p187) target = $region40
    $region39: #{_lambda_.10} parent=5 // pred_region
      %s191 = ssub.s32 %s11, 1
      %p192 = scmp.lt.s32.totalorder %s16, 1
      %s193 = scalar_select %p192, %s16, 1
      %s194 = smul.addr %s193, 8
      %s195 = scalar_lea.vmem %s0, %s194
      %p196 = pneg %p37
      %p197 = pneg %p34
      %p198 = pneg %p58
      %p199 = pneg %p55
      %p200 = pneg %p79
      %p201 = pneg %p76
      %p202 = pneg %p100
      %p203 = pneg %p97
      %p204 = pneg %p121
      %p205 = pneg %p118
      %p206 = pneg %p147
      %p207 = pneg %p144
      %p208 = scmp.lt.s32.totalorder %s16, 1
      %s209 = scalar_select %p208, %s16, 1
      %s210 = smul.addr %s209, 8
      %s211 = scalar_lea.vmem %s5, %s210
      %p212 = scmp.lt.s32.totalorder %s16, 1
      %s213 = scalar_select %p212, %s16, 1
      %s214 = smul.addr %s213, 8
      %s215 = scalar_lea.vmem %s0, %s214
      %p216 = scmp.lt.s32.totalorder %s16, 1
      %s217 = scalar_select %p216, %s16, 1
      %s218 = smul.addr %s217, 8
      %s219 = scalar_lea.vmem %s5, %s218
      %v221 = vld [vmem:[%s215] sm:$0x3f]
      %v222 = vld [vmem:[%s1] sm:$0x1]
      %v223 = vld [vmem:[%s2] sm:$0x1]
      %vm224 = vcmask 259072
      %v225 = vsel %vm224, %v221, 0.0
      %226 = vadd.xlane.f32.xlu0 %v225
      %v227 = vpop.xlane.xlu0 %226
      %v228 = vrcp.pop 32.0
      %v229 = vmul.f32 %v227, %v228
      %v230 = vsub.f32 %v221, %v229
      %v231 = vmul.f32 %v230, %v230
      %v232 = vsel %vm224, %v231, 0.0
      %233 = vadd.xlane.f32.xlu0 %v232
      %v234 = vpop.xlane.xlu0 %233
      %v235 = vmul.f32 %v234, %v228
      %v236 = vadd.f32 %v235, 1e-12
      %v237 = vrsqrt.pop %v236
      %v238 = vmul.f32 %v230, %v237
      %v240 = vlaneseq
      %v241 = vshrl.u32 %v240, 7
      %v242 = vsub.s32 0, %v241
      %v243 = vrot.slane %v222, %v242
      %v245 = vmul.f32 %v238, %v243
      %v247 = vlaneseq
      %v248 = vshrl.u32 %v247, 7
      %v249 = vsub.s32 0, %v248
      %v250 = vrot.slane %v223, %v249
      %v252 = vadd.f32 %v245, %v250
      %v253 = vpack.c.bf16 %v252, %v252
      %v254 = vld [vmem:[%s3] sm:$0xf]
      %v255 = vld [vmem:[%s3 + $0x4] sm:$0xf]
      %v256 = vld [vmem:[%s3 + $0x8] sm:$0xf]
      %v257 = vld [vmem:[%s3 + $0xc] sm:$0xf]
      %v258 = vld [vmem:[%s4] sm:$0x1]
      %v260 = vlaneseq
      %v261 = vshrl.u32 %v260, 7
      %v262 = vsub.s32 0, %v261
      %v263 = vrot.slane %v258, %v262
      %v269 = vunpack.c.l.b16 %v254
      %v270 = vunpack.c.l.b16 %v255
      %v271 = vunpack.c.l.b16 %v256
      %v272 = vunpack.c.l.b16 %v257
      %v273 = vpack.c.b16 %v270, %v269
      %v274 = vpack.c.b16 %v272, %v271
      %vm277 = vcmask 261120
      %v279 = vsel %vm277, %v253, 0
      %281 = vmatprep.subr.bf16.mxu0 0
      %282 = vmatpush1.bf16.msra.mxu0 %v273
      %283 = vmatprep.subr.bf16.mxu0 0
      %284 = vmatpush1.bf16.msra.mxu0 %v274
      %285 = vmatprep.subr.bf16.mxu0 0
      %286 = vmatpush1.bf16.msra.mxu0 0
      %287 = vmatprep.subr.bf16.mxu0 0
      %288 = vmatpush1.bf16.msra.mxu0 0
      %289 = vmatprep.subr.bf16.mxu0 0
      %290 = vmatpush1.bf16.msra.mxu0 0
      %291 = vmatprep.subr.bf16.mxu0 0
      %292 = vmatpush1.bf16.msra.mxu0 0
      %293 = vmatprep.subr.bf16.mxu0 0
      %294 = vmatpush1.bf16.msra.mxu0 0
      %295 = vmatprep.subr.bf16.mxu0 0
      %296 = vmatpush1.bf16.msra.mxu0 0
      %297 = vmatprep.subr.bf16.mxu0 0
      %298 = vmatpush1.bf16.msra.mxu0 0
      %299 = vmatprep.subr.bf16.mxu0 0
      %300 = vmatpush1.bf16.msra.mxu0 0
      %301 = vmatprep.subr.bf16.mxu0 0
      %302 = vmatpush1.bf16.msra.mxu0 0
      %303 = vmatprep.subr.bf16.mxu0 0
      %304 = vmatpush1.bf16.msra.mxu0 0
      %305 = vmatprep.subr.bf16.mxu0 0
      %306 = vmatpush1.bf16.msra.mxu0 0
      %307 = vmatprep.subr.bf16.mxu0 0
      %308 = vmatpush1.bf16.msra.mxu0 0
      %309 = vmatprep.subr.bf16.mxu0 0
      %310 = vmatpush1.bf16.msra.mxu0 0
      %311 = vmatprep.subr.bf16.mxu0 0
      %312 = vmatpush1.bf16.msra.mxu0 0
      %313 = vmatprep.mubr.bf16.mxu0 0
      %314 = vmatmul.mubr.bf16.gmra.mrb[0].mxu0 %v279
      %v315 = vpop.f32.mrb[0].mxu0
      %v316 = vadd.f32 %v263, %v315
      %v317 = vpop.f32.mrb[0].mxu0
      %v318 = vpop.f32.mrb[0].mxu0
      %v319 = vpop.f32.mrb[0].mxu0
      %320 = vdwg.mxu0
      %321 = vst.msk [vmem:[%s219] sm:$0x3f] %vm224, %v316
      %p322 = scmp.lt.s32.totalorder %s16, 1
      %s323 = scalar_select %p322, %s16, 1
      %s324 = smul.addr %s323, 8
      %s325 = scalar_lea.vmem %s5, %s324
      // Predicated region
      $region41: #{_lambda_.10} parent=39 // pred_check
        %p326 = pneg %p144
      $region42: #{_lambda_.10} parent=39 // pred_check_branch
        %328 = sbr.rel (%p326) target = $region44
      $region43: #{_lambda_.10} parent=39 // pred_region
        _
      $region44: #{_lambda_.10} parent=39 // pred_fallthru
        _
    $region40: #{_lambda_.10} parent=5 // pred_fallthru
      _
    %p329 = scmp.le.s32.totalorder 2, %s11
    // Predicated region
    $region45: #{_lambda_.10} parent=5 // pred_check
      %p330 = pneg %p329
    $region46: #{_lambda_.10} parent=5 // pred_check_branch
      %332 = sbr.rel (%p330) target = $region48
    $region47: #{_lambda_.10} parent=5 // pred_region
      %s333 = ssub.s32 %s11, 2
      // Predicated region
      $region49: #{_lambda_.10} parent=47 // pred_check
        %p334 = pneg %p150
      $region50: #{_lambda_.10} parent=47 // pred_check_branch
        %336 = sbr.rel (%p334) target = $region52
      $region51: #{_lambda_.10} parent=47 // pred_region
        %p337 = scmp.lt.s32.totalorder %s17, 1
        %s338 = scalar_select %p337, %s17, 1
        %s339 = smul.addr %s338, 8
        %s340 = scalar_lea.vmem %s5, %s339
      $region52: #{_lambda_.10} parent=47 // pred_fallthru
        _
    $region48: #{_lambda_.10} parent=5 // pred_fallthru
      _
  $region6: #{_lambda_.10} parent=0 // loop_footer
    %s15 = sadd.s32 1, %s11
  $region7: #{_lambda_.10} parent=0 // loop_footer_branch
    %10 = sbr.rel target = $region3
  $region8: #{_lambda_.10} parent=0 // loop_exit
    _

// kernel: _lambda_.8
$region0: #{_lambda_.8}
  #allocation0 [shape = 'u32[]', space=smem, size = 0x4, offset = 0x4, fixed_abs, tag = 'smem constant byte address 0x4 - core index']
  #allocation1 [shape = 'u32[144,128]{1,0:T(1,128)}', space=vmem, size = 0x12000, scoped, tag = 'internal scratch']
  %s0 = inlined_call_operand.vmem [shape: f32[2,8,32], index: 0, kind: input, shape index: {}]
  %s1 = inlined_call_operand.vmem [shape: f32[1,32], index: 1, kind: input, shape index: {}, may-alias: {1,7}]
  %s2 = inlined_call_operand.vmem [shape: f32[1,32], index: 2, kind: input, shape index: {}, may-alias: {2,6,8,12}]
  %s3 = inlined_call_operand.vmem [shape: bf16[32,96], index: 3, kind: input, shape index: {}]
  %s4 = inlined_call_operand.vmem [shape: f32[1,96], index: 4, kind: input, shape index: {}]
  %s5 = inlined_call_operand.vmem [shape: bf16[32,32], index: 5, kind: input, shape index: {}]
  %s6 = inlined_call_operand.vmem [shape: f32[1,32], index: 6, kind: input, shape index: {}, may-alias: {2,6,8,12}]
  %s7 = inlined_call_operand.vmem [shape: f32[1,32], index: 7, kind: input, shape index: {}, may-alias: {1,7}]
  %s8 = inlined_call_operand.vmem [shape: f32[1,32], index: 8, kind: input, shape index: {}, may-alias: {2,6,8,12}]
  %s9 = inlined_call_operand.vmem [shape: bf16[32,64], index: 9, kind: input, shape index: {}]
  %s10 = inlined_call_operand.vmem [shape: f32[1,64], index: 10, kind: input, shape index: {}]
  %s11 = inlined_call_operand.vmem [shape: bf16[64,32], index: 11, kind: input, shape index: {}]
  %s12 = inlined_call_operand.vmem [shape: f32[1,32], index: 12, kind: input, shape index: {}, may-alias: {2,6,8,12}]
  %s13 = inlined_call_operand.vmem [shape: f32[2,8,32], index: 13, kind: output, shape index: {}]
  %s14 = sld [smem:[#allocation0]]
  $region85: #{_lambda_.8} parent=0
    _
  %s16 = ssub.s32 1, %s14
  %s17 = scalar_select 0, %s16, %s14
  loop: start=0, step=1, limit=4
  $region2: #{_lambda_.8} parent=0 // loop_pre_header
    _
  $region3: #{_lambda_.8} parent=0 // loop_header
    %s19 = sphi 0, %s23
    %p20 = scmp.ge.s32.totalorder %s19, 4
    %s29 = sphi 0, %s31
    %s32 = sphi 0, %s29
    %s33 = sphi 0, %s32
    %s49 = sphi 0, %s33
    %s53 = sphi 0, %s53
    %s55 = sphi 0, %s53
    %s56 = sphi 0, %s55
    %s70 = sphi 0, %s56
    %s74 = sphi 0, %s74
    %s76 = sphi 0, %s74
    %s77 = sphi 0, %s76
    %s91 = sphi 0, %s77
    %s95 = sphi 0, %s95
    %s97 = sphi 0, %s95
    %s98 = sphi 0, %s97
    %s112 = sphi 0, %s98
    %s116 = sphi 0, %s116
    %s118 = sphi 0, %s116
    %s119 = sphi 0, %s118
    %s133 = sphi 0, %s119
    %s137 = sphi 0, %s137
    %s139 = sphi 0, %s137
    %s140 = sphi 0, %s139
    %s154 = sphi 0, %s140
    %s158 = sphi 0, %s158
    %s160 = sphi 0, %s158
    %s161 = sphi 0, %s160
    %s175 = sphi 0, %s161
    %s179 = sphi 0, %s179
    %s181 = sphi 0, %s179
    %s182 = sphi 0, %s181
    %s196 = sphi 0, %s182
    %s200 = sphi 0, %s200
    %s202 = sphi 0, %s200
    %s203 = sphi 0, %s202
    %s217 = sphi 0, %s203
    %s221 = sphi 0, %s221
    %s223 = sphi 0, %s221
    %s224 = sphi 0, %s223
    %s238 = sphi 0, %s224
    %s242 = sphi 0, %s242
    %s244 = sphi 0, %s242
    %s245 = sphi 0, %s244
    %s259 = sphi 0, %s245
    %s263 = sphi 0, %s263
    %s265 = sphi 0, %s263
    %s266 = sphi 0, %s265
    %s280 = sphi 0, %s266
    %s284 = sphi 0, %s284
    %s286 = sphi 0, %s284
    %s287 = sphi 0, %s286
    %s301 = sphi 0, %s287
    %s307 = sphi 0, %s309
    %s310 = sphi 0, %s307
    %s311 = sphi 0, %s310
    %s327 = sphi 0, %s311
  $region4: #{_lambda_.8} parent=0 // loop_header_branch
    %22 = sbr.rel (%p20) target = $region8
  $region5: #{_lambda_.8} parent=0 // loop_body
    %s24 = ssub.s32 %s19, 1
    %s25 = ssub.s32 %s19, 2
    %s26 = sadd.s32 %s19, 1
    %s27 = ssub.s32 %s19, %s26
    %p28 = scmp.eq.s32.totalorder %s27, 0
    %s30 = sadd.s32 %s29, 1
    %s31 = scalar_select %p28, %s29, %s30
    %p34 = pneg %p28
    %p35 = scmp.eq.s32.totalorder %s19, 1
    %p36 = por %p34, %p35
    %p37 = scmp.ne.s32.totalorder %s29, %s32
    %p38 = scmp.eq.s32.totalorder %s19, 0
    %p39 = por %p37, %p38
    %p40 = scmp.ne.s32.totalorder %s29, %s32
    %p41 = scmp.eq.s32.totalorder %s24, 1
    %p42 = por %p40, %p41
    %p43 = scmp.ne.s32.totalorder %s32, %s33
    %p44 = scmp.eq.s32.totalorder %s24, 0
    %p45 = por %p43, %p44
    %p46 = scmp.ne.s32.totalorder %s32, %s33
    %p47 = scmp.eq.s32.totalorder %s25, 1
    %p48 = por %p46, %p47
    %p50 = scmp.ne.s32.totalorder %s33, %s49
    %p51 = scmp.eq.s32.totalorder %s25, 0
    %p52 = por %p50, %p51
    %s54 = sadd.s32 %s53, 1
    %p57 = scmp.eq.s32.totalorder %s19, 1
    %p58 = scmp.ne.s32.totalorder %s53, %s55
    %p59 = scmp.eq.s32.totalorder %s19, 0
    %p60 = por %p58, %p59
    %p61 = scmp.ne.s32.totalorder %s53, %s55
    %p62 = scmp.eq.s32.totalorder %s24, 1
    %p63 = por %p61, %p62
    %p64 = scmp.ne.s32.totalorder %s55, %s56
    %p65 = scmp.eq.s32.totalorder %s24, 0
    %p66 = por %p64, %p65
    %p67 = scmp.ne.s32.totalorder %s55, %s56
    %p68 = scmp.eq.s32.totalorder %s25, 1
    %p69 = por %p67, %p68
    %p71 = scmp.ne.s32.totalorder %s56, %s70
    %p72 = scmp.eq.s32.totalorder %s25, 0
    %p73 = por %p71, %p72
    %s75 = sadd.s32 %s74, 1
    %p78 = scmp.eq.s32.totalorder %s19, 1
    %p79 = scmp.ne.s32.totalorder %s74, %s76
    %p80 = scmp.eq.s32.totalorder %s19, 0
    %p81 = por %p79, %p80
    %p82 = scmp.ne.s32.totalorder %s74, %s76
    %p83 = scmp.eq.s32.totalorder %s24, 1
    %p84 = por %p82, %p83
    %p85 = scmp.ne.s32.totalorder %s76, %s77
    %p86 = scmp.eq.s32.totalorder %s24, 0
    %p87 = por %p85, %p86
    %p88 = scmp.ne.s32.totalorder %s76, %s77
    %p89 = scmp.eq.s32.totalorder %s25, 1
    %p90 = por %p88, %p89
    %p92 = scmp.ne.s32.totalorder %s77, %s91
    %p93 = scmp.eq.s32.totalorder %s25, 0
    %p94 = por %p92, %p93
    %s96 = sadd.s32 %s95, 1
    %p99 = scmp.eq.s32.totalorder %s19, 1
    %p100 = scmp.ne.s32.totalorder %s95, %s97
    %p101 = scmp.eq.s32.totalorder %s19, 0
    %p102 = por %p100, %p101
    %p103 = scmp.ne.s32.totalorder %s95, %s97
    %p104 = scmp.eq.s32.totalorder %s24, 1
    %p105 = por %p103, %p104
    %p106 = scmp.ne.s32.totalorder %s97, %s98
    %p107 = scmp.eq.s32.totalorder %s24, 0
    %p108 = por %p106, %p107
    %p109 = scmp.ne.s32.totalorder %s97, %s98
    %p110 = scmp.eq.s32.totalorder %s25, 1
    %p111 = por %p109, %p110
    %p113 = scmp.ne.s32.totalorder %s98, %s112
    %p114 = scmp.eq.s32.totalorder %s25, 0
    %p115 = por %p113, %p114
    %s117 = sadd.s32 %s116, 1
    %p120 = scmp.eq.s32.totalorder %s19, 1
    %p121 = scmp.ne.s32.totalorder %s116, %s118
    %p122 = scmp.eq.s32.totalorder %s19, 0
    %p123 = por %p121, %p122
    %p124 = scmp.ne.s32.totalorder %s116, %s118
    %p125 = scmp.eq.s32.totalorder %s24, 1
    %p126 = por %p124, %p125
    %p127 = scmp.ne.s32.totalorder %s118, %s119
    %p128 = scmp.eq.s32.totalorder %s24, 0
    %p129 = por %p127, %p128
    %p130 = scmp.ne.s32.totalorder %s118, %s119
    %p131 = scmp.eq.s32.totalorder %s25, 1
    %p132 = por %p130, %p131
    %p134 = scmp.ne.s32.totalorder %s119, %s133
    %p135 = scmp.eq.s32.totalorder %s25, 0
    %p136 = por %p134, %p135
    %s138 = sadd.s32 %s137, 1
    %p141 = scmp.eq.s32.totalorder %s19, 1
    %p142 = scmp.ne.s32.totalorder %s137, %s139
    %p143 = scmp.eq.s32.totalorder %s19, 0
    %p144 = por %p142, %p143
    %p145 = scmp.ne.s32.totalorder %s137, %s139
    %p146 = scmp.eq.s32.totalorder %s24, 1
    %p147 = por %p145, %p146
    %p148 = scmp.ne.s32.totalorder %s139, %s140
    %p149 = scmp.eq.s32.totalorder %s24, 0
    %p150 = por %p148, %p149
    %p151 = scmp.ne.s32.totalorder %s139, %s140
    %p152 = scmp.eq.s32.totalorder %s25, 1
    %p153 = por %p151, %p152
    %p155 = scmp.ne.s32.totalorder %s140, %s154
    %p156 = scmp.eq.s32.totalorder %s25, 0
    %p157 = por %p155, %p156
    %s159 = sadd.s32 %s158, 1
    %p162 = scmp.eq.s32.totalorder %s19, 1
    %p163 = scmp.ne.s32.totalorder %s158, %s160
    %p164 = scmp.eq.s32.totalorder %s19, 0
    %p165 = por %p163, %p164
    %p166 = scmp.ne.s32.totalorder %s158, %s160
    %p167 = scmp.eq.s32.totalorder %s24, 1
    %p168 = por %p166, %p167
    %p169 = scmp.ne.s32.totalorder %s160, %s161
    %p170 = scmp.eq.s32.totalorder %s24, 0
    %p171 = por %p169, %p170
    %p172 = scmp.ne.s32.totalorder %s160, %s161
    %p173 = scmp.eq.s32.totalorder %s25, 1
    %p174 = por %p172, %p173
    %p176 = scmp.ne.s32.totalorder %s161, %s175
    %p177 = scmp.eq.s32.totalorder %s25, 0
    %p178 = por %p176, %p177
    %s180 = sadd.s32 %s179, 1
    %p183 = scmp.eq.s32.totalorder %s19, 1
    %p184 = scmp.ne.s32.totalorder %s179, %s181
    %p185 = scmp.eq.s32.totalorder %s19, 0
    %p186 = por %p184, %p185
    %p187 = scmp.ne.s32.totalorder %s179, %s181
    %p188 = scmp.eq.s32.totalorder %s24, 1
    %p189 = por %p187, %p188
    %p190 = scmp.ne.s32.totalorder %s181, %s182
    %p191 = scmp.eq.s32.totalorder %s24, 0
    %p192 = por %p190, %p191
    %p193 = scmp.ne.s32.totalorder %s181, %s182
    %p194 = scmp.eq.s32.totalorder %s25, 1
    %p195 = por %p193, %p194
    %p197 = scmp.ne.s32.totalorder %s182, %s196
    %p198 = scmp.eq.s32.totalorder %s25, 0
    %p199 = por %p197, %p198
    %s201 = sadd.s32 %s200, 1
    %p204 = scmp.eq.s32.totalorder %s19, 1
    %p205 = scmp.ne.s32.totalorder %s200, %s202
    %p206 = scmp.eq.s32.totalorder %s19, 0
    %p207 = por %p205, %p206
    %p208 = scmp.ne.s32.totalorder %s200, %s202
    %p209 = scmp.eq.s32.totalorder %s24, 1
    %p210 = por %p208, %p209
    %p211 = scmp.ne.s32.totalorder %s202, %s203
    %p212 = scmp.eq.s32.totalorder %s24, 0
    %p213 = por %p211, %p212
    %p214 = scmp.ne.s32.totalorder %s202, %s203
    %p215 = scmp.eq.s32.totalorder %s25, 1
    %p216 = por %p214, %p215
    %p218 = scmp.ne.s32.totalorder %s203, %s217
    %p219 = scmp.eq.s32.totalorder %s25, 0
    %p220 = por %p218, %p219
    %s222 = sadd.s32 %s221, 1
    %p225 = scmp.eq.s32.totalorder %s19, 1
    %p226 = scmp.ne.s32.totalorder %s221, %s223
    %p227 = scmp.eq.s32.totalorder %s19, 0
    %p228 = por %p226, %p227
    %p229 = scmp.ne.s32.totalorder %s221, %s223
    %p230 = scmp.eq.s32.totalorder %s24, 1
    %p231 = por %p229, %p230
    %p232 = scmp.ne.s32.totalorder %s223, %s224
    %p233 = scmp.eq.s32.totalorder %s24, 0
    %p234 = por %p232, %p233
    %p235 = scmp.ne.s32.totalorder %s223, %s224
    %p236 = scmp.eq.s32.totalorder %s25, 1
    %p237 = por %p235, %p236
    %p239 = scmp.ne.s32.totalorder %s224, %s238
    %p240 = scmp.eq.s32.totalorder %s25, 0
    %p241 = por %p239, %p240
    %s243 = sadd.s32 %s242, 1
    %p246 = scmp.eq.s32.totalorder %s19, 1
    %p247 = scmp.ne.s32.totalorder %s242, %s244
    %p248 = scmp.eq.s32.totalorder %s19, 0
    %p249 = por %p247, %p248
    %p250 = scmp.ne.s32.totalorder %s242, %s244
    %p251 = scmp.eq.s32.totalorder %s24, 1
    %p252 = por %p250, %p251
    %p253 = scmp.ne.s32.totalorder %s244, %s245
    %p254 = scmp.eq.s32.totalorder %s24, 0
    %p255 = por %p253, %p254
    %p256 = scmp.ne.s32.totalorder %s244, %s245
    %p257 = scmp.eq.s32.totalorder %s25, 1
    %p258 = por %p256, %p257
    %p260 = scmp.ne.s32.totalorder %s245, %s259
    %p261 = scmp.eq.s32.totalorder %s25, 0
    %p262 = por %p260, %p261
    %s264 = sadd.s32 %s263, 1
    %p267 = scmp.eq.s32.totalorder %s19, 1
    %p268 = scmp.ne.s32.totalorder %s263, %s265
    %p269 = scmp.eq.s32.totalorder %s19, 0
    %p270 = por %p268, %p269
    %p271 = scmp.ne.s32.totalorder %s263, %s265
    %p272 = scmp.eq.s32.totalorder %s24, 1
    %p273 = por %p271, %p272
    %p274 = scmp.ne.s32.totalorder %s265, %s266
    %p275 = scmp.eq.s32.totalorder %s24, 0
    %p276 = por %p274, %p275
    %p277 = scmp.ne.s32.totalorder %s265, %s266
    %p278 = scmp.eq.s32.totalorder %s25, 1
    %p279 = por %p277, %p278
    %p281 = scmp.ne.s32.totalorder %s266, %s280
    %p282 = scmp.eq.s32.totalorder %s25, 0
    %p283 = por %p281, %p282
    %s285 = sadd.s32 %s284, 1
    %p288 = scmp.eq.s32.totalorder %s19, 1
    %p289 = scmp.ne.s32.totalorder %s284, %s286
    %p290 = scmp.eq.s32.totalorder %s19, 0
    %p291 = por %p289, %p290
    %p292 = scmp.ne.s32.totalorder %s284, %s286
    %p293 = scmp.eq.s32.totalorder %s24, 1
    %p294 = por %p292, %p293
    %p295 = scmp.ne.s32.totalorder %s286, %s287
    %p296 = scmp.eq.s32.totalorder %s24, 0
    %p297 = por %p295, %p296
    %p298 = scmp.ne.s32.totalorder %s286, %s287
    %p299 = scmp.eq.s32.totalorder %s25, 1
    %p300 = por %p298, %p299
    %p302 = scmp.ne.s32.totalorder %s287, %s301
    %p303 = scmp.eq.s32.totalorder %s25, 0
    %p304 = por %p302, %p303
    %s305 = ssub.s32 %s19, %s26
    %p306 = scmp.eq.s32.totalorder %s305, 0
    %s308 = sadd.s32 %s307, 1
    %s309 = scalar_select %p306, %s307, %s308
    %p312 = pneg %p306
    %p313 = scmp.eq.s32.totalorder %s19, 1
    %p314 = por %p312, %p313
    %p315 = scmp.ne.s32.totalorder %s307, %s310
    %p316 = scmp.eq.s32.totalorder %s19, 0
    %p317 = por %p315, %p316
    %p318 = scmp.ne.s32.totalorder %s307, %s310
    %p319 = scmp.eq.s32.totalorder %s24, 1
    %p320 = por %p318, %p319
    %p321 = scmp.ne.s32.totalorder %s310, %s311
    %p322 = scmp.eq.s32.totalorder %s24, 0
    %p323 = por %p321, %p322
    %p324 = scmp.ne.s32.totalorder %s310, %s311
    %p325 = scmp.eq.s32.totalorder %s25, 1
    %p326 = por %p324, %p325
    %p328 = scmp.ne.s32.totalorder %s311, %s327
    %p329 = scmp.eq.s32.totalorder %s25, 0
    %p330 = por %p328, %p329
    %p331 = scmp.le.s32.totalorder 1, %s19
    %p332 = scmp.lt.s32.totalorder %s19, 3
    %p333 = pnand %p331, %p332
    %p334 = pneg %p333
    // Predicated region
    $region9: #{_lambda_.8} parent=5 // pred_check
      _
    $region10: #{_lambda_.8} parent=5 // pred_check_branch
      %336 = sbr.rel (%p333) target = $region12
    $region11: #{_lambda_.8} parent=5 // pred_region
      %s337 = ssub.s32 %s19, 1
      // Predicated region
      $region13: #{_lambda_.8} parent=11 // pred_check
        %p338 = pneg %p66
      $region14: #{_lambda_.8} parent=11 // pred_check_branch
        %340 = sbr.rel (%p338) target = $region16
      $region15: #{_lambda_.8} parent=11 // pred_region
        _
      $region16: #{_lambda_.8} parent=11 // pred_fallthru
        _
      // Predicated region
      $region17: #{_lambda_.8} parent=11 // pred_check
        %p341 = pneg %p87
      $region18: #{_lambda_.8} parent=11 // pred_check_branch
        %343 = sbr.rel (%p341) target = $region20
      $region19: #{_lambda_.8} parent=11 // pred_region
        _
      $region20: #{_lambda_.8} parent=11 // pred_fallthru
        _
      // Predicated region
      $region21: #{_lambda_.8} parent=11 // pred_check
        %p344 = pneg %p108
      $region22: #{_lambda_.8} parent=11 // pred_check_branch
        %346 = sbr.rel (%p344) target = $region24
      $region23: #{_lambda_.8} parent=11 // pred_region
        _
      $region24: #{_lambda_.8} parent=11 // pred_fallthru
        _
      // Predicated region
      $region25: #{_lambda_.8} parent=11 // pred_check
        %p347 = pneg %p129
      $region26: #{_lambda_.8} parent=11 // pred_check_branch
        %349 = sbr.rel (%p347) target = $region28
      $region27: #{_lambda_.8} parent=11 // pred_region
        _
      $region28: #{_lambda_.8} parent=11 // pred_fallthru
        _
      // Predicated region
      $region29: #{_lambda_.8} parent=11 // pred_check
        %p350 = pneg %p150
      $region30: #{_lambda_.8} parent=11 // pred_check_branch
        %352 = sbr.rel (%p350) target = $region32
      $region31: #{_lambda_.8} parent=11 // pred_region
        _
      $region32: #{_lambda_.8} parent=11 // pred_fallthru
        _
      // Predicated region
      $region33: #{_lambda_.8} parent=11 // pred_check
        %p353 = pneg %p171
      $region34: #{_lambda_.8} parent=11 // pred_check_branch
        %355 = sbr.rel (%p353) target = $region36
      $region35: #{_lambda_.8} parent=11 // pred_region
        _
      $region36: #{_lambda_.8} parent=11 // pred_fallthru
        _
      // Predicated region
      $region37: #{_lambda_.8} parent=11 // pred_check
        %p356 = pneg %p192
      $region38: #{_lambda_.8} parent=11 // pred_check_branch
        %358 = sbr.rel (%p356) target = $region40
      $region39: #{_lambda_.8} parent=11 // pred_region
        _
      $region40: #{_lambda_.8} parent=11 // pred_fallthru
        _
      // Predicated region
      $region41: #{_lambda_.8} parent=11 // pred_check
        %p359 = pneg %p213
      $region42: #{_lambda_.8} parent=11 // pred_check_branch
        %361 = sbr.rel (%p359) target = $region44
      $region43: #{_lambda_.8} parent=11 // pred_region
        _
      $region44: #{_lambda_.8} parent=11 // pred_fallthru
        _
      // Predicated region
      $region45: #{_lambda_.8} parent=11 // pred_check
        %p362 = pneg %p234
      $region46: #{_lambda_.8} parent=11 // pred_check_branch
        %364 = sbr.rel (%p362) target = $region48
      $region47: #{_lambda_.8} parent=11 // pred_region
        _
      $region48: #{_lambda_.8} parent=11 // pred_fallthru
        _
      // Predicated region
      $region49: #{_lambda_.8} parent=11 // pred_check
        %p365 = pneg %p255
      $region50: #{_lambda_.8} parent=11 // pred_check_branch
        %367 = sbr.rel (%p365) target = $region52
      $region51: #{_lambda_.8} parent=11 // pred_region
        _
      $region52: #{_lambda_.8} parent=11 // pred_fallthru
        _
      // Predicated region
      $region53: #{_lambda_.8} parent=11 // pred_check
        %p368 = pneg %p276
      $region54: #{_lambda_.8} parent=11 // pred_check_branch
        %370 = sbr.rel (%p368) target = $region56
      $region55: #{_lambda_.8} parent=11 // pred_region
        _
      $region56: #{_lambda_.8} parent=11 // pred_fallthru
        _
      // Predicated region
      $region57: #{_lambda_.8} parent=11 // pred_check
        %p371 = pneg %p297
      $region58: #{_lambda_.8} parent=11 // pred_check_branch
        %373 = sbr.rel (%p371) target = $region60
      $region59: #{_lambda_.8} parent=11 // pred_region
        _
      $region60: #{_lambda_.8} parent=11 // pred_fallthru
        _
    $region12: #{_lambda_.8} parent=5 // pred_fallthru
      _
    %p374 = scmp.lt.s32.totalorder %s19, 2
    // Predicated region
    $region61: #{_lambda_.8} parent=5 // pred_check
      %p375 = pneg %p374
    $region62: #{_lambda_.8} parent=5 // pred_check_branch
      %377 = sbr.rel (%p375) target = $region64
    $region63: #{_lambda_.8} parent=5 // pred_region
      // Predicated region
      $region65: #{_lambda_.8} parent=63 // pred_check
        %p378 = pneg %p39
      $region66: #{_lambda_.8} parent=63 // pred_check_branch
        %380 = sbr.rel (%p378) target = $region68
      $region67: #{_lambda_.8} parent=63 // pred_region
        %p381 = scmp.lt.s32.totalorder %s19, 1
        %s382 = scalar_select %p381, %s19, 1
        %s383 = smul.addr %s382, 8
        %s384 = scalar_lea.vmem %s0, %s383
      $region68: #{_lambda_.8} parent=63 // pred_fallthru
        _
    $region64: #{_lambda_.8} parent=5 // pred_fallthru
      _
    %p385 = scmp.le.s32.totalorder 1, %s19
    %p386 = scmp.lt.s32.totalorder %s19, 3
    %p387 = pnand %p385, %p386
    %p388 = pneg %p387
    // Predicated region
    $region69: #{_lambda_.8} parent=5 // pred_check
      _
    $region70: #{_lambda_.8} parent=5 // pred_check_branch
      %390 = sbr.rel (%p387) target = $region72
    $region71: #{_lambda_.8} parent=5 // pred_region
      %s391 = ssub.s32 %s19, 1
      %p392 = scmp.lt.s32.totalorder %s24, 1
      %s393 = scalar_select %p392, %s24, 1
      %s394 = smul.addr %s393, 8
      %s395 = scalar_lea.vmem %s0, %s394
      %p396 = pneg %p45
      %p397 = pneg %p42
      %p398 = pneg %p66
      %p399 = pneg %p63
      %p400 = pneg %p87
      %p401 = pneg %p84
      %p402 = pneg %p108
      %p403 = pneg %p105
      %p404 = pneg %p129
      %p405 = pneg %p126
      %p406 = pneg %p150
      %p407 = pneg %p147
      %p408 = pneg %p171
      %p409 = pneg %p168
      %p410 = pneg %p192
      %p411 = pneg %p189
      %p412 = pneg %p213
      %p413 = pneg %p210
      %p414 = pneg %p234
      %p415 = pneg %p231
      %p416 = pneg %p255
      %p417 = pneg %p252
      %p418 = pneg %p276
      %p419 = pneg %p273
      %p420 = pneg %p297
      %p421 = pneg %p294
      %p422 = pneg %p323
      %p423 = pneg %p320
      %p424 = scmp.lt.s32.totalorder %s24, 1
      %s425 = scalar_select %p424, %s24, 1
      %s426 = smul.addr %s425, 8
      %s427 = scalar_lea.vmem %s13, %s426
      %p428 = scmp.lt.s32.totalorder %s24, 1
      %s429 = scalar_select %p428, %s24, 1
      %s430 = smul.addr %s429, 8
      %s431 = scalar_lea.vmem %s0, %s430
      %p432 = scmp.lt.s32.totalorder %s24, 1
      %s433 = scalar_select %p432, %s24, 1
      %s434 = smul.addr %s433, 8
      %s435 = scalar_lea.vmem %s13, %s434
      %v437 = vld [vmem:[%s431] sm:$0xff]
      %v438 = vld [vmem:[%s1] sm:$0x1]
      %v439 = vld [vmem:[%s2] sm:$0x1]
      %vm440 = vcmask 261120
      %v441 = vsel %vm440, %v437, 0.0
      %442 = vadd.xlane.f32.xlu0 %v441
      %v443 = vpop.xlane.xlu0 %442
      %v444 = vrcp.pop 32.0
      %v445 = vmul.f32 %v443, %v444
      %v446 = vsub.f32 %v437, %v445
      %v447 = vmul.f32 %v446, %v446
      %v448 = vsel %vm440, %v447, 0.0
      %449 = vadd.xlane.f32.xlu0 %v448
      %v450 = vpop.xlane.xlu0 %449
      %v451 = vmul.f32 %v450, %v444
      %v452 = vadd.f32 %v451, 1e-12
      %v453 = vrsqrt.pop %v452
      %v454 = vmul.f32 %v446, %v453
      %v456 = vlaneseq
      %v457 = vshrl.u32 %v456, 7
      %v458 = vsub.s32 0, %v457
      %v459 = vrot.slane %v438, %v458
      %v461 = vmul.f32 %v454, %v459
      %v463 = vlaneseq
      %v464 = vshrl.u32 %v463, 7
      %v465 = vsub.s32 0, %v464
      %v466 = vrot.slane %v439, %v465
      %v468 = vadd.f32 %v461, %v466
      %v469 = vpack.c.bf16 %v468, %v468
      %v470 = vld [vmem:[%s3] sm:$0xf]
      %v471 = vld [vmem:[%s3 + $0x4] sm:$0xf]
      %v472 = vld [vmem:[%s3 + $0x8] sm:$0xf]
      %v473 = vld [vmem:[%s3 + $0xc] sm:$0xf]
      %v474 = vld [vmem:[%s4] sm:$0x1]
      %v476 = vlaneseq
      %v477 = vshrl.u32 %v476, 7
      %v478 = vsub.s32 0, %v477
      %v479 = vrot.slane %v474, %v478
      %v485 = vunpack.c.l.b16 %v470
      %v486 = vunpack.c.l.b16 %v471
      %v487 = vunpack.c.l.b16 %v472
      %v488 = vunpack.c.l.b16 %v473
      %v489 = vpack.c.b16 %v486, %v485
      %v490 = vpack.c.b16 %v488, %v487
      %v494 = vsel %vm440, %v469, 0
      %496 = vmatprep.subr.bf16.mxu0 0
      %497 = vmatpush1.bf16.msra.mxu0 %v489
      %498 = vmatprep.subr.bf16.mxu0 0
      %499 = vmatpush1.bf16.msra.mxu0 %v490
      %500 = vmatprep.subr.bf16.mxu0 0
      %501 = vmatpush1.bf16.msra.mxu0 0
      %502 = vmatprep.subr.bf16.mxu0 0
      %503 = vmatpush1.bf16.msra.mxu0 0
      %504 = vmatprep.subr.bf16.mxu0 0
      %505 = vmatpush1.bf16.msra.mxu0 0
      %506 = vmatprep.subr.bf16.mxu0 0
      %507 = vmatpush1.bf16.msra.mxu0 0
      %508 = vmatprep.subr.bf16.mxu0 0
      %509 = vmatpush1.bf16.msra.mxu0 0
      %510 = vmatprep.subr.bf16.mxu0 0
      %511 = vmatpush1.bf16.msra.mxu0 0
      %512 = vmatprep.subr.bf16.mxu0 0
      %513 = vmatpush1.bf16.msra.mxu0 0
      %514 = vmatprep.subr.bf16.mxu0 0
      %515 = vmatpush1.bf16.msra.mxu0 0
      %516 = vmatprep.subr.bf16.mxu0 0
      %517 = vmatpush1.bf16.msra.mxu0 0
      %518 = vmatprep.subr.bf16.mxu0 0
      %519 = vmatpush1.bf16.msra.mxu0 0
      %520 = vmatprep.subr.bf16.mxu0 0
      %521 = vmatpush1.bf16.msra.mxu0 0
      %522 = vmatprep.subr.bf16.mxu0 0
      %523 = vmatpush1.bf16.msra.mxu0 0
      %524 = vmatprep.subr.bf16.mxu0 0
      %525 = vmatpush1.bf16.msra.mxu0 0
      %526 = vmatprep.subr.bf16.mxu0 0
      %527 = vmatpush1.bf16.msra.mxu0 0
      %528 = vmatprep.mubr.bf16.mxu0 0
      %529 = vmatmul.mubr.bf16.gmra.mrb[0].mxu0 %v494
      %v530 = vpop.f32.mrb[0].mxu0
      %v531 = vadd.f32 %v479, %v530
      %v532 = vpop.f32.mrb[0].mxu0
      %v533 = vpop.f32.mrb[0].mxu0
      %v534 = vpop.f32.mrb[0].mxu0
      %535 = vdwg.mxu0
      %v536 = vmul.f32 %v531, 0.35355338
      %538 = vrot.lane.b32.xlu0 %v536, 120
      %v539 = vpop.permute.xlu0 %538
      %541 = vrot.lane.b32.xlu0 %v536, 112
      %v542 = vpop.permute.xlu0 %541
      %544 = vrot.lane.b32.xlu0 %v536, 104
      %v545 = vpop.permute.xlu0 %544
      %548 = vrot.lane.b32.xlu0 %v531, 120
      %v549 = vpop.permute.xlu0 %548
      %551 = vrot.lane.b32.xlu0 %v531, 112
      %v552 = vpop.permute.xlu0 %551
      %554 = vrot.lane.b32.xlu0 %v531, 104
      %v555 = vpop.permute.xlu0 %554
      %v557 = vpack.c.bf16 %v536, %v536
      %v558 = vpack.c.bf16 %v539, %v539
      %v559 = vpack.c.bf16 %v542, %v542
      %v560 = vpack.c.bf16 %v545, %v545
      %v561 = vpack.c.bf16 %v531, %v531
      %v562 = vpack.c.bf16 %v549, %v549
      %v563 = vpack.c.bf16 %v552, %v552
      %v564 = vpack.c.bf16 %v555, %v555
      %566 = vrot.lane.b32.xlu0 %v561, 96
      %v567 = vpop.permute.xlu0 %566
      %vm568 = vcmask 64512
      %v570 = vsel %vm568, %v557, 0
      %v573 = vsel %vm568, %v567, 0
      %575 = vmatprep.subr.bf16.mxu0 0
      %576 = vmatpush1.bf16.xpose.msra.mxu0 %v573
      %577 = vmatprep.subr.bf16.mxu0 0
      %578 = vmatpush1.bf16.xpose.msra.mxu0 0
      %579 = vmatprep.subr.bf16.mxu0 0
      %580 = vmatpush1.bf16.xpose.msra.mxu0 0
      %581 = vmatprep.subr.bf16.mxu0 0
      %582 = vmatpush1.bf16.xpose.msra.mxu0 0
      %583 = vmatprep.subr.bf16.mxu0 0
      %584 = vmatpush1.bf16.xpose.msra.mxu0 0
      %585 = vmatprep.subr.bf16.mxu0 0
      %586 = vmatpush1.bf16.xpose.msra.mxu0 0
      %587 = vmatprep.subr.bf16.mxu0 0
      %588 = vmatpush1.bf16.xpose.msra.mxu0 0
      %589 = vmatprep.subr.bf16.mxu0 0
      %590 = vmatpush1.bf16.xpose.msra.mxu0 0
      %591 = vmatprep.subr.bf16.mxu0 0
      %592 = vmatpush1.bf16.xpose.msra.mxu0 0
      %593 = vmatprep.subr.bf16.mxu0 0
      %594 = vmatpush1.bf16.xpose.msra.mxu0 0
      %595 = vmatprep.subr.bf16.mxu0 0
      %596 = vmatpush1.bf16.xpose.msra.mxu0 0
      %597 = vmatprep.subr.bf16.mxu0 0
      %598 = vmatpush1.bf16.xpose.msra.mxu0 0
      %599 = vmatprep.subr.bf16.mxu0 0
      %600 = vmatpush1.bf16.xpose.msra.mxu0 0
      %601 = vmatprep.subr.bf16.mxu0 0
      %602 = vmatpush1.bf16.xpose.msra.mxu0 0
      %603 = vmatprep.subr.bf16.mxu0 0
      %604 = vmatpush1.bf16.xpose.msra.mxu0 0
      %605 = vmatprep.subr.bf16.mxu0 0
      %606 = vmatpush1.bf16.xpose.msra.mxu0 0
      %607 = vmatprep.mubr.bf16.mxu0 0
      %608 = vmatmul.mubr.bf16.gmra.mrb[0].mxu0 %v570
      %v609 = vpop.f32.mrb[0].mxu0
      %v610 = vadd.f32 0.0, %v609
      %v611 = vpop.f32.mrb[0].mxu0
      %v612 = vpop.f32.mrb[0].mxu0
      %v613 = vpop.f32.mrb[0].mxu0
      %614 = vdwg.mxu0
      %616 = vrot.lane.b32.xlu0 %v562, 96
      %v617 = vpop.permute.xlu0 %616
      %v619 = vsel %vm568, %v558, 0
      %v622 = vsel %vm568, %v617, 0
      %624 = vmatprep.subr.bf16.mxu0 0
      %625 = vmatpush1.bf16.xpose.msra.mxu0 %v622
      %626 = vmatprep.subr.bf16.mxu0 0
      %627 = vmatpush1.bf16.xpose.msra.mxu0 0
      %628 = vmatprep.subr.bf16.mxu0 0
      %629 = vmatpush1.bf16.xpose.msra.mxu0 0
      %630 = vmatprep.subr.bf16.mxu0 0
      %631 = vmatpush1.bf16.xpose.msra.mxu0 0
      %632 = vmatprep.subr.bf16.mxu0 0
      %633 = vmatpush1.bf16.xpose.msra.mxu0 0
      %634 = vmatprep.subr.bf16.mxu0 0
      %635 = vmatpush1.bf16.xpose.msra.mxu0 0
      %636 = vmatprep.subr.bf16.mxu0 0
      %637 = vmatpush1.bf16.xpose.msra.mxu0 0
      %638 = vmatprep.subr.bf16.mxu0 0
      %639 = vmatpush1.bf16.xpose.msra.mxu0 0
      %640 = vmatprep.subr.bf16.mxu0 0
      %641 = vmatpush1.bf16.xpose.msra.mxu0 0
      %642 = vmatprep.subr.bf16.mxu0 0
      %643 = vmatpush1.bf16.xpose.msra.mxu0 0
      %644 = vmatprep.subr.bf16.mxu0 0
      %645 = vmatpush1.bf16.xpose.msra.mxu0 0
      %646 = vmatprep.subr.bf16.mxu0 0
      %647 = vmatpush1.bf16.xpose.msra.mxu0 0
      %648 = vmatprep.subr.bf16.mxu0 0
      %649 = vmatpush1.bf16.xpose.msra.mxu0 0
      %650 = vmatprep.subr.bf16.mxu0 0
      %651 = vmatpush1.bf16.xpose.msra.mxu0 0
      %652 = vmatprep.subr.bf16.mxu0 0
      %653 = vmatpush1.bf16.xpose.msra.mxu0 0
      %654 = vmatprep.subr.bf16.mxu0 0
      %655 = vmatpush1.bf16.xpose.msra.mxu0 0
      %656 = vmatprep.mubr.bf16.mxu0 0
      %657 = vmatmul.mubr.bf16.gmra.mrb[0].mxu0 %v619
      %v658 = vpop.f32.mrb[0].mxu0
      %v659 = vadd.f32 0.0, %v658
      %v660 = vpop.f32.mrb[0].mxu0
      %v661 = vpop.f32.mrb[0].mxu0
      %v662 = vpop.f32.mrb[0].mxu0
      %663 = vdwg.mxu0
      %665 = vrot.lane.b32.xlu0 %v563, 96
      %v666 = vpop.permute.xlu0 %665
      %v668 = vsel %vm568, %v559, 0
      %v671 = vsel %vm568, %v666, 0
      %673 = vmatprep.subr.bf16.mxu0 0
      %674 = vmatpush1.bf16.xpose.msra.mxu0 %v671
      %675 = vmatprep.subr.bf16.mxu0 0
      %676 = vmatpush1.bf16.xpose.msra.mxu0 0
      %677 = vmatprep.subr.bf16.mxu0 0
      %678 = vmatpush1.bf16.xpose.msra.mxu0 0
      %679 = vmatprep.subr.bf16.mxu0 0
      %680 = vmatpush1.bf16.xpose.msra.mxu0 0
      %681 = vmatprep.subr.bf16.mxu0 0
      %682 = vmatpush1.bf16.xpose.msra.mxu0 0
      %683 = vmatprep.subr.bf16.mxu0 0
      %684 = vmatpush1.bf16.xpose.msra.mxu0 0
      %685 = vmatprep.subr.bf16.mxu0 0
      %686 = vmatpush1.bf16.xpose.msra.mxu0 0
      %687 = vmatprep.subr.bf16.mxu0 0
      %688 = vmatpush1.bf16.xpose.msra.mxu0 0
      %689 = vmatprep.subr.bf16.mxu0 0
      %690 = vmatpush1.bf16.xpose.msra.mxu0 0
      %691 = vmatprep.subr.bf16.mxu0 0
      %692 = vmatpush1.bf16.xpose.msra.mxu0 0
      %693 = vmatprep.subr.bf16.mxu0 0
      %694 = vmatpush1.bf16.xpose.msra.mxu0 0
      %695 = vmatprep.subr.bf16.mxu0 0
      %696 = vmatpush1.bf16.xpose.msra.mxu0 0
      %697 = vmatprep.subr.bf16.mxu0 0
      %698 = vmatpush1.bf16.xpose.msra.mxu0 0
      %699 = vmatprep.subr.bf16.mxu0 0
      %700 = vmatpush1.bf16.xpose.msra.mxu0 0
      %701 = vmatprep.subr.bf16.mxu0 0
      %702 = vmatpush1.bf16.xpose.msra.mxu0 0
      %703 = vmatprep.subr.bf16.mxu0 0
      %704 = vmatpush1.bf16.xpose.msra.mxu0 0
      %705 = vmatprep.mubr.bf16.mxu0 0
      %706 = vmatmul.mubr.bf16.gmra.mrb[0].mxu0 %v668
      %v707 = vpop.f32.mrb[0].mxu0
      %v708 = vadd.f32 0.0, %v707
      %v709 = vpop.f32.mrb[0].mxu0
      %v710 = vpop.f32.mrb[0].mxu0
      %v711 = vpop.f32.mrb[0].mxu0
      %712 = vdwg.mxu0
      %714 = vrot.lane.b32.xlu0 %v564, 96
      %v715 = vpop.permute.xlu0 %714
      %v717 = vsel %vm568, %v560, 0
      %v720 = vsel %vm568, %v715, 0
      %722 = vmatprep.subr.bf16.mxu0 0
      %723 = vmatpush1.bf16.xpose.msra.mxu0 %v720
      %724 = vmatprep.subr.bf16.mxu0 0
      %725 = vmatpush1.bf16.xpose.msra.mxu0 0
      %726 = vmatprep.subr.bf16.mxu0 0
      %727 = vmatpush1.bf16.xpose.msra.mxu0 0
      %728 = vmatprep.subr.bf16.mxu0 0
      %729 = vmatpush1.bf16.xpose.msra.mxu0 0
      %730 = vmatprep.subr.bf16.mxu0 0
      %731 = vmatpush1.bf16.xpose.msra.mxu0 0
      %732 = vmatprep.subr.bf16.mxu0 0
      %733 = vmatpush1.bf16.xpose.msra.mxu0 0
      %734 = vmatprep.subr.bf16.mxu0 0
      %735 = vmatpush1.bf16.xpose.msra.mxu0 0
      %736 = vmatprep.subr.bf16.mxu0 0
      %737 = vmatpush1.bf16.xpose.msra.mxu0 0
      %738 = vmatprep.subr.bf16.mxu0 0
      %739 = vmatpush1.bf16.xpose.msra.mxu0 0
      %740 = vmatprep.subr.bf16.mxu0 0
      %741 = vmatpush1.bf16.xpose.msra.mxu0 0
      %742 = vmatprep.subr.bf16.mxu0 0
      %743 = vmatpush1.bf16.xpose.msra.mxu0 0
      %744 = vmatprep.subr.bf16.mxu0 0
      %745 = vmatpush1.bf16.xpose.msra.mxu0 0
      %746 = vmatprep.subr.bf16.mxu0 0
      %747 = vmatpush1.bf16.xpose.msra.mxu0 0
      %748 = vmatprep.subr.bf16.mxu0 0
      %749 = vmatpush1.bf16.xpose.msra.mxu0 0
      %750 = vmatprep.subr.bf16.mxu0 0
      %751 = vmatpush1.bf16.xpose.msra.mxu0 0
      %752 = vmatprep.subr.bf16.mxu0 0
      %753 = vmatpush1.bf16.xpose.msra.mxu0 0
      %754 = vmatprep.mubr.bf16.mxu0 0
      %755 = vmatmul.mubr.bf16.gmra.mrb[0].mxu0 %v717
      %v756 = vpop.f32.mrb[0].mxu0
      %v757 = vadd.f32 0.0, %v756
      %v758 = vpop.f32.mrb[0].mxu0
      %v759 = vpop.f32.mrb[0].mxu0
      %v760 = vpop.f32.mrb[0].mxu0
      %761 = vdwg.mxu0
      %v762 = vsel %vm568, %v610, -inf
      %763 = vmax.xlane.f32.xlu0 %v762
      %v764 = vpop.xlane.xlu0 %763
      %v765 = vsel %vm568, %v659, -inf
      %766 = vmax.xlane.f32.xlu0 %v765
      %v767 = vpop.xlane.xlu0 %766
      %v768 = vsel %vm568, %v708, -inf
      %769 = vmax.xlane.f32.xlu0 %v768
      %v770 = vpop.xlane.xlu0 %769
      %v771 = vsel %vm568, %v757, -inf
      %772 = vmax.xlane.f32.xlu0 %v771
      %v773 = vpop.xlane.xlu0 %772
      %v774 = vsub.f32 %v610, %v764
      %v775 = vsub.f32 %v659, %v767
      %v776 = vsub.f32 %v708, %v770
      %v777 = vsub.f32 %v757, %v773
      %v778 = vmul.f32 %v774, 1.442695
      %v779 = vpow.pop %v778
      %v780 = vmul.f32 %v775, 1.442695
      %v781 = vpow.pop %v780
      %v782 = vmul.f32 %v776, 1.442695
      %v783 = vpow.pop %v782
      %v784 = vmul.f32 %v777, 1.442695
      %v785 = vpow.pop %v784
      %v786 = vsel %vm568, %v779, 0.0
      %787 = vadd.xlane.f32.xlu0 %v786
      %v788 = vpop.xlane.xlu0 %787
      %v789 = vsel %vm568, %v781, 0.0
      %790 = vadd.xlane.f32.xlu0 %v789
      %v791 = vpop.xlane.xlu0 %790
      %v792 = vsel %vm568, %v783, 0.0
      %793 = vadd.xlane.f32.xlu0 %v792
      %v794 = vpop.xlane.xlu0 %793
      %v795 = vsel %vm568, %v785, 0.0
      %796 = vadd.xlane.f32.xlu0 %v795
      %v797 = vpop.xlane.xlu0 %796
      %v798 = vrcp.pop %v788
      %v799 = vrcp.pop %v791
      %v800 = vrcp.pop %v794
      %v801 = vrcp.pop %v797
      %v802 = vmul.f32 %v779, %v798
      %v803 = vmul.f32 %v781, %v799
      %v804 = vmul.f32 %v783, %v800
      %v805 = vmul.f32 %v785, %v801
      %v806 = vpack.c.bf16 %v802, %v802
      %v807 = vpack.c.bf16 %v803, %v803
      %v808 = vpack.c.bf16 %v804, %v804
      %v809 = vpack.c.bf16 %v805, %v805
      %810 = vrot.lane.b32.xlu0 %v561, 64
      %v811 = vpop.permute.xlu0 %810
      %v813 = vsel %vm568, %v806, 0
      %vm815 = vcmask 1043456
      %v817 = vsel %vm815, %v811, 0
      %819 = vmatprep.subr.bf16.mxu0 0
      %820 = vmatpush1.bf16.msra.mxu0 %v817
      %821 = vmatprep.subr.bf16.mxu0 0
      %822 = vmatpush1.bf16.msra.mxu0 0
      %823 = vmatprep.subr.bf16.mxu0 0
      %824 = vmatpush1.bf16.msra.mxu0 0
      %825 = vmatprep.subr.bf16.mxu0 0
      %826 = vmatpush1.bf16.msra.mxu0 0
      %827 = vmatprep.subr.bf16.mxu0 0
      %828 = vmatpush1.bf16.msra.mxu0 0
      %829 = vmatprep.subr.bf16.mxu0 0
      %830 = vmatpush1.bf16.msra.mxu0 0
      %831 = vmatprep.subr.bf16.mxu0 0
      %832 = vmatpush1.bf16.msra.mxu0 0
      %833 = vmatprep.subr.bf16.mxu0 0
      %834 = vmatpush1.bf16.msra.mxu0 0
      %835 = vmatprep.subr.bf16.mxu0 0
      %836 = vmatpush1.bf16.msra.mxu0 0
      %837 = vmatprep.subr.bf16.mxu0 0
      %838 = vmatpush1.bf16.msra.mxu0 0
      %839 = vmatprep.subr.bf16.mxu0 0
      %840 = vmatpush1.bf16.msra.mxu0 0
      %841 = vmatprep.subr.bf16.mxu0 0
      %842 = vmatpush1.bf16.msra.mxu0 0
      %843 = vmatprep.subr.bf16.mxu0 0
      %844 = vmatpush1.bf16.msra.mxu0 0
      %845 = vmatprep.subr.bf16.mxu0 0
      %846 = vmatpush1.bf16.msra.mxu0 0
      %847 = vmatprep.subr.bf16.mxu0 0
      %848 = vmatpush1.bf16.msra.mxu0 0
      %849 = vmatprep.subr.bf16.mxu0 0
      %850 = vmatpush1.bf16.msra.mxu0 0
      %851 = vmatprep.mubr.bf16.mxu0 0
      %852 = vmatmul.mubr.bf16.gmra.mrb[0].mxu0 %v813
      %v853 = vpop.f32.mrb[0].mxu0
      %v854 = vadd.f32 0.0, %v853
      %v855 = vpop.f32.mrb[0].mxu0
      %v856 = vpop.f32.mrb[0].mxu0
      %v857 = vpop.f32.mrb[0].mxu0
      %858 = vdwg.mxu0
      %859 = vrot.lane.b32.xlu0 %v562, 64
      %v860 = vpop.permute.xlu0 %859
      %v862 = vsel %vm568, %v807, 0
      %v865 = vsel %vm815, %v860, 0
      %867 = vmatprep.subr.bf16.mxu0 0
      %868 = vmatpush1.bf16.msra.mxu0 %v865
      %869 = vmatprep.subr.bf16.mxu0 0
      %870 = vmatpush1.bf16.msra.mxu0 0
      %871 = vmatprep.subr.bf16.mxu0 0
      %872 = vmatpush1.bf16.msra.mxu0 0
      %873 = vmatprep.subr.bf16.mxu0 0
      %874 = vmatpush1.bf16.msra.mxu0 0
      %875 = vmatprep.subr.bf16.mxu0 0
      %876 = vmatpush1.bf16.msra.mxu0 0
      %877 = vmatprep.subr.bf16.mxu0 0
      %878 = vmatpush1.bf16.msra.mxu0 0
      %879 = vmatprep.subr.bf16.mxu0 0
      %880 = vmatpush1.bf16.msra.mxu0 0
      %881 = vmatprep.subr.bf16.mxu0 0
      %882 = vmatpush1.bf16.msra.mxu0 0
      %883 = vmatprep.subr.bf16.mxu0 0
      %884 = vmatpush1.bf16.msra.mxu0 0
      %885 = vmatprep.subr.bf16.mxu0 0
      %886 = vmatpush1.bf16.msra.mxu0 0
      %887 = vmatprep.subr.bf16.mxu0 0
      %888 = vmatpush1.bf16.msra.mxu0 0
      %889 = vmatprep.subr.bf16.mxu0 0
      %890 = vmatpush1.bf16.msra.mxu0 0
      %891 = vmatprep.subr.bf16.mxu0 0
      %892 = vmatpush1.bf16.msra.mxu0 0
      %893 = vmatprep.subr.bf16.mxu0 0
      %894 = vmatpush1.bf16.msra.mxu0 0
      %895 = vmatprep.subr.bf16.mxu0 0
      %896 = vmatpush1.bf16.msra.mxu0 0
      %897 = vmatprep.subr.bf16.mxu0 0
      %898 = vmatpush1.bf16.msra.mxu0 0
      %899 = vmatprep.mubr.bf16.mxu0 0
      %900 = vmatmul.mubr.bf16.gmra.mrb[0].mxu0 %v862
      %v901 = vpop.f32.mrb[0].mxu0
      %v902 = vadd.f32 0.0, %v901
      %v903 = vpop.f32.mrb[0].mxu0
      %v904 = vpop.f32.mrb[0].mxu0
      %v905 = vpop.f32.mrb[0].mxu0
      %906 = vdwg.mxu0
      %907 = vrot.lane.b32.xlu0 %v563, 64
      %v908 = vpop.permute.xlu0 %907
      %v910 = vsel %vm568, %v808, 0
      %v913 = vsel %vm815, %v908, 0
      %915 = vmatprep.subr.bf16.mxu0 0
      %916 = vmatpush1.bf16.msra.mxu0 %v913
      %917 = vmatprep.subr.bf16.mxu0 0
      %918 = vmatpush1.bf16.msra.mxu0 0
      %919 = vmatprep.subr.bf16.mxu0 0
      %920 = vmatpush1.bf16.msra.mxu0 0
      %921 = vmatprep.subr.bf16.mxu0 0
      %922 = vmatpush1.bf16.msra.mxu0 0
      %923 = vmatprep.subr.bf16.mxu0 0
      %924 = vmatpush1.bf16.msra.mxu0 0
      %925 = vmatprep.subr.bf16.mxu0 0
      %926 = vmatpush1.bf16.msra.mxu0 0
      %927 = vmatprep.subr.bf16.mxu0 0
      %928 = vmatpush1.bf16.msra.mxu0 0
      %929 = vmatprep.subr.bf16.mxu0 0
      %930 = vmatpush1.bf16.msra.mxu0 0
      %931 = vmatprep.subr.bf16.mxu0 0
      %932 = vmatpush1.bf16.msra.mxu0 0
      %933 = vmatprep.subr.bf16.mxu0 0
      %934 = vmatpush1.bf16.msra.mxu0 0
      %935 = vmatprep.subr.bf16.mxu0 0
      %936 = vmatpush1.bf16.msra.mxu0 0
      %937 = vmatprep.subr.bf16.mxu0 0
      %938 = vmatpush1.bf16.msra.mxu0 0
      %939 = vmatprep.subr.bf16.mxu0 0
      %940 = vmatpush1.bf16.msra.mxu0 0
      %941 = vmatprep.subr.bf16.mxu0 0
      %942 = vmatpush1.bf16.msra.mxu0 0
      %943 = vmatprep.subr.bf16.mxu0 0
      %944 = vmatpush1.bf16.msra.mxu0 0
      %945 = vmatprep.subr.bf16.mxu0 0
      %946 = vmatpush1.bf16.msra.mxu0 0
      %947 = vmatprep.mubr.bf16.mxu0 0
      %948 = vmatmul.mubr.bf16.gmra.mrb[0].mxu0 %v910
      %v949 = vpop.f32.mrb[0].mxu0
      %v950 = vadd.f32 0.0, %v949
      %v951 = vpop.f32.mrb[0].mxu0
      %v952 = vpop.f32.mrb[0].mxu0
      %v953 = vpop.f32.mrb[0].mxu0
      %954 = vdwg.mxu0
      %955 = vrot.lane.b32.xlu0 %v564, 64
      %v956 = vpop.permute.xlu0 %955
      %v958 = vsel %vm568, %v809, 0
      %v961 = vsel %vm815, %v956, 0
      %963 = vmatprep.subr.bf16.mxu0 0
      %964 = vmatpush1.bf16.msra.mxu0 %v961
      %965 = vmatprep.subr.bf16.mxu0 0
      %966 = vmatpush1.bf16.msra.mxu0 0
      %967 = vmatprep.subr.bf16.mxu0 0
      %968 = vmatpush1.bf16.msra.mxu0 0
      %969 = vmatprep.subr.bf16.mxu0 0
      %970 = vmatpush1.bf16.msra.mxu0 0
      %971 = vmatprep.subr.bf16.mxu0 0
      %972 = vmatpush1.bf16.msra.mxu0 0
      %973 = vmatprep.subr.bf16.mxu0 0
      %974 = vmatpush1.bf16.msra.mxu0 0
      %975 = vmatprep.subr.bf16.mxu0 0
      %976 = vmatpush1.bf16.msra.mxu0 0
      %977 = vmatprep.subr.bf16.mxu0 0
      %978 = vmatpush1.bf16.msra.mxu0 0
      %979 = vmatprep.subr.bf16.mxu0 0
      %980 = vmatpush1.bf16.msra.mxu0 0
      %981 = vmatprep.subr.bf16.mxu0 0
      %982 = vmatpush1.bf16.msra.mxu0 0
      %983 = vmatprep.subr.bf16.mxu0 0
      %984 = vmatpush1.bf16.msra.mxu0 0
      %985 = vmatprep.subr.bf16.mxu0 0
      %986 = vmatpush1.bf16.msra.mxu0 0
      %987 = vmatprep.subr.bf16.mxu0 0
      %988 = vmatpush1.bf16.msra.mxu0 0
      %989 = vmatprep.subr.bf16.mxu0 0
      %990 = vmatpush1.bf16.msra.mxu0 0
      %991 = vmatprep.subr.bf16.mxu0 0
      %992 = vmatpush1.bf16.msra.mxu0 0
      %993 = vmatprep.subr.bf16.mxu0 0
      %994 = vmatpush1.bf16.msra.mxu0 0
      %995 = vmatprep.mubr.bf16.mxu0 0
      %996 = vmatmul.mubr.bf16.gmra.mrb[0].mxu0 %v958
      %v997 = vpop.f32.mrb[0].mxu0
      %v998 = vadd.f32 0.0, %v997
      %v999 = vpop.f32.mrb[0].mxu0
      %v1000 = vpop.f32.mrb[0].mxu0
      %v1001 = vpop.f32.mrb[0].mxu0
      %1002 = vdwg.mxu0
      %1004 = vrot.lane.b32.xlu0 %v902, 8
      %v1005 = vpop.permute.xlu0 %1004
      %1008 = vrot.lane.b32.xlu0 %v950, 16
      %v1009 = vpop.permute.xlu0 %1008
      %1012 = vrot.lane.b32.xlu0 %v998, 24
      %v1013 = vpop.permute.xlu0 %1012
      %v1015 = vsel %vm568, %v854, %v1005
      %vm1016 = vcmask 130048
      %v1017 = vsel %vm1016, %v1015, %v1009
      %vm1018 = vcmask 195584
      %v1019 = vsel %vm1018, %v1017, %v1013
      %v1020 = vpack.c.bf16 %v1019, %v1019
      %v1021 = vld [vmem:[%s5] sm:$0xf]
      %v1022 = vld [vmem:[%s5 + $0x4] sm:$0xf]
      %v1023 = vld [vmem:[%s5 + $0x8] sm:$0xf]
      %v1024 = vld [vmem:[%s5 + $0xc] sm:$0xf]
      %v1025 = vld [vmem:[%s6] sm:$0x1]
      %v1027 = vlaneseq
      %v1028 = vshrl.u32 %v1027, 7
      %v1029 = vsub.s32 0, %v1028
      %v1030 = vrot.slane %v1025, %v1029
      %v1036 = vunpack.c.l.b16 %v1021
      %v1037 = vunpack.c.l.b16 %v1022
      %v1038 = vunpack.c.l.b16 %v1023
      %v1039 = vunpack.c.l.b16 %v1024
      %v1040 = vpack.c.b16 %v1037, %v1036
      %v1041 = vpack.c.b16 %v1039, %v1038
      %v1045 = vsel %vm440, %v1020, 0
      %1047 = vmatprep.subr.bf16.mxu0 0
      %1048 = vmatpush1.bf16.msra.mxu0 %v1040
      %1049 = vmatprep.subr.bf16.mxu0 0
      %1050 = vmatpush1.bf16.msra.mxu0 %v1041
      %1051 = vmatprep.subr.bf16.mxu0 0
      %1052 = vmatpush1.bf16.msra.mxu0 0
      %1053 = vmatprep.subr.bf16.mxu0 0
      %1054 = vmatpush1.bf16.msra.mxu0 0
      %1055 = vmatprep.subr.bf16.mxu0 0
      %1056 = vmatpush1.bf16.msra.mxu0 0
      %1057 = vmatprep.subr.bf16.mxu0 0
      %1058 = vmatpush1.bf16.msra.mxu0 0
      %1059 = vmatprep.subr.bf16.mxu0 0
      %1060 = vmatpush1.bf16.msra.mxu0 0
      %1061 = vmatprep.subr.bf16.mxu0 0
      %1062 = vmatpush1.bf16.msra.mxu0 0
      %1063 = vmatprep.subr.bf16.mxu0 0
      %1064 = vmatpush1.bf16.msra.mxu0 0
      %1065 = vmatprep.subr.bf16.mxu0 0
      %1066 = vmatpush1.bf16.msra.mxu0 0
      %1067 = vmatprep.subr.bf16.mxu0 0
      %1068 = vmatpush1.bf16.msra.mxu0 0
      %1069 = vmatprep.subr.bf16.mxu0 0
      %1070 = vmatpush1.bf16.msra.mxu0 0
      %1071 = vmatprep.subr.bf16.mxu0 0
      %1072 = vmatpush1.bf16.msra.mxu0 0
      %1073 = vmatprep.subr.bf16.mxu0 0
      %1074 = vmatpush1.bf16.msra.mxu0 0
      %1075 = vmatprep.subr.bf16.mxu0 0
      %1076 = vmatpush1.bf16.msra.mxu0 0
      %1077 = vmatprep.subr.bf16.mxu0 0
      %1078 = vmatpush1.bf16.msra.mxu0 0
      %1079 = vmatprep.mubr.bf16.mxu0 0
      %1080 = vmatmul.mubr.bf16.gmra.mrb[0].mxu0 %v1045
      %v1081 = vpop.f32.mrb[0].mxu0
      %v1082 = vadd.f32 %v1030, %v1081
      %v1083 = vpop.f32.mrb[0].mxu0
      %v1084 = vpop.f32.mrb[0].mxu0
      %v1085 = vpop.f32.mrb[0].mxu0
      %1086 = vdwg.mxu0
      %v1087 = vadd.f32 %v437, %v1082
      %v1088 = vld [vmem:[%s7] sm:$0x1]
      %v1089 = vld [vmem:[%s8] sm:$0x1]
      %v1090 = vsel %vm440, %v1087, 0.0
      %1091 = vadd.xlane.f32.xlu0 %v1090
      %v1092 = vpop.xlane.xlu0 %1091
      %v1093 = vmul.f32 %v1092, %v444
      %v1094 = vsub.f32 %v1087, %v1093
      %v1095 = vmul.f32 %v1094, %v1094
      %v1096 = vsel %vm440, %v1095, 0.0
      %1097 = vadd.xlane.f32.xlu0 %v1096
      %v1098 = vpop.xlane.xlu0 %1097
      %v1099 = vmul.f32 %v1098, %v444
      %v1100 = vadd.f32 %v1099, 1e-12
      %v1101 = vrsqrt.pop %v1100
      %v1102 = vmul.f32 %v1094, %v1101
      %v1104 = vlaneseq
      %v1105 = vshrl.u32 %v1104, 7
      %v1106 = vsub.s32 0, %v1105
      %v1107 = vrot.slane %v1088, %v1106
      %v1109 = vmul.f32 %v1102, %v1107
      %v1111 = vlaneseq
      %v1112 = vshrl.u32 %v1111, 7
      %v1113 = vsub.s32 0, %v1112
      %v1114 = vrot.slane %v1089, %v1113
      %v1116 = vadd.f32 %v1109, %v1114
      %v1117 = vpack.c.bf16 %v1116, %v1116
      %v1118 = vld [vmem:[%s9] sm:$0xf]
      %v1119 = vld [vmem:[%s9 + $0x4] sm:$0xf]
      %v1120 = vld [vmem:[%s9 + $0x8] sm:$0xf]
      %v1121 = vld [vmem:[%s9 + $0xc] sm:$0xf]
      %v1122 = vld [vmem:[%s10] sm:$0x1]
      %v1124 = vlaneseq
      %v1125 = vshrl.u32 %v1124, 7
      %v1126 = vsub.s32 0, %v1125
      %v1127 = vrot.slane %v1122, %v1126
      %v1133 = vunpack.c.l.b16 %v1118
      %v1134 = vunpack.c.l.b16 %v1119
      %v1135 = vunpack.c.l.b16 %v1120
      %v1136 = vunpack.c.l.b16 %v1121
      %v1137 = vpack.c.b16 %v1134, %v1133
      %v1138 = vpack.c.b16 %v1136, %v1135
      %v1142 = vsel %vm440, %v1117, 0
      %1144 = vmatprep.subr.bf16.mxu0 0
      %1145 = vmatpush1.bf16.msra.mxu0 %v1137
      %1146 = vmatprep.subr.bf16.mxu0 0
      %1147 = vmatpush1.bf16.msra.mxu0 %v1138
      %1148 = vmatprep.subr.bf16.mxu0 0
      %1149 = vmatpush1.bf16.msra.mxu0 0
      %1150 = vmatprep.subr.bf16.mxu0 0
      %1151 = vmatpush1.bf16.msra.mxu0 0
      %1152 = vmatprep.subr.bf16.mxu0 0
      %1153 = vmatpush1.bf16.msra.mxu0 0
      %1154 = vmatprep.subr.bf16.mxu0 0
      %1155 = vmatpush1.bf16.msra.mxu0 0
      %1156 = vmatprep.subr.bf16.mxu0 0
      %1157 = vmatpush1.bf16.msra.mxu0 0
      %1158 = vmatprep.subr.bf16.mxu0 0
      %1159 = vmatpush1.bf16.msra.mxu0 0
      %1160 = vmatprep.subr.bf16.mxu0 0
      %1161 = vmatpush1.bf16.msra.mxu0 0
      %1162 = vmatprep.subr.bf16.mxu0 0
      %1163 = vmatpush1.bf16.msra.mxu0 0
      %1164 = vmatprep.subr.bf16.mxu0 0
      %1165 = vmatpush1.bf16.msra.mxu0 0
      %1166 = vmatprep.subr.bf16.mxu0 0
      %1167 = vmatpush1.bf16.msra.mxu0 0
      %1168 = vmatprep.subr.bf16.mxu0 0
      %1169 = vmatpush1.bf16.msra.mxu0 0
      %1170 = vmatprep.subr.bf16.mxu0 0
      %1171 = vmatpush1.bf16.msra.mxu0 0
      %1172 = vmatprep.subr.bf16.mxu0 0
      %1173 = vmatpush1.bf16.msra.mxu0 0
      %1174 = vmatprep.subr.bf16.mxu0 0
      %1175 = vmatpush1.bf16.msra.mxu0 0
      %1176 = vmatprep.mubr.bf16.mxu0 0
      %1177 = vmatmul.mubr.bf16.gmra.mrb[0].mxu0 %v1142
      %v1178 = vpop.f32.mrb[0].mxu0
      %v1179 = vadd.f32 %v1127, %v1178
      %v1180 = vpop.f32.mrb[0].mxu0
      %v1181 = vpop.f32.mrb[0].mxu0
      %v1182 = vpop.f32.mrb[0].mxu0
      %1183 = vdwg.mxu0
      %v1184 = vmul.f32 %v1179, %v1179
      %v1185 = vmul.f32 %v1179, %v1184
      %v1186 = vmul.f32 %v1185, 0.044715
      %v1187 = vadd.f32 %v1179, %v1186
      %v1188 = vmul.f32 %v1187, 0.7978846
      %v1189 = vtanh.pop %v1188
      %v1190 = vadd.f32 %v1189, 1.0
      %v1191 = vmul.f32 %v1190, 0.5
      %v1192 = vmul.f32 %v1179, %v1191
      %v1193 = vpack.c.bf16 %v1192, %v1192
      %v1194 = vld [vmem:[%s11] sm:$0xf]
      %v1195 = vld [vmem:[%s11 + $0x4] sm:$0xf]
      %v1196 = vld [vmem:[%s11 + $0x8] sm:$0xf]
      %v1197 = vld [vmem:[%s11 + $0xc] sm:$0xf]
      %v1198 = vld [vmem:[%s11 + $0x10] sm:$0xf]
      %v1199 = vld [vmem:[%s11 + $0x14] sm:$0xf]
      %v1200 = vld [vmem:[%s11 + $0x18] sm:$0xf]
      %v1201 = vld [vmem:[%s11 + $0x1c] sm:$0xf]
      %v1202 = vld [vmem:[%s12] sm:$0x1]
      %v1204 = vlaneseq
      %v1205 = vshrl.u32 %v1204, 7
      %v1206 = vsub.s32 0, %v1205
      %v1207 = vrot.slane %v1202, %v1206
      %v1217 = vunpack.c.l.b16 %v1194
      %v1218 = vunpack.c.l.b16 %v1195
      %v1219 = vunpack.c.l.b16 %v1196
      %v1220 = vunpack.c.l.b16 %v1197
      %v1221 = vunpack.c.l.b16 %v1198
      %v1222 = vunpack.c.l.b16 %v1199
      %v1223 = vunpack.c.l.b16 %v1200
      %v1224 = vunpack.c.l.b16 %v1201
      %v1225 = vpack.c.b16 %v1218, %v1217
      %v1226 = vpack.c.b16 %v1220, %v1219
      %v1227 = vpack.c.b16 %v1222, %v1221
      %v1228 = vpack.c.b16 %v1224, %v1223
      %vm1233 = vcmask 523264
      %v1235 = vsel %vm1233, %v1193, 0
      %1237 = vmatprep.subr.bf16.mxu0 0
      %1238 = vmatpush1.bf16.msra.mxu0 %v1225
      %1239 = vmatprep.subr.bf16.mxu0 0
      %1240 = vmatpush1.bf16.msra.mxu0 %v1226
      %1241 = vmatprep.subr.bf16.mxu0 0
      %1242 = vmatpush1.bf16.msra.mxu0 %v1227
      %1243 = vmatprep.subr.bf16.mxu0 0
      %1244 = vmatpush1.bf16.msra.mxu0 %v1228
      %1245 = vmatprep.subr.bf16.mxu0 0
      %1246 = vmatpush1.bf16.msra.mxu0 0
      %1247 = vmatprep.subr.bf16.mxu0 0
      %1248 = vmatpush1.bf16.msra.mxu0 0
      %1249 = vmatprep.subr.bf16.mxu0 0
      %1250 = vmatpush1.bf16.msra.mxu0 0
      %1251 = vmatprep.subr.bf16.mxu0 0
      %1252 = vmatpush1.bf16.msra.mxu0 0
      %1253 = vmatprep.subr.bf16.mxu0 0
      %1254 = vmatpush1.bf16.msra.mxu0 0
      %1255 = vmatprep.subr.bf16.mxu0 0
      %1256 = vmatpush1.bf16.msra.mxu0 0
      %1257 = vmatprep.subr.bf16.mxu0 0
      %1258 = vmatpush1.bf16.msra.mxu0 0
      %1259 = vmatprep.subr.bf16.mxu0 0
      %1260 = vmatpush1.bf16.msra.mxu0 0
      %1261 = vmatprep.subr.bf16.mxu0 0
      %1262 = vmatpush1.bf16.msra.mxu0 0
      %1263 = vmatprep.subr.bf16.mxu0 0
      %1264 = vmatpush1.bf16.msra.mxu0 0
      %1265 = vmatprep.subr.bf16.mxu0 0
      %1266 = vmatpush1.bf16.msra.mxu0 0
      %1267 = vmatprep.subr.bf16.mxu0 0
      %1268 = vmatpush1.bf16.msra.mxu0 0
      %1269 = vmatprep.mubr.bf16.mxu0 0
      %1270 = vmatmul.mubr.bf16.gmra.mrb[0].mxu0 %v1235
      %v1271 = vpop.f32.mrb[0].mxu0
      %v1272 = vadd.f32 %v1207, %v1271
      %v1273 = vpop.f32.mrb[0].mxu0
      %v1274 = vpop.f32.mrb[0].mxu0
      %v1275 = vpop.f32.mrb[0].mxu0
      %1276 = vdwg.mxu0
      %v1277 = vadd.f32 %v1087, %v1272
      %1278 = vst.msk [vmem:[%s435] sm:$0xff] %vm440, %v1277
      %p1279 = scmp.lt.s32.totalorder %s24, 1
      %s1280 = scalar_select %p1279, %s24, 1
      %s1281 = smul.addr %s1280, 8
      %s1282 = scalar_lea.vmem %s13, %s1281
      // Predicated region
      $region73: #{_lambda_.8} parent=71 // pred_check
        %p1283 = pneg %p320
      $region74: #{_lambda_.8} parent=71 // pred_check_branch
        %1285 = sbr.rel (%p1283) target = $region76
      $region75: #{_lambda_.8} parent=71 // pred_region
        _
      $region76: #{_lambda_.8} parent=71 // pred_fallthru
        _
    $region72: #{_lambda_.8} parent=5 // pred_fallthru
      _
    %p1286 = scmp.le.s32.totalorder 2, %s19
    // Predicated region
    $region77: #{_lambda_.8} parent=5 // pred_check
      %p1287 = pneg %p1286
    $region78: #{_lambda_.8} parent=5 // pred_check_branch
      %1289 = sbr.rel (%p1287) target = $region80
    $region79: #{_lambda_.8} parent=5 // pred_region
      %s1290 = ssub.s32 %s19, 2
      // Predicated region
      $region81: #{_lambda_.8} parent=79 // pred_check
        %p1291 = pneg %p326
      $region82: #{_lambda_.8} parent=79 // pred_check_branch
        %1293 = sbr.rel (%p1291) target = $region84
      $region83: #{_lambda_.8} parent=79 // pred_region
        %p1294 = scmp.lt.s32.totalorder %s25, 1
        %s1295 = scalar_select %p1294, %s25, 1
        %s1296 = smul.addr %s1295, 8
        %s1297 = scalar_lea.vmem %s13, %s1296
      $region84: #{_lambda_.8} parent=79 // pred_fallthru
        _
    $region80: #{_lambda_.8} parent=5 // pred_fallthru
      _
  $region6: #{_lambda_.8} parent=0 // loop_footer
    %s23 = sadd.s32 1, %s19
  $region7: #{_lambda_.8} parent=0 // loop_footer_branch
    %18 = sbr.rel target = $region3
  $region8: #{_lambda_.8} parent=0 // loop_exit
    _

// kernel: _lambda_.11
$region0: #{_lambda_.11}
  #allocation0 [shape = 'u32[]', space=smem, size = 0x4, offset = 0x4, fixed_abs, tag = 'smem constant byte address 0x4 - core index']
  #allocation1 [shape = 'u32[144,128]{1,0:T(1,128)}', space=vmem, size = 0x12000, scoped, tag = 'internal scratch']
  %s0 = inlined_call_operand.vmem [shape: f32[2,16,32], index: 0, kind: input, shape index: {}]
  %s1 = inlined_call_operand.vmem [shape: f32[1,32], index: 1, kind: input, shape index: {}, may-alias: {1,7}]
  %s2 = inlined_call_operand.vmem [shape: f32[1,32], index: 2, kind: input, shape index: {}, may-alias: {2,6,8,12}]
  %s3 = inlined_call_operand.vmem [shape: bf16[32,96], index: 3, kind: input, shape index: {}]
  %s4 = inlined_call_operand.vmem [shape: f32[1,96], index: 4, kind: input, shape index: {}]
  %s5 = inlined_call_operand.vmem [shape: bf16[32,32], index: 5, kind: input, shape index: {}]
  %s6 = inlined_call_operand.vmem [shape: f32[1,32], index: 6, kind: input, shape index: {}, may-alias: {2,6,8,12}]
  %s7 = inlined_call_operand.vmem [shape: f32[1,32], index: 7, kind: input, shape index: {}, may-alias: {1,7}]
  %s8 = inlined_call_operand.vmem [shape: f32[1,32], index: 8, kind: input, shape index: {}, may-alias: {2,6,8,12}]
  %s9 = inlined_call_operand.vmem [shape: bf16[32,64], index: 9, kind: input, shape index: {}]
  %s10 = inlined_call_operand.vmem [shape: f32[1,64], index: 10, kind: input, shape index: {}]
  %s11 = inlined_call_operand.vmem [shape: bf16[64,32], index: 11, kind: input, shape index: {}]
  %s12 = inlined_call_operand.vmem [shape: f32[1,32], index: 12, kind: input, shape index: {}, may-alias: {2,6,8,12}]
  %s13 = inlined_call_operand.vmem [shape: f32[2,1,16], index: 13, kind: input, shape index: {}]
  %s14 = inlined_call_operand.vmem [shape: f32[2,16,32], index: 14, kind: output, shape index: {}]
  %s15 = sld [smem:[#allocation0]]
  $region89: #{_lambda_.11} parent=0
    _
  %s17 = ssub.s32 1, %s15
  %s18 = scalar_select 0, %s17, %s15
  loop: start=0, step=1, limit=4
  $region2: #{_lambda_.11} parent=0 // loop_pre_header
    _
  $region3: #{_lambda_.11} parent=0 // loop_header
    %s20 = sphi 0, %s24
    %p21 = scmp.ge.s32.totalorder %s20, 4
    %s30 = sphi 0, %s32
    %s33 = sphi 0, %s30
    %s34 = sphi 0, %s33
    %s50 = sphi 0, %s34
    %s54 = sphi 0, %s54
    %s56 = sphi 0, %s54
    %s57 = sphi 0, %s56
    %s71 = sphi 0, %s57
    %s75 = sphi 0, %s75
    %s77 = sphi 0, %s75
    %s78 = sphi 0, %s77
    %s92 = sphi 0, %s78
    %s96 = sphi 0, %s96
    %s98 = sphi 0, %s96
    %s99 = sphi 0, %s98
    %s113 = sphi 0, %s99
    %s117 = sphi 0, %s117
    %s119 = sphi 0, %s117
    %s120 = sphi 0, %s119
    %s134 = sphi 0, %s120
    %s138 = sphi 0, %s138
    %s140 = sphi 0, %s138
    %s141 = sphi 0, %s140
    %s155 = sphi 0, %s141
    %s159 = sphi 0, %s159
    %s161 = sphi 0, %s159
    %s162 = sphi 0, %s161
    %s176 = sphi 0, %s162
    %s180 = sphi 0, %s180
    %s182 = sphi 0, %s180
    %s183 = sphi 0, %s182
    %s197 = sphi 0, %s183
    %s201 = sphi 0, %s201
    %s203 = sphi 0, %s201
    %s204 = sphi 0, %s203
    %s218 = sphi 0, %s204
    %s222 = sphi 0, %s222
    %s224 = sphi 0, %s222
    %s225 = sphi 0, %s224
    %s239 = sphi 0, %s225
    %s243 = sphi 0, %s243
    %s245 = sphi 0, %s243
    %s246 = sphi 0, %s245
    %s260 = sphi 0, %s246
    %s264 = sphi 0, %s264
    %s266 = sphi 0, %s264
    %s267 = sphi 0, %s266
    %s281 = sphi 0, %s267
    %s285 = sphi 0, %s285
    %s287 = sphi 0, %s285
    %s288 = sphi 0, %s287
    %s302 = sphi 0, %s288
    %s308 = sphi 0, %s310
    %s311 = sphi 0, %s308
    %s312 = sphi 0, %s311
    %s328 = sphi 0, %s312
    %s334 = sphi 0, %s336
    %s337 = sphi 0, %s334
    %s338 = sphi 0, %s337
    %s354 = sphi 0, %s338
  $region4: #{_lambda_.11} parent=0 // loop_header_branch
    %23 = sbr.rel (%p21) target = $region8
  $region5: #{_lambda_.11} parent=0 // loop_body
    %s25 = ssub.s32 %s20, 1
    %s26 = ssub.s32 %s20, 2
    %s27 = sadd.s32 %s20, 1
    %s28 = ssub.s32 %s20, %s27
    %p29 = scmp.eq.s32.totalorder %s28, 0
    %s31 = sadd.s32 %s30, 1
    %s32 = scalar_select %p29, %s30, %s31
    %p35 = pneg %p29
    %p36 = scmp.eq.s32.totalorder %s20, 1
    %p37 = por %p35, %p36
    %p38 = scmp.ne.s32.totalorder %s30, %s33
    %p39 = scmp.eq.s32.totalorder %s20, 0
    %p40 = por %p38, %p39
    %p41 = scmp.ne.s32.totalorder %s30, %s33
    %p42 = scmp.eq.s32.totalorder %s25, 1
    %p43 = por %p41, %p42
    %p44 = scmp.ne.s32.totalorder %s33, %s34
    %p45 = scmp.eq.s32.totalorder %s25, 0
    %p46 = por %p44, %p45
    %p47 = scmp.ne.s32.totalorder %s33, %s34
    %p48 = scmp.eq.s32.totalorder %s26, 1
    %p49 = por %p47, %p48
    %p51 = scmp.ne.s32.totalorder %s34, %s50
    %p52 = scmp.eq.s32.totalorder %s26, 0
    %p53 = por %p51, %p52
    %s55 = sadd.s32 %s54, 1
    %p58 = scmp.eq.s32.totalorder %s20, 1
    %p59 = scmp.ne.s32.totalorder %s54, %s56
    %p60 = scmp.eq.s32.totalorder %s20, 0
    %p61 = por %p59, %p60
    %p62 = scmp.ne.s32.totalorder %s54, %s56
    %p63 = scmp.eq.s32.totalorder %s25, 1
    %p64 = por %p62, %p63
    %p65 = scmp.ne.s32.totalorder %s56, %s57
    %p66 = scmp.eq.s32.totalorder %s25, 0
    %p67 = por %p65, %p66
    %p68 = scmp.ne.s32.totalorder %s56, %s57
    %p69 = scmp.eq.s32.totalorder %s26, 1
    %p70 = por %p68, %p69
    %p72 = scmp.ne.s32.totalorder %s57, %s71
    %p73 = scmp.eq.s32.totalorder %s26, 0
    %p74 = por %p72, %p73
    %s76 = sadd.s32 %s75, 1
    %p79 = scmp.eq.s32.totalorder %s20, 1
    %p80 = scmp.ne.s32.totalorder %s75, %s77
    %p81 = scmp.eq.s32.totalorder %s20, 0
    %p82 = por %p80, %p81
    %p83 = scmp.ne.s32.totalorder %s75, %s77
    %p84 = scmp.eq.s32.totalorder %s25, 1
    %p85 = por %p83, %p84
    %p86 = scmp.ne.s32.totalorder %s77, %s78
    %p87 = scmp.eq.s32.totalorder %s25, 0
    %p88 = por %p86, %p87
    %p89 = scmp.ne.s32.totalorder %s77, %s78
    %p90 = scmp.eq.s32.totalorder %s26, 1
    %p91 = por %p89, %p90
    %p93 = scmp.ne.s32.totalorder %s78, %s92
    %p94 = scmp.eq.s32.totalorder %s26, 0
    %p95 = por %p93, %p94
    %s97 = sadd.s32 %s96, 1
    %p100 = scmp.eq.s32.totalorder %s20, 1
    %p101 = scmp.ne.s32.totalorder %s96, %s98
    %p102 = scmp.eq.s32.totalorder %s20, 0
    %p103 = por %p101, %p102
    %p104 = scmp.ne.s32.totalorder %s96, %s98
    %p105 = scmp.eq.s32.totalorder %s25, 1
    %p106 = por %p104, %p105
    %p107 = scmp.ne.s32.totalorder %s98, %s99
    %p108 = scmp.eq.s32.totalorder %s25, 0
    %p109 = por %p107, %p108
    %p110 = scmp.ne.s32.totalorder %s98, %s99
    %p111 = scmp.eq.s32.totalorder %s26, 1
    %p112 = por %p110, %p111
    %p114 = scmp.ne.s32.totalorder %s99, %s113
    %p115 = scmp.eq.s32.totalorder %s26, 0
    %p116 = por %p114, %p115
    %s118 = sadd.s32 %s117, 1
    %p121 = scmp.eq.s32.totalorder %s20, 1
    %p122 = scmp.ne.s32.totalorder %s117, %s119
    %p123 = scmp.eq.s32.totalorder %s20, 0
    %p124 = por %p122, %p123
    %p125 = scmp.ne.s32.totalorder %s117, %s119
    %p126 = scmp.eq.s32.totalorder %s25, 1
    %p127 = por %p125, %p126
    %p128 = scmp.ne.s32.totalorder %s119, %s120
    %p129 = scmp.eq.s32.totalorder %s25, 0
    %p130 = por %p128, %p129
    %p131 = scmp.ne.s32.totalorder %s119, %s120
    %p132 = scmp.eq.s32.totalorder %s26, 1
    %p133 = por %p131, %p132
    %p135 = scmp.ne.s32.totalorder %s120, %s134
    %p136 = scmp.eq.s32.totalorder %s26, 0
    %p137 = por %p135, %p136
    %s139 = sadd.s32 %s138, 1
    %p142 = scmp.eq.s32.totalorder %s20, 1
    %p143 = scmp.ne.s32.totalorder %s138, %s140
    %p144 = scmp.eq.s32.totalorder %s20, 0
    %p145 = por %p143, %p144
    %p146 = scmp.ne.s32.totalorder %s138, %s140
    %p147 = scmp.eq.s32.totalorder %s25, 1
    %p148 = por %p146, %p147
    %p149 = scmp.ne.s32.totalorder %s140, %s141
    %p150 = scmp.eq.s32.totalorder %s25, 0
    %p151 = por %p149, %p150
    %p152 = scmp.ne.s32.totalorder %s140, %s141
    %p153 = scmp.eq.s32.totalorder %s26, 1
    %p154 = por %p152, %p153
    %p156 = scmp.ne.s32.totalorder %s141, %s155
    %p157 = scmp.eq.s32.totalorder %s26, 0
    %p158 = por %p156, %p157
    %s160 = sadd.s32 %s159, 1
    %p163 = scmp.eq.s32.totalorder %s20, 1
    %p164 = scmp.ne.s32.totalorder %s159, %s161
    %p165 = scmp.eq.s32.totalorder %s20, 0
    %p166 = por %p164, %p165
    %p167 = scmp.ne.s32.totalorder %s159, %s161
    %p168 = scmp.eq.s32.totalorder %s25, 1
    %p169 = por %p167, %p168
    %p170 = scmp.ne.s32.totalorder %s161, %s162
    %p171 = scmp.eq.s32.totalorder %s25, 0
    %p172 = por %p170, %p171
    %p173 = scmp.ne.s32.totalorder %s161, %s162
    %p174 = scmp.eq.s32.totalorder %s26, 1
    %p175 = por %p173, %p174
    %p177 = scmp.ne.s32.totalorder %s162, %s176
    %p178 = scmp.eq.s32.totalorder %s26, 0
    %p179 = por %p177, %p178
    %s181 = sadd.s32 %s180, 1
    %p184 = scmp.eq.s32.totalorder %s20, 1
    %p185 = scmp.ne.s32.totalorder %s180, %s182
    %p186 = scmp.eq.s32.totalorder %s20, 0
    %p187 = por %p185, %p186
    %p188 = scmp.ne.s32.totalorder %s180, %s182
    %p189 = scmp.eq.s32.totalorder %s25, 1
    %p190 = por %p188, %p189
    %p191 = scmp.ne.s32.totalorder %s182, %s183
    %p192 = scmp.eq.s32.totalorder %s25, 0
    %p193 = por %p191, %p192
    %p194 = scmp.ne.s32.totalorder %s182, %s183
    %p195 = scmp.eq.s32.totalorder %s26, 1
    %p196 = por %p194, %p195
    %p198 = scmp.ne.s32.totalorder %s183, %s197
    %p199 = scmp.eq.s32.totalorder %s26, 0
    %p200 = por %p198, %p199
    %s202 = sadd.s32 %s201, 1
    %p205 = scmp.eq.s32.totalorder %s20, 1
    %p206 = scmp.ne.s32.totalorder %s201, %s203
    %p207 = scmp.eq.s32.totalorder %s20, 0
    %p208 = por %p206, %p207
    %p209 = scmp.ne.s32.totalorder %s201, %s203
    %p210 = scmp.eq.s32.totalorder %s25, 1
    %p211 = por %p209, %p210
    %p212 = scmp.ne.s32.totalorder %s203, %s204
    %p213 = scmp.eq.s32.totalorder %s25, 0
    %p214 = por %p212, %p213
    %p215 = scmp.ne.s32.totalorder %s203, %s204
    %p216 = scmp.eq.s32.totalorder %s26, 1
    %p217 = por %p215, %p216
    %p219 = scmp.ne.s32.totalorder %s204, %s218
    %p220 = scmp.eq.s32.totalorder %s26, 0
    %p221 = por %p219, %p220
    %s223 = sadd.s32 %s222, 1
    %p226 = scmp.eq.s32.totalorder %s20, 1
    %p227 = scmp.ne.s32.totalorder %s222, %s224
    %p228 = scmp.eq.s32.totalorder %s20, 0
    %p229 = por %p227, %p228
    %p230 = scmp.ne.s32.totalorder %s222, %s224
    %p231 = scmp.eq.s32.totalorder %s25, 1
    %p232 = por %p230, %p231
    %p233 = scmp.ne.s32.totalorder %s224, %s225
    %p234 = scmp.eq.s32.totalorder %s25, 0
    %p235 = por %p233, %p234
    %p236 = scmp.ne.s32.totalorder %s224, %s225
    %p237 = scmp.eq.s32.totalorder %s26, 1
    %p238 = por %p236, %p237
    %p240 = scmp.ne.s32.totalorder %s225, %s239
    %p241 = scmp.eq.s32.totalorder %s26, 0
    %p242 = por %p240, %p241
    %s244 = sadd.s32 %s243, 1
    %p247 = scmp.eq.s32.totalorder %s20, 1
    %p248 = scmp.ne.s32.totalorder %s243, %s245
    %p249 = scmp.eq.s32.totalorder %s20, 0
    %p250 = por %p248, %p249
    %p251 = scmp.ne.s32.totalorder %s243, %s245
    %p252 = scmp.eq.s32.totalorder %s25, 1
    %p253 = por %p251, %p252
    %p254 = scmp.ne.s32.totalorder %s245, %s246
    %p255 = scmp.eq.s32.totalorder %s25, 0
    %p256 = por %p254, %p255
    %p257 = scmp.ne.s32.totalorder %s245, %s246
    %p258 = scmp.eq.s32.totalorder %s26, 1
    %p259 = por %p257, %p258
    %p261 = scmp.ne.s32.totalorder %s246, %s260
    %p262 = scmp.eq.s32.totalorder %s26, 0
    %p263 = por %p261, %p262
    %s265 = sadd.s32 %s264, 1
    %p268 = scmp.eq.s32.totalorder %s20, 1
    %p269 = scmp.ne.s32.totalorder %s264, %s266
    %p270 = scmp.eq.s32.totalorder %s20, 0
    %p271 = por %p269, %p270
    %p272 = scmp.ne.s32.totalorder %s264, %s266
    %p273 = scmp.eq.s32.totalorder %s25, 1
    %p274 = por %p272, %p273
    %p275 = scmp.ne.s32.totalorder %s266, %s267
    %p276 = scmp.eq.s32.totalorder %s25, 0
    %p277 = por %p275, %p276
    %p278 = scmp.ne.s32.totalorder %s266, %s267
    %p279 = scmp.eq.s32.totalorder %s26, 1
    %p280 = por %p278, %p279
    %p282 = scmp.ne.s32.totalorder %s267, %s281
    %p283 = scmp.eq.s32.totalorder %s26, 0
    %p284 = por %p282, %p283
    %s286 = sadd.s32 %s285, 1
    %p289 = scmp.eq.s32.totalorder %s20, 1
    %p290 = scmp.ne.s32.totalorder %s285, %s287
    %p291 = scmp.eq.s32.totalorder %s20, 0
    %p292 = por %p290, %p291
    %p293 = scmp.ne.s32.totalorder %s285, %s287
    %p294 = scmp.eq.s32.totalorder %s25, 1
    %p295 = por %p293, %p294
    %p296 = scmp.ne.s32.totalorder %s287, %s288
    %p297 = scmp.eq.s32.totalorder %s25, 0
    %p298 = por %p296, %p297
    %p299 = scmp.ne.s32.totalorder %s287, %s288
    %p300 = scmp.eq.s32.totalorder %s26, 1
    %p301 = por %p299, %p300
    %p303 = scmp.ne.s32.totalorder %s288, %s302
    %p304 = scmp.eq.s32.totalorder %s26, 0
    %p305 = por %p303, %p304
    %s306 = ssub.s32 %s20, %s27
    %p307 = scmp.eq.s32.totalorder %s306, 0
    %s309 = sadd.s32 %s308, 1
    %s310 = scalar_select %p307, %s308, %s309
    %p313 = pneg %p307
    %p314 = scmp.eq.s32.totalorder %s20, 1
    %p315 = por %p313, %p314
    %p316 = scmp.ne.s32.totalorder %s308, %s311
    %p317 = scmp.eq.s32.totalorder %s20, 0
    %p318 = por %p316, %p317
    %p319 = scmp.ne.s32.totalorder %s308, %s311
    %p320 = scmp.eq.s32.totalorder %s25, 1
    %p321 = por %p319, %p320
    %p322 = scmp.ne.s32.totalorder %s311, %s312
    %p323 = scmp.eq.s32.totalorder %s25, 0
    %p324 = por %p322, %p323
    %p325 = scmp.ne.s32.totalorder %s311, %s312
    %p326 = scmp.eq.s32.totalorder %s26, 1
    %p327 = por %p325, %p326
    %p329 = scmp.ne.s32.totalorder %s312, %s328
    %p330 = scmp.eq.s32.totalorder %s26, 0
    %p331 = por %p329, %p330
    %s332 = ssub.s32 %s20, %s27
    %p333 = scmp.eq.s32.totalorder %s332, 0
    %s335 = sadd.s32 %s334, 1
    %s336 = scalar_select %p333, %s334, %s335
    %p339 = pneg %p333
    %p340 = scmp.eq.s32.totalorder %s20, 1
    %p341 = por %p339, %p340
    %p342 = scmp.ne.s32.totalorder %s334, %s337
    %p343 = scmp.eq.s32.totalorder %s20, 0
    %p344 = por %p342, %p343
    %p345 = scmp.ne.s32.totalorder %s334, %s337
    %p346 = scmp.eq.s32.totalorder %s25, 1
    %p347 = por %p345, %p346
    %p348 = scmp.ne.s32.totalorder %s337, %s338
    %p349 = scmp.eq.s32.totalorder %s25, 0
    %p350 = por %p348, %p349
    %p351 = scmp.ne.s32.totalorder %s337, %s338
    %p352 = scmp.eq.s32.totalorder %s26, 1
    %p353 = por %p351, %p352
    %p355 = scmp.ne.s32.totalorder %s338, %s354
    %p356 = scmp.eq.s32.totalorder %s26, 0
    %p357 = por %p355, %p356
    %p358 = scmp.le.s32.totalorder 1, %s20
    %p359 = scmp.lt.s32.totalorder %s20, 3
    %p360 = pnand %p358, %p359
    %p361 = pneg %p360
    // Predicated region
    $region9: #{_lambda_.11} parent=5 // pred_check
      _
    $region10: #{_lambda_.11} parent=5 // pred_check_branch
      %363 = sbr.rel (%p360) target = $region12
    $region11: #{_lambda_.11} parent=5 // pred_region
      %s364 = ssub.s32 %s20, 1
      // Predicated region
      $region13: #{_lambda_.11} parent=11 // pred_check
        %p365 = pneg %p67
      $region14: #{_lambda_.11} parent=11 // pred_check_branch
        %367 = sbr.rel (%p365) target = $region16
      $region15: #{_lambda_.11} parent=11 // pred_region
        _
      $region16: #{_lambda_.11} parent=11 // pred_fallthru
        _
      // Predicated region
      $region17: #{_lambda_.11} parent=11 // pred_check
        %p368 = pneg %p88
      $region18: #{_lambda_.11} parent=11 // pred_check_branch
        %370 = sbr.rel (%p368) target = $region20
      $region19: #{_lambda_.11} parent=11 // pred_region
        _
      $region20: #{_lambda_.11} parent=11 // pred_fallthru
        _
      // Predicated region
      $region21: #{_lambda_.11} parent=11 // pred_check
        %p371 = pneg %p109
      $region22: #{_lambda_.11} parent=11 // pred_check_branch
        %373 = sbr.rel (%p371) target = $region24
      $region23: #{_lambda_.11} parent=11 // pred_region
        _
      $region24: #{_lambda_.11} parent=11 // pred_fallthru
        _
      // Predicated region
      $region25: #{_lambda_.11} parent=11 // pred_check
        %p374 = pneg %p130
      $region26: #{_lambda_.11} parent=11 // pred_check_branch
        %376 = sbr.rel (%p374) target = $region28
      $region27: #{_lambda_.11} parent=11 // pred_region
        _
      $region28: #{_lambda_.11} parent=11 // pred_fallthru
        _
      // Predicated region
      $region29: #{_lambda_.11} parent=11 // pred_check
        %p377 = pneg %p151
      $region30: #{_lambda_.11} parent=11 // pred_check_branch
        %379 = sbr.rel (%p377) target = $region32
      $region31: #{_lambda_.11} parent=11 // pred_region
        _
      $region32: #{_lambda_.11} parent=11 // pred_fallthru
        _
      // Predicated region
      $region33: #{_lambda_.11} parent=11 // pred_check
        %p380 = pneg %p172
      $region34: #{_lambda_.11} parent=11 // pred_check_branch
        %382 = sbr.rel (%p380) target = $region36
      $region35: #{_lambda_.11} parent=11 // pred_region
        _
      $region36: #{_lambda_.11} parent=11 // pred_fallthru
        _
      // Predicated region
      $region37: #{_lambda_.11} parent=11 // pred_check
        %p383 = pneg %p193
      $region38: #{_lambda_.11} parent=11 // pred_check_branch
        %385 = sbr.rel (%p383) target = $region40
      $region39: #{_lambda_.11} parent=11 // pred_region
        _
      $region40: #{_lambda_.11} parent=11 // pred_fallthru
        _
      // Predicated region
      $region41: #{_lambda_.11} parent=11 // pred_check
        %p386 = pneg %p214
      $region42: #{_lambda_.11} parent=11 // pred_check_branch
        %388 = sbr.rel (%p386) target = $region44
      $region43: #{_lambda_.11} parent=11 // pred_region
        _
      $region44: #{_lambda_.11} parent=11 // pred_fallthru
        _
      // Predicated region
      $region45: #{_lambda_.11} parent=11 // pred_check
        %p389 = pneg %p235
      $region46: #{_lambda_.11} parent=11 // pred_check_branch
        %391 = sbr.rel (%p389) target = $region48
      $region47: #{_lambda_.11} parent=11 // pred_region
        _
      $region48: #{_lambda_.11} parent=11 // pred_fallthru
        _
      // Predicated region
      $region49: #{_lambda_.11} parent=11 // pred_check
        %p392 = pneg %p256
      $region50: #{_lambda_.11} parent=11 // pred_check_branch
        %394 = sbr.rel (%p392) target = $region52
      $region51: #{_lambda_.11} parent=11 // pred_region
        _
      $region52: #{_lambda_.11} parent=11 // pred_fallthru
        _
      // Predicated region
      $region53: #{_lambda_.11} parent=11 // pred_check
        %p395 = pneg %p277
      $region54: #{_lambda_.11} parent=11 // pred_check_branch
        %397 = sbr.rel (%p395) target = $region56
      $region55: #{_lambda_.11} parent=11 // pred_region
        _
      $region56: #{_lambda_.11} parent=11 // pred_fallthru
        _
      // Predicated region
      $region57: #{_lambda_.11} parent=11 // pred_check
        %p398 = pneg %p298
      $region58: #{_lambda_.11} parent=11 // pred_check_branch
        %400 = sbr.rel (%p398) target = $region60
      $region59: #{_lambda_.11} parent=11 // pred_region
        _
      $region60: #{_lambda_.11} parent=11 // pred_fallthru
        _
    $region12: #{_lambda_.11} parent=5 // pred_fallthru
      _
    %p401 = scmp.lt.s32.totalorder %s20, 2
    // Predicated region
    $region61: #{_lambda_.11} parent=5 // pred_check
      %p402 = pneg %p401
    $region62: #{_lambda_.11} parent=5 // pred_check_branch
      %404 = sbr.rel (%p402) target = $region64
    $region63: #{_lambda_.11} parent=5 // pred_region
      // Predicated region
      $region65: #{_lambda_.11} parent=63 // pred_check
        %p405 = pneg %p40
      $region66: #{_lambda_.11} parent=63 // pred_check_branch
        %407 = sbr.rel (%p405) target = $region68
      $region67: #{_lambda_.11} parent=63 // pred_region
        %p408 = scmp.lt.s32.totalorder %s20, 1
        %s409 = scalar_select %p408, %s20, 1
        %s410 = smul.addr %s409, 2
        %s411 = smul.addr %s410, 8
        %s412 = scalar_lea.vmem %s0, %s411
      $region68: #{_lambda_.11} parent=63 // pred_fallthru
        _
      // Predicated region
      $region69: #{_lambda_.11} parent=63 // pred_check
        %p413 = pneg %p318
      $region70: #{_lambda_.11} parent=63 // pred_check_branch
        %415 = sbr.rel (%p413) target = $region72
      $region71: #{_lambda_.11} parent=63 // pred_region
        %p416 = scmp.lt.s32.totalorder %s20, 1
        %s417 = scalar_select %p416, %s20, 1
        %s418 = scalar_lea.vmem %s13, %s417
      $region72: #{_lambda_.11} parent=63 // pred_fallthru
        _
    $region64: #{_lambda_.11} parent=5 // pred_fallthru
      _
    %p419 = scmp.le.s32.totalorder 1, %s20
    %p420 = scmp.lt.s32.totalorder %s20, 3
    %p421 = pnand %p419, %p420
    %p422 = pneg %p421
    // Predicated region
    $region73: #{_lambda_.11} parent=5 // pred_check
      _
    $region74: #{_lambda_.11} parent=5 // pred_check_branch
      %424 = sbr.rel (%p421) target = $region76
    $region75: #{_lambda_.11} parent=5 // pred_region
      %s425 = ssub.s32 %s20, 1
      %p426 = scmp.lt.s32.totalorder %s25, 1
      %s427 = scalar_select %p426, %s25, 1
      %s428 = smul.addr %s427, 2
      %s429 = smul.addr %s428, 8
      %s430 = scalar_lea.vmem %s0, %s429
      %p431 = pneg %p46
      %p432 = pneg %p43
      %p433 = pneg %p67
      %p434 = pneg %p64
      %p435 = pneg %p88
      %p436 = pneg %p85
      %p437 = pneg %p109
      %p438 = pneg %p106
      %p439 = pneg %p130
      %p440 = pneg %p127
      %p441 = pneg %p151
      %p442 = pneg %p148
      %p443 = pneg %p172
      %p444 = pneg %p169
      %p445 = pneg %p193
      %p446 = pneg %p190
      %p447 = pneg %p214
      %p448 = pneg %p211
      %p449 = pneg %p235
      %p450 = pneg %p232
      %p451 = pneg %p256
      %p452 = pneg %p253
      %p453 = pneg %p277
      %p454 = pneg %p274
      %p455 = pneg %p298
      %p456 = pneg %p295
      %p457 = scmp.lt.s32.totalorder %s25, 1
      %s458 = scalar_select %p457, %s25, 1
      %s459 = scalar_lea.vmem %s13, %s458
      %p460 = pneg %p324
      %p461 = pneg %p321
      %p462 = pneg %p350
      %p463 = pneg %p347
      %p464 = scmp.lt.s32.totalorder %s25, 1
      %s465 = scalar_select %p464, %s25, 1
      %s466 = smul.addr %s465, 2
      %s467 = smul.addr %s466, 8
      %s468 = scalar_lea.vmem %s14, %s467
      %p469 = scmp.lt.s32.totalorder %s25, 1
      %s470 = scalar_select %p469, %s25, 1
      %s471 = smul.addr %s470, 2
      %s472 = smul.addr %s471, 8
      %s473 = scalar_lea.vmem %s0, %s472
      %p474 = scmp.lt.s32.totalorder %s25, 1
      %s475 = scalar_select %p474, %s25, 1
      %s476 = scalar_lea.vmem %s13, %s475
      %p477 = scmp.lt.s32.totalorder %s25, 1
      %s478 = scalar_select %p477, %s25, 1
      %s479 = smul.addr %s478, 2
      %s480 = smul.addr %s479, 8
      %s481 = scalar_lea.vmem %s14, %s480
      %v483 = vld [vmem:[%s473] sm:$0xff]
      %v484 = vld [vmem:[%s473 + $0x8] sm:$0xff]
      %v485 = vld [vmem:[%s1] sm:$0x1]
      %v486 = vld [vmem:[%s2] sm:$0x1]
      %vm487 = vcmask 261120
      %v488 = vsel %vm487, %v483, 0.0
      %489 = vadd.xlane.f32.xlu0 %v488
      %v490 = vpop.xlane.xlu0 %489
      %v491 = vsel %vm487, %v484, 0.0
      %492 = vadd.xlane.f32.xlu0 %v491
      %v493 = vpop.xlane.xlu0 %492
      %v494 = vrcp.pop 32.0
      %v495 = vmul.f32 %v490, %v494
      %v496 = vmul.f32 %v493, %v494
      %v497 = vsub.f32 %v483, %v495
      %v498 = vsub.f32 %v484, %v496
      %v499 = vmul.f32 %v497, %v497
      %v500 = vmul.f32 %v498, %v498
      %v501 = vsel %vm487, %v499, 0.0
      %502 = vadd.xlane.f32.xlu0 %v501
      %v503 = vpop.xlane.xlu0 %502
      %v504 = vsel %vm487, %v500, 0.0
      %505 = vadd.xlane.f32.xlu0 %v504
      %v506 = vpop.xlane.xlu0 %505
      %v507 = vmul.f32 %v503, %v494
      %v508 = vmul.f32 %v506, %v494
      %v509 = vadd.f32 %v507, 1e-05
      %v510 = vadd.f32 %v508, 1e-05
      %v511 = vrsqrt.pop %v509
      %v512 = vrsqrt.pop %v510
      %v513 = vmul.f32 %v497, %v511
      %v514 = vmul.f32 %v498, %v512
      %v516 = vlaneseq
      %v517 = vshrl.u32 %v516, 7
      %v518 = vsub.s32 0, %v517
      %v519 = vrot.slane %v485, %v518
      %v521 = vmul.f32 %v513, %v519
      %v522 = vmul.f32 %v514, %v519
      %v524 = vlaneseq
      %v525 = vshrl.u32 %v524, 7
      %v526 = vsub.s32 0, %v525
      %v527 = vrot.slane %v486, %v526
      %v529 = vadd.f32 %v521, %v527
      %v530 = vadd.f32 %v522, %v527
      %v531 = vpack.c.bf16 %v530, %v529
      %v532 = vld [vmem:[%s3] sm:$0xf]
      %v533 = vld [vmem:[%s3 + $0x4] sm:$0xf]
      %v534 = vld [vmem:[%s3 + $0x8] sm:$0xf]
      %v535 = vld [vmem:[%s3 + $0xc] sm:$0xf]
      %v536 = vld [vmem:[%s4] sm:$0x1]
      %v538 = vlaneseq
      %v539 = vshrl.u32 %v538, 7
      %v540 = vsub.s32 0, %v539
      %v541 = vrot.slane %v536, %v540
      %v547 = vunpack.c.l.b16 %v532
      %v548 = vunpack.c.l.b16 %v533
      %v549 = vunpack.c.l.b16 %v534
      %v550 = vunpack.c.l.b16 %v535
      %v551 = vpack.c.b16 %v548, %v547
      %v552 = vpack.c.b16 %v550, %v549
      %v556 = vsel %vm487, %v531, 0
      %558 = vmatprep.subr.bf16.mxu0 0
      %559 = vmatpush1.bf16.msra.mxu0 %v551
      %560 = vmatprep.subr.bf16.mxu0 0
      %561 = vmatpush1.bf16.msra.mxu0 %v552
      %562 = vmatprep.subr.bf16.mxu0 0
      %563 = vmatpush1.bf16.msra.mxu0 0
      %564 = vmatprep.subr.bf16.mxu0 0
      %565 = vmatpush1.bf16.msra.mxu0 0
      %566 = vmatprep.subr.bf16.mxu0 0
      %567 = vmatpush1.bf16.msra.mxu0 0
      %568 = vmatprep.subr.bf16.mxu0 0
      %569 = vmatpush1.bf16.msra.mxu0 0
      %570 = vmatprep.subr.bf16.mxu0 0
      %571 = vmatpush1.bf16.msra.mxu0 0
      %572 = vmatprep.subr.bf16.mxu0 0
      %573 = vmatpush1.bf16.msra.mxu0 0
      %574 = vmatprep.subr.bf16.mxu0 0
      %575 = vmatpush1.bf16.msra.mxu0 0
      %576 = vmatprep.subr.bf16.mxu0 0
      %577 = vmatpush1.bf16.msra.mxu0 0
      %578 = vmatprep.subr.bf16.mxu0 0
      %579 = vmatpush1.bf16.msra.mxu0 0
      %580 = vmatprep.subr.bf16.mxu0 0
      %581 = vmatpush1.bf16.msra.mxu0 0
      %582 = vmatprep.subr.bf16.mxu0 0
      %583 = vmatpush1.bf16.msra.mxu0 0
      %584 = vmatprep.subr.bf16.mxu0 0
      %585 = vmatpush1.bf16.msra.mxu0 0
      %586 = vmatprep.subr.bf16.mxu0 0
      %587 = vmatpush1.bf16.msra.mxu0 0
      %588 = vmatprep.subr.bf16.mxu0 0
      %589 = vmatpush1.bf16.msra.mxu0 0
      %590 = vmatprep.mubr.bf16.mxu0 0
      %591 = vmatmul.mubr.bf16.gmra.mrb[0].mxu0 %v556
      %v592 = vpop.f32.mrb[0].mxu0
      %v593 = vadd.f32 %v541, %v592
      %v594 = vpop.f32.mrb[0].mxu0
      %v595 = vpop.f32.mrb[0].mxu0
      %v596 = vadd.f32 %v541, %v595
      %v597 = vpop.f32.mrb[0].mxu0
      %598 = vdwg.mxu0
      %v599 = vmul.f32 %v593, 0.35355338
      %v600 = vmul.f32 %v596, 0.35355338
      %603 = vrot.lane.b32.xlu0 %v599, 120
      %v604 = vpop.permute.xlu0 %603
      %605 = vrot.lane.b32.xlu0 %v600, 120
      %v606 = vpop.permute.xlu0 %605
      %609 = vrot.lane.b32.xlu0 %v599, 112
      %v610 = vpop.permute.xlu0 %609
      %611 = vrot.lane.b32.xlu0 %v600, 112
      %v612 = vpop.permute.xlu0 %611
      %615 = vrot.lane.b32.xlu0 %v599, 104
      %v616 = vpop.permute.xlu0 %615
      %617 = vrot.lane.b32.xlu0 %v600, 104
      %v618 = vpop.permute.xlu0 %617
      %623 = vrot.lane.b32.xlu0 %v593, 120
      %v624 = vpop.permute.xlu0 %623
      %625 = vrot.lane.b32.xlu0 %v596, 120
      %v626 = vpop.permute.xlu0 %625
      %629 = vrot.lane.b32.xlu0 %v593, 112
      %v630 = vpop.permute.xlu0 %629
      %631 = vrot.lane.b32.xlu0 %v596, 112
      %v632 = vpop.permute.xlu0 %631
      %635 = vrot.lane.b32.xlu0 %v593, 104
      %v636 = vpop.permute.xlu0 %635
      %637 = vrot.lane.b32.xlu0 %v596, 104
      %v638 = vpop.permute.xlu0 %637
      %v641 = vpack.c.bf16 %v600, %v599
      %v642 = vpack.c.bf16 %v606, %v604
      %v643 = vpack.c.bf16 %v612, %v610
      %v644 = vpack.c.bf16 %v618, %v616
      %v645 = vpack.c.bf16 %v596, %v593
      %v646 = vpack.c.bf16 %v626, %v624
      %v647 = vpack.c.bf16 %v632, %v630
      %v648 = vpack.c.bf16 %v638, %v636
      %650 = vrot.lane.b32.xlu0 %v645, 96
      %v651 = vpop.permute.xlu0 %650
      %vm652 = vcmask 64512
      %v654 = vsel %vm652, %v641, 0
      %v657 = vsel %vm652, %v651, 0
      %659 = vmatprep.subr.bf16.mxu0 0
      %660 = vmatpush1.bf16.xpose.msra.mxu0 %v657
      %661 = vmatprep.subr.bf16.mxu0 0
      %662 = vmatpush1.bf16.xpose.msra.mxu0 0
      %663 = vmatprep.subr.bf16.mxu0 0
      %664 = vmatpush1.bf16.xpose.msra.mxu0 0
      %665 = vmatprep.subr.bf16.mxu0 0
      %666 = vmatpush1.bf16.xpose.msra.mxu0 0
      %667 = vmatprep.subr.bf16.mxu0 0
      %668 = vmatpush1.bf16.xpose.msra.mxu0 0
      %669 = vmatprep.subr.bf16.mxu0 0
      %670 = vmatpush1.bf16.xpose.msra.mxu0 0
      %671 = vmatprep.subr.bf16.mxu0 0
      %672 = vmatpush1.bf16.xpose.msra.mxu0 0
      %673 = vmatprep.subr.bf16.mxu0 0
      %674 = vmatpush1.bf16.xpose.msra.mxu0 0
      %675 = vmatprep.subr.bf16.mxu0 0
      %676 = vmatpush1.bf16.xpose.msra.mxu0 0
      %677 = vmatprep.subr.bf16.mxu0 0
      %678 = vmatpush1.bf16.xpose.msra.mxu0 0
      %679 = vmatprep.subr.bf16.mxu0 0
      %680 = vmatpush1.bf16.xpose.msra.mxu0 0
      %681 = vmatprep.subr.bf16.mxu0 0
      %682 = vmatpush1.bf16.xpose.msra.mxu0 0
      %683 = vmatprep.subr.bf16.mxu0 0
      %684 = vmatpush1.bf16.xpose.msra.mxu0 0
      %685 = vmatprep.subr.bf16.mxu0 0
      %686 = vmatpush1.bf16.xpose.msra.mxu0 0
      %687 = vmatprep.subr.bf16.mxu0 0
      %688 = vmatpush1.bf16.xpose.msra.mxu0 0
      %689 = vmatprep.subr.bf16.mxu0 0
      %690 = vmatpush1.bf16.xpose.msra.mxu0 0
      %691 = vmatprep.mubr.bf16.mxu0 0
      %692 = vmatmul.mubr.bf16.gmra.mrb[0].mxu0 %v654
      %v693 = vpop.f32.mrb[0].mxu0
      %v694 = vadd.f32 0.0, %v693
      %v695 = vpop.f32.mrb[0].mxu0
      %v696 = vpop.f32.mrb[0].mxu0
      %v697 = vadd.f32 0.0, %v696
      %v698 = vpop.f32.mrb[0].mxu0
      %699 = vdwg.mxu0
      %701 = vrot.lane.b32.xlu0 %v646, 96
      %v702 = vpop.permute.xlu0 %701
      %v704 = vsel %vm652, %v642, 0
      %v707 = vsel %vm652, %v702, 0
      %709 = vmatprep.subr.bf16.mxu0 0
      %710 = vmatpush1.bf16.xpose.msra.mxu0 %v707
      %711 = vmatprep.subr.bf16.mxu0 0
      %712 = vmatpush1.bf16.xpose.msra.mxu0 0
      %713 = vmatprep.subr.bf16.mxu0 0
      %714 = vmatpush1.bf16.xpose.msra.mxu0 0
      %715 = vmatprep.subr.bf16.mxu0 0
      %716 = vmatpush1.bf16.xpose.msra.mxu0 0
      %717 = vmatprep.subr.bf16.mxu0 0
      %718 = vmatpush1.bf16.xpose.msra.mxu0 0
      %719 = vmatprep.subr.bf16.mxu0 0
      %720 = vmatpush1.bf16.xpose.msra.mxu0 0
      %721 = vmatprep.subr.bf16.mxu0 0
      %722 = vmatpush1.bf16.xpose.msra.mxu0 0
      %723 = vmatprep.subr.bf16.mxu0 0
      %724 = vmatpush1.bf16.xpose.msra.mxu0 0
      %725 = vmatprep.subr.bf16.mxu0 0
      %726 = vmatpush1.bf16.xpose.msra.mxu0 0
      %727 = vmatprep.subr.bf16.mxu0 0
      %728 = vmatpush1.bf16.xpose.msra.mxu0 0
      %729 = vmatprep.subr.bf16.mxu0 0
      %730 = vmatpush1.bf16.xpose.msra.mxu0 0
      %731 = vmatprep.subr.bf16.mxu0 0
      %732 = vmatpush1.bf16.xpose.msra.mxu0 0
      %733 = vmatprep.subr.bf16.mxu0 0
      %734 = vmatpush1.bf16.xpose.msra.mxu0 0
      %735 = vmatprep.subr.bf16.mxu0 0
      %736 = vmatpush1.bf16.xpose.msra.mxu0 0
      %737 = vmatprep.subr.bf16.mxu0 0
      %738 = vmatpush1.bf16.xpose.msra.mxu0 0
      %739 = vmatprep.subr.bf16.mxu0 0
      %740 = vmatpush1.bf16.xpose.msra.mxu0 0
      %741 = vmatprep.mubr.bf16.mxu0 0
      %742 = vmatmul.mubr.bf16.gmra.mrb[0].mxu0 %v704
      %v743 = vpop.f32.mrb[0].mxu0
      %v744 = vadd.f32 0.0, %v743
      %v745 = vpop.f32.mrb[0].mxu0
      %v746 = vpop.f32.mrb[0].mxu0
      %v747 = vadd.f32 0.0, %v746
      %v748 = vpop.f32.mrb[0].mxu0
      %749 = vdwg.mxu0
      %751 = vrot.lane.b32.xlu0 %v647, 96
      %v752 = vpop.permute.xlu0 %751
      %v754 = vsel %vm652, %v643, 0
      %v757 = vsel %vm652, %v752, 0
      %759 = vmatprep.subr.bf16.mxu0 0
      %760 = vmatpush1.bf16.xpose.msra.mxu0 %v757
      %761 = vmatprep.subr.bf16.mxu0 0
      %762 = vmatpush1.bf16.xpose.msra.mxu0 0
      %763 = vmatprep.subr.bf16.mxu0 0
      %764 = vmatpush1.bf16.xpose.msra.mxu0 0
      %765 = vmatprep.subr.bf16.mxu0 0
      %766 = vmatpush1.bf16.xpose.msra.mxu0 0
      %767 = vmatprep.subr.bf16.mxu0 0
      %768 = vmatpush1.bf16.xpose.msra.mxu0 0
      %769 = vmatprep.subr.bf16.mxu0 0
      %770 = vmatpush1.bf16.xpose.msra.mxu0 0
      %771 = vmatprep.subr.bf16.mxu0 0
      %772 = vmatpush1.bf16.xpose.msra.mxu0 0
      %773 = vmatprep.subr.bf16.mxu0 0
      %774 = vmatpush1.bf16.xpose.msra.mxu0 0
      %775 = vmatprep.subr.bf16.mxu0 0
      %776 = vmatpush1.bf16.xpose.msra.mxu0 0
      %777 = vmatprep.subr.bf16.mxu0 0
      %778 = vmatpush1.bf16.xpose.msra.mxu0 0
      %779 = vmatprep.subr.bf16.mxu0 0
      %780 = vmatpush1.bf16.xpose.msra.mxu0 0
      %781 = vmatprep.subr.bf16.mxu0 0
      %782 = vmatpush1.bf16.xpose.msra.mxu0 0
      %783 = vmatprep.subr.bf16.mxu0 0
      %784 = vmatpush1.bf16.xpose.msra.mxu0 0
      %785 = vmatprep.subr.bf16.mxu0 0
      %786 = vmatpush1.bf16.xpose.msra.mxu0 0
      %787 = vmatprep.subr.bf16.mxu0 0
      %788 = vmatpush1.bf16.xpose.msra.mxu0 0
      %789 = vmatprep.subr.bf16.mxu0 0
      %790 = vmatpush1.bf16.xpose.msra.mxu0 0
      %791 = vmatprep.mubr.bf16.mxu0 0
      %792 = vmatmul.mubr.bf16.gmra.mrb[0].mxu0 %v754
      %v793 = vpop.f32.mrb[0].mxu0
      %v794 = vadd.f32 0.0, %v793
      %v795 = vpop.f32.mrb[0].mxu0
      %v796 = vpop.f32.mrb[0].mxu0
      %v797 = vadd.f32 0.0, %v796
      %v798 = vpop.f32.mrb[0].mxu0
      %799 = vdwg.mxu0
      %801 = vrot.lane.b32.xlu0 %v648, 96
      %v802 = vpop.permute.xlu0 %801
      %v804 = vsel %vm652, %v644, 0
      %v807 = vsel %vm652, %v802, 0
      %809 = vmatprep.subr.bf16.mxu0 0
      %810 = vmatpush1.bf16.xpose.msra.mxu0 %v807
      %811 = vmatprep.subr.bf16.mxu0 0
      %812 = vmatpush1.bf16.xpose.msra.mxu0 0
      %813 = vmatprep.subr.bf16.mxu0 0
      %814 = vmatpush1.bf16.xpose.msra.mxu0 0
      %815 = vmatprep.subr.bf16.mxu0 0
      %816 = vmatpush1.bf16.xpose.msra.mxu0 0
      %817 = vmatprep.subr.bf16.mxu0 0
      %818 = vmatpush1.bf16.xpose.msra.mxu0 0
      %819 = vmatprep.subr.bf16.mxu0 0
      %820 = vmatpush1.bf16.xpose.msra.mxu0 0
      %821 = vmatprep.subr.bf16.mxu0 0
      %822 = vmatpush1.bf16.xpose.msra.mxu0 0
      %823 = vmatprep.subr.bf16.mxu0 0
      %824 = vmatpush1.bf16.xpose.msra.mxu0 0
      %825 = vmatprep.subr.bf16.mxu0 0
      %826 = vmatpush1.bf16.xpose.msra.mxu0 0
      %827 = vmatprep.subr.bf16.mxu0 0
      %828 = vmatpush1.bf16.xpose.msra.mxu0 0
      %829 = vmatprep.subr.bf16.mxu0 0
      %830 = vmatpush1.bf16.xpose.msra.mxu0 0
      %831 = vmatprep.subr.bf16.mxu0 0
      %832 = vmatpush1.bf16.xpose.msra.mxu0 0
      %833 = vmatprep.subr.bf16.mxu0 0
      %834 = vmatpush1.bf16.xpose.msra.mxu0 0
      %835 = vmatprep.subr.bf16.mxu0 0
      %836 = vmatpush1.bf16.xpose.msra.mxu0 0
      %837 = vmatprep.subr.bf16.mxu0 0
      %838 = vmatpush1.bf16.xpose.msra.mxu0 0
      %839 = vmatprep.subr.bf16.mxu0 0
      %840 = vmatpush1.bf16.xpose.msra.mxu0 0
      %841 = vmatprep.mubr.bf16.mxu0 0
      %842 = vmatmul.mubr.bf16.gmra.mrb[0].mxu0 %v804
      %v843 = vpop.f32.mrb[0].mxu0
      %v844 = vadd.f32 0.0, %v843
      %v845 = vpop.f32.mrb[0].mxu0
      %v846 = vpop.f32.mrb[0].mxu0
      %v847 = vadd.f32 0.0, %v846
      %v848 = vpop.f32.mrb[0].mxu0
      %849 = vdwg.mxu0
      %v850 = vlaneseq
      %v851 = vshrl.u32 %v850, 7
      %v852 = vadd.s32 %v851, 8
      %v853 = vlaneseq
      %v854 = vand.u32 %v853, 127
      %vm855 = vcmp.le.s32.totalorder %v854, %v851
      %vm856 = vcmp.le.s32.totalorder %v854, %v852
      %v857 = vld [vmem:[%s476] sm:$0x1]
      %vm858 = vcmp.gt.f32.partialorder %v857, 0.5
      %v859 = vsel %vm858, 1, 0
      %v860 = vlaneseq
      %v861 = vshrl.u32 %v860, 7
      %v862 = vsub.s32 0, %v861
      %v863 = vrot.slane %v859, %v862
      %vm864 = vcmp.eq.s32.totalorder %v863, 1
      %vm865 = vmand %vm855, %vm864
      %vm866 = vmand %vm856, %vm864
      %v867 = vsel %vm865, 1, 0
      %v868 = vsel %vm866, 1, 0
      %vm869 = vcmp.eq.s32.totalorder %v867, 1
      %vm870 = vcmp.eq.s32.totalorder %v868, 1
      %v871 = vsel %vm869, %v694, -1e+09
      %v872 = vsel %vm870, %v697, -1e+09
      %v873 = vsel %vm869, %v744, -1e+09
      %v874 = vsel %vm870, %v747, -1e+09
      %v875 = vsel %vm869, %v794, -1e+09
      %v876 = vsel %vm870, %v797, -1e+09
      %v877 = vsel %vm869, %v844, -1e+09
      %v878 = vsel %vm870, %v847, -1e+09
      %vm879 = vcmask 130048
      %v880 = vsel %vm879, %v871, -inf
      %881 = vmax.xlane.f32.xlu0 %v880
      %v882 = vpop.xlane.xlu0 %881
      %v883 = vsel %vm879, %v872, -inf
      %884 = vmax.xlane.f32.xlu0 %v883
      %v885 = vpop.xlane.xlu0 %884
      %v886 = vsel %vm879, %v873, -inf
      %887 = vmax.xlane.f32.xlu0 %v886
      %v888 = vpop.xlane.xlu0 %887
      %v889 = vsel %vm879, %v874, -inf
      %890 = vmax.xlane.f32.xlu0 %v889
      %v891 = vpop.xlane.xlu0 %890
      %v892 = vsel %vm879, %v875, -inf
      %893 = vmax.xlane.f32.xlu0 %v892
      %v894 = vpop.xlane.xlu0 %893
      %v895 = vsel %vm879, %v876, -inf
      %896 = vmax.xlane.f32.xlu0 %v895
      %v897 = vpop.xlane.xlu0 %896
      %v898 = vsel %vm879, %v877, -inf
      %899 = vmax.xlane.f32.xlu0 %v898
      %v900 = vpop.xlane.xlu0 %899
      %v901 = vsel %vm879, %v878, -inf
      %902 = vmax.xlane.f32.xlu0 %v901
      %v903 = vpop.xlane.xlu0 %902
      %v904 = vsub.f32 %v871, %v882
      %v905 = vsub.f32 %v872, %v885
      %v906 = vsub.f32 %v873, %v888
      %v907 = vsub.f32 %v874, %v891
      %v908 = vsub.f32 %v875, %v894
      %v909 = vsub.f32 %v876, %v897
      %v910 = vsub.f32 %v877, %v900
      %v911 = vsub.f32 %v878, %v903
      %v912 = vmul.f32 %v904, 1.442695
      %v913 = vpow.pop %v912
      %v914 = vmul.f32 %v905, 1.442695
      %v915 = vpow.pop %v914
      %v916 = vmul.f32 %v906, 1.442695
      %v917 = vpow.pop %v916
      %v918 = vmul.f32 %v907, 1.442695
      %v919 = vpow.pop %v918
      %v920 = vmul.f32 %v908, 1.442695
      %v921 = vpow.pop %v920
      %v922 = vmul.f32 %v909, 1.442695
      %v923 = vpow.pop %v922
      %v924 = vmul.f32 %v910, 1.442695
      %v925 = vpow.pop %v924
      %v926 = vmul.f32 %v911, 1.442695
      %v927 = vpow.pop %v926
      %v928 = vsel %vm879, %v913, 0.0
      %929 = vadd.xlane.f32.xlu0 %v928
      %v930 = vpop.xlane.xlu0 %929
      %v931 = vsel %vm879, %v915, 0.0
      %932 = vadd.xlane.f32.xlu0 %v931
      %v933 = vpop.xlane.xlu0 %932
      %v934 = vsel %vm879, %v917, 0.0
      %935 = vadd.xlane.f32.xlu0 %v934
      %v936 = vpop.xlane.xlu0 %935
      %v937 = vsel %vm879, %v919, 0.0
      %938 = vadd.xlane.f32.xlu0 %v937
      %v939 = vpop.xlane.xlu0 %938
      %v940 = vsel %vm879, %v921, 0.0
      %941 = vadd.xlane.f32.xlu0 %v940
      %v942 = vpop.xlane.xlu0 %941
      %v943 = vsel %vm879, %v923, 0.0
      %944 = vadd.xlane.f32.xlu0 %v943
      %v945 = vpop.xlane.xlu0 %944
      %v946 = vsel %vm879, %v925, 0.0
      %947 = vadd.xlane.f32.xlu0 %v946
      %v948 = vpop.xlane.xlu0 %947
      %v949 = vsel %vm879, %v927, 0.0
      %950 = vadd.xlane.f32.xlu0 %v949
      %v951 = vpop.xlane.xlu0 %950
      %v952 = vrcp.pop %v930
      %v953 = vrcp.pop %v933
      %v954 = vrcp.pop %v936
      %v955 = vrcp.pop %v939
      %v956 = vrcp.pop %v942
      %v957 = vrcp.pop %v945
      %v958 = vrcp.pop %v948
      %v959 = vrcp.pop %v951
      %v960 = vmul.f32 %v913, %v952
      %v961 = vmul.f32 %v915, %v953
      %v962 = vmul.f32 %v917, %v954
      %v963 = vmul.f32 %v919, %v955
      %v964 = vmul.f32 %v921, %v956
      %v965 = vmul.f32 %v923, %v957
      %v966 = vmul.f32 %v925, %v958
      %v967 = vmul.f32 %v927, %v959
      %v968 = vpack.c.bf16 %v961, %v960
      %v969 = vpack.c.bf16 %v963, %v962
      %v970 = vpack.c.bf16 %v965, %v964
      %v971 = vpack.c.bf16 %v967, %v966
      %972 = vrot.lane.b32.xlu0 %v645, 64
      %v973 = vpop.permute.xlu0 %972
      %v976 = vsel %vm879, %v968, 0
      %978 = vmatprep.subr.bf16.mxu0 0
      %979 = vmatpush1.bf16.msra.mxu0 %v973
      %980 = vmatprep.subr.bf16.mxu0 0
      %981 = vmatpush1.bf16.msra.mxu0 0
      %982 = vmatprep.subr.bf16.mxu0 0
      %983 = vmatpush1.bf16.msra.mxu0 0
      %984 = vmatprep.subr.bf16.mxu0 0
      %985 = vmatpush1.bf16.msra.mxu0 0
      %986 = vmatprep.subr.bf16.mxu0 0
      %987 = vmatpush1.bf16.msra.mxu0 0
      %988 = vmatprep.subr.bf16.mxu0 0
      %989 = vmatpush1.bf16.msra.mxu0 0
      %990 = vmatprep.subr.bf16.mxu0 0
      %991 = vmatpush1.bf16.msra.mxu0 0
      %992 = vmatprep.subr.bf16.mxu0 0
      %993 = vmatpush1.bf16.msra.mxu0 0
      %994 = vmatprep.subr.bf16.mxu0 0
      %995 = vmatpush1.bf16.msra.mxu0 0
      %996 = vmatprep.subr.bf16.mxu0 0
      %997 = vmatpush1.bf16.msra.mxu0 0
      %998 = vmatprep.subr.bf16.mxu0 0
      %999 = vmatpush1.bf16.msra.mxu0 0
      %1000 = vmatprep.subr.bf16.mxu0 0
      %1001 = vmatpush1.bf16.msra.mxu0 0
      %1002 = vmatprep.subr.bf16.mxu0 0
      %1003 = vmatpush1.bf16.msra.mxu0 0
      %1004 = vmatprep.subr.bf16.mxu0 0
      %1005 = vmatpush1.bf16.msra.mxu0 0
      %1006 = vmatprep.subr.bf16.mxu0 0
      %1007 = vmatpush1.bf16.msra.mxu0 0
      %1008 = vmatprep.subr.bf16.mxu0 0
      %1009 = vmatpush1.bf16.msra.mxu0 0
      %1010 = vmatprep.mubr.bf16.mxu0 0
      %1011 = vmatmul.mubr.bf16.gmra.mrb[0].mxu0 %v976
      %v1012 = vpop.f32.mrb[0].mxu0
      %v1013 = vadd.f32 0.0, %v1012
      %v1014 = vpop.f32.mrb[0].mxu0
      %v1015 = vpop.f32.mrb[0].mxu0
      %v1016 = vadd.f32 0.0, %v1015
      %v1017 = vpop.f32.mrb[0].mxu0
      %1018 = vdwg.mxu0
      %1019 = vrot.lane.b32.xlu0 %v646, 64
      %v1020 = vpop.permute.xlu0 %1019
      %v1023 = vsel %vm879, %v969, 0
      %1025 = vmatprep.subr.bf16.mxu0 0
      %1026 = vmatpush1.bf16.msra.mxu0 %v1020
      %1027 = vmatprep.subr.bf16.mxu0 0
      %1028 = vmatpush1.bf16.msra.mxu0 0
      %1029 = vmatprep.subr.bf16.mxu0 0
      %1030 = vmatpush1.bf16.msra.mxu0 0
      %1031 = vmatprep.subr.bf16.mxu0 0
      %1032 = vmatpush1.bf16.msra.mxu0 0
      %1033 = vmatprep.subr.bf16.mxu0 0
      %1034 = vmatpush1.bf16.msra.mxu0 0
      %1035 = vmatprep.subr.bf16.mxu0 0
      %1036 = vmatpush1.bf16.msra.mxu0 0
      %1037 = vmatprep.subr.bf16.mxu0 0
      %1038 = vmatpush1.bf16.msra.mxu0 0
      %1039 = vmatprep.subr.bf16.mxu0 0
      %1040 = vmatpush1.bf16.msra.mxu0 0
      %1041 = vmatprep.subr.bf16.mxu0 0
      %1042 = vmatpush1.bf16.msra.mxu0 0
      %1043 = vmatprep.subr.bf16.mxu0 0
      %1044 = vmatpush1.bf16.msra.mxu0 0
      %1045 = vmatprep.subr.bf16.mxu0 0
      %1046 = vmatpush1.bf16.msra.mxu0 0
      %1047 = vmatprep.subr.bf16.mxu0 0
      %1048 = vmatpush1.bf16.msra.mxu0 0
      %1049 = vmatprep.subr.bf16.mxu0 0
      %1050 = vmatpush1.bf16.msra.mxu0 0
      %1051 = vmatprep.subr.bf16.mxu0 0
      %1052 = vmatpush1.bf16.msra.mxu0 0
      %1053 = vmatprep.subr.bf16.mxu0 0
      %1054 = vmatpush1.bf16.msra.mxu0 0
      %1055 = vmatprep.subr.bf16.mxu0 0
      %1056 = vmatpush1.bf16.msra.mxu0 0
      %1057 = vmatprep.mubr.bf16.mxu0 0
      %1058 = vmatmul.mubr.bf16.gmra.mrb[0].mxu0 %v1023
      %v1059 = vpop.f32.mrb[0].mxu0
      %v1060 = vadd.f32 0.0, %v1059
      %v1061 = vpop.f32.mrb[0].mxu0
      %v1062 = vpop.f32.mrb[0].mxu0
      %v1063 = vadd.f32 0.0, %v1062
      %v1064 = vpop.f32.mrb[0].mxu0
      %1065 = vdwg.mxu0
      %1066 = vrot.lane.b32.xlu0 %v647, 64
      %v1067 = vpop.permute.xlu0 %1066
      %v1070 = vsel %vm879, %v970, 0
      %1072 = vmatprep.subr.bf16.mxu0 0
      %1073 = vmatpush1.bf16.msra.mxu0 %v1067
      %1074 = vmatprep.subr.bf16.mxu0 0
      %1075 = vmatpush1.bf16.msra.mxu0 0
      %1076 = vmatprep.subr.bf16.mxu0 0
      %1077 = vmatpush1.bf16.msra.mxu0 0
      %1078 = vmatprep.subr.bf16.mxu0 0
      %1079 = vmatpush1.bf16.msra.mxu0 0
      %1080 = vmatprep.subr.bf16.mxu0 0
      %1081 = vmatpush1.bf16.msra.mxu0 0
      %1082 = vmatprep.subr.bf16.mxu0 0
      %1083 = vmatpush1.bf16.msra.mxu0 0
      %1084 = vmatprep.subr.bf16.mxu0 0
      %1085 = vmatpush1.bf16.msra.mxu0 0
      %1086 = vmatprep.subr.bf16.mxu0 0
      %1087 = vmatpush1.bf16.msra.mxu0 0
      %1088 = vmatprep.subr.bf16.mxu0 0
      %1089 = vmatpush1.bf16.msra.mxu0 0
      %1090 = vmatprep.subr.bf16.mxu0 0
      %1091 = vmatpush1.bf16.msra.mxu0 0
      %1092 = vmatprep.subr.bf16.mxu0 0
      %1093 = vmatpush1.bf16.msra.mxu0 0
      %1094 = vmatprep.subr.bf16.mxu0 0
      %1095 = vmatpush1.bf16.msra.mxu0 0
      %1096 = vmatprep.subr.bf16.mxu0 0
      %1097 = vmatpush1.bf16.msra.mxu0 0
      %1098 = vmatprep.subr.bf16.mxu0 0
      %1099 = vmatpush1.bf16.msra.mxu0 0
      %1100 = vmatprep.subr.bf16.mxu0 0
      %1101 = vmatpush1.bf16.msra.mxu0 0
      %1102 = vmatprep.subr.bf16.mxu0 0
      %1103 = vmatpush1.bf16.msra.mxu0 0
      %1104 = vmatprep.mubr.bf16.mxu0 0
      %1105 = vmatmul.mubr.bf16.gmra.mrb[0].mxu0 %v1070
      %v1106 = vpop.f32.mrb[0].mxu0
      %v1107 = vadd.f32 0.0, %v1106
      %v1108 = vpop.f32.mrb[0].mxu0
      %v1109 = vpop.f32.mrb[0].mxu0
      %v1110 = vadd.f32 0.0, %v1109
      %v1111 = vpop.f32.mrb[0].mxu0
      %1112 = vdwg.mxu0
      %1113 = vrot.lane.b32.xlu0 %v648, 64
      %v1114 = vpop.permute.xlu0 %1113
      %v1117 = vsel %vm879, %v971, 0
      %1119 = vmatprep.subr.bf16.mxu0 0
      %1120 = vmatpush1.bf16.msra.mxu0 %v1114
      %1121 = vmatprep.subr.bf16.mxu0 0
      %1122 = vmatpush1.bf16.msra.mxu0 0
      %1123 = vmatprep.subr.bf16.mxu0 0
      %1124 = vmatpush1.bf16.msra.mxu0 0
      %1125 = vmatprep.subr.bf16.mxu0 0
      %1126 = vmatpush1.bf16.msra.mxu0 0
      %1127 = vmatprep.subr.bf16.mxu0 0
      %1128 = vmatpush1.bf16.msra.mxu0 0
      %1129 = vmatprep.subr.bf16.mxu0 0
      %1130 = vmatpush1.bf16.msra.mxu0 0
      %1131 = vmatprep.subr.bf16.mxu0 0
      %1132 = vmatpush1.bf16.msra.mxu0 0
      %1133 = vmatprep.subr.bf16.mxu0 0
      %1134 = vmatpush1.bf16.msra.mxu0 0
      %1135 = vmatprep.subr.bf16.mxu0 0
      %1136 = vmatpush1.bf16.msra.mxu0 0
      %1137 = vmatprep.subr.bf16.mxu0 0
      %1138 = vmatpush1.bf16.msra.mxu0 0
      %1139 = vmatprep.subr.bf16.mxu0 0
      %1140 = vmatpush1.bf16.msra.mxu0 0
      %1141 = vmatprep.subr.bf16.mxu0 0
      %1142 = vmatpush1.bf16.msra.mxu0 0
      %1143 = vmatprep.subr.bf16.mxu0 0
      %1144 = vmatpush1.bf16.msra.mxu0 0
      %1145 = vmatprep.subr.bf16.mxu0 0
      %1146 = vmatpush1.bf16.msra.mxu0 0
      %1147 = vmatprep.subr.bf16.mxu0 0
      %1148 = vmatpush1.bf16.msra.mxu0 0
      %1149 = vmatprep.subr.bf16.mxu0 0
      %1150 = vmatpush1.bf16.msra.mxu0 0
      %1151 = vmatprep.mubr.bf16.mxu0 0
      %1152 = vmatmul.mubr.bf16.gmra.mrb[0].mxu0 %v1117
      %v1153 = vpop.f32.mrb[0].mxu0
      %v1154 = vadd.f32 0.0, %v1153
      %v1155 = vpop.f32.mrb[0].mxu0
      %v1156 = vpop.f32.mrb[0].mxu0
      %v1157 = vadd.f32 0.0, %v1156
      %v1158 = vpop.f32.mrb[0].mxu0
      %1159 = vdwg.mxu0
      %1162 = vrot.lane.b32.xlu0 %v1060, 8
      %v1163 = vpop.permute.xlu0 %1162
      %1164 = vrot.lane.b32.xlu0 %v1063, 8
      %v1165 = vpop.permute.xlu0 %1164
      %1170 = vrot.lane.b32.xlu0 %v1107, 16
      %v1171 = vpop.permute.xlu0 %1170
      %1172 = vrot.lane.b32.xlu0 %v1110, 16
      %v1173 = vpop.permute.xlu0 %1172
      %1178 = vrot.lane.b32.xlu0 %v1154, 24
      %v1179 = vpop.permute.xlu0 %1178
      %1180 = vrot.lane.b32.xlu0 %v1157, 24
      %v1181 = vpop.permute.xlu0 %1180
      %v1184 = vsel %vm652, %v1013, %v1163
      %v1185 = vsel %vm652, %v1016, %v1165
      %v1186 = vsel %vm879, %v1184, %v1171
      %v1187 = vsel %vm879, %v1185, %v1173
      %vm1188 = vcmask 195584
      %v1189 = vsel %vm1188, %v1186, %v1179
      %v1190 = vsel %vm1188, %v1187, %v1181
      %v1191 = vpack.c.bf16 %v1190, %v1189
      %v1192 = vld [vmem:[%s5] sm:$0xf]
      %v1193 = vld [vmem:[%s5 + $0x4] sm:$0xf]
      %v1194 = vld [vmem:[%s5 + $0x8] sm:$0xf]
      %v1195 = vld [vmem:[%s5 + $0xc] sm:$0xf]
      %v1196 = vld [vmem:[%s6] sm:$0x1]
      %v1198 = vlaneseq
      %v1199 = vshrl.u32 %v1198, 7
      %v1200 = vsub.s32 0, %v1199
      %v1201 = vrot.slane %v1196, %v1200
      %v1207 = vunpack.c.l.b16 %v1192
      %v1208 = vunpack.c.l.b16 %v1193
      %v1209 = vunpack.c.l.b16 %v1194
      %v1210 = vunpack.c.l.b16 %v1195
      %v1211 = vpack.c.b16 %v1208, %v1207
      %v1212 = vpack.c.b16 %v1210, %v1209
      %v1216 = vsel %vm487, %v1191, 0
      %1218 = vmatprep.subr.bf16.mxu0 0
      %1219 = vmatpush1.bf16.msra.mxu0 %v1211
      %1220 = vmatprep.subr.bf16.mxu0 0
      %1221 = vmatpush1.bf16.msra.mxu0 %v1212
      %1222 = vmatprep.subr.bf16.mxu0 0
      %1223 = vmatpush1.bf16.msra.mxu0 0
      %1224 = vmatprep.subr.bf16.mxu0 0
      %1225 = vmatpush1.bf16.msra.mxu0 0
      %1226 = vmatprep.subr.bf16.mxu0 0
      %1227 = vmatpush1.bf16.msra.mxu0 0
      %1228 = vmatprep.subr.bf16.mxu0 0
      %1229 = vmatpush1.bf16.msra.mxu0 0
      %1230 = vmatprep.subr.bf16.mxu0 0
      %1231 = vmatpush1.bf16.msra.mxu0 0
      %1232 = vmatprep.subr.bf16.mxu0 0
      %1233 = vmatpush1.bf16.msra.mxu0 0
      %1234 = vmatprep.subr.bf16.mxu0 0
      %1235 = vmatpush1.bf16.msra.mxu0 0
      %1236 = vmatprep.subr.bf16.mxu0 0
      %1237 = vmatpush1.bf16.msra.mxu0 0
      %1238 = vmatprep.subr.bf16.mxu0 0
      %1239 = vmatpush1.bf16.msra.mxu0 0
      %1240 = vmatprep.subr.bf16.mxu0 0
      %1241 = vmatpush1.bf16.msra.mxu0 0
      %1242 = vmatprep.subr.bf16.mxu0 0
      %1243 = vmatpush1.bf16.msra.mxu0 0
      %1244 = vmatprep.subr.bf16.mxu0 0
      %1245 = vmatpush1.bf16.msra.mxu0 0
      %1246 = vmatprep.subr.bf16.mxu0 0
      %1247 = vmatpush1.bf16.msra.mxu0 0
      %1248 = vmatprep.subr.bf16.mxu0 0
      %1249 = vmatpush1.bf16.msra.mxu0 0
      %1250 = vmatprep.mubr.bf16.mxu0 0
      %1251 = vmatmul.mubr.bf16.gmra.mrb[0].mxu0 %v1216
      %v1252 = vpop.f32.mrb[0].mxu0
      %v1253 = vadd.f32 %v1201, %v1252
      %v1254 = vpop.f32.mrb[0].mxu0
      %v1255 = vpop.f32.mrb[0].mxu0
      %v1256 = vadd.f32 %v1201, %v1255
      %v1257 = vpop.f32.mrb[0].mxu0
      %1258 = vdwg.mxu0
      %v1259 = vadd.f32 %v483, %v1253
      %v1260 = vadd.f32 %v484, %v1256
      %v1261 = vld [vmem:[%s7] sm:$0x1]
      %v1262 = vld [vmem:[%s8] sm:$0x1]
      %v1263 = vsel %vm487, %v1259, 0.0
      %1264 = vadd.xlane.f32.xlu0 %v1263
      %v1265 = vpop.xlane.xlu0 %1264
      %v1266 = vsel %vm487, %v1260, 0.0
      %1267 = vadd.xlane.f32.xlu0 %v1266
      %v1268 = vpop.xlane.xlu0 %1267
      %v1269 = vmul.f32 %v1265, %v494
      %v1270 = vmul.f32 %v1268, %v494
      %v1271 = vsub.f32 %v1259, %v1269
      %v1272 = vsub.f32 %v1260, %v1270
      %v1273 = vmul.f32 %v1271, %v1271
      %v1274 = vmul.f32 %v1272, %v1272
      %v1275 = vsel %vm487, %v1273, 0.0
      %1276 = vadd.xlane.f32.xlu0 %v1275
      %v1277 = vpop.xlane.xlu0 %1276
      %v1278 = vsel %vm487, %v1274, 0.0
      %1279 = vadd.xlane.f32.xlu0 %v1278
      %v1280 = vpop.xlane.xlu0 %1279
      %v1281 = vmul.f32 %v1277, %v494
      %v1282 = vmul.f32 %v1280, %v494
      %v1283 = vadd.f32 %v1281, 1e-05
      %v1284 = vadd.f32 %v1282, 1e-05
      %v1285 = vrsqrt.pop %v1283
      %v1286 = vrsqrt.pop %v1284
      %v1287 = vmul.f32 %v1271, %v1285
      %v1288 = vmul.f32 %v1272, %v1286
      %v1290 = vlaneseq
      %v1291 = vshrl.u32 %v1290, 7
      %v1292 = vsub.s32 0, %v1291
      %v1293 = vrot.slane %v1261, %v1292
      %v1295 = vmul.f32 %v1287, %v1293
      %v1296 = vmul.f32 %v1288, %v1293
      %v1298 = vlaneseq
      %v1299 = vshrl.u32 %v1298, 7
      %v1300 = vsub.s32 0, %v1299
      %v1301 = vrot.slane %v1262, %v1300
      %v1303 = vadd.f32 %v1295, %v1301
      %v1304 = vadd.f32 %v1296, %v1301
      %v1305 = vpack.c.bf16 %v1304, %v1303
      %v1306 = vld [vmem:[%s9] sm:$0xf]
      %v1307 = vld [vmem:[%s9 + $0x4] sm:$0xf]
      %v1308 = vld [vmem:[%s9 + $0x8] sm:$0xf]
      %v1309 = vld [vmem:[%s9 + $0xc] sm:$0xf]
      %v1310 = vld [vmem:[%s10] sm:$0x1]
      %v1312 = vlaneseq
      %v1313 = vshrl.u32 %v1312, 7
      %v1314 = vsub.s32 0, %v1313
      %v1315 = vrot.slane %v1310, %v1314
      %v1321 = vunpack.c.l.b16 %v1306
      %v1322 = vunpack.c.l.b16 %v1307
      %v1323 = vunpack.c.l.b16 %v1308
      %v1324 = vunpack.c.l.b16 %v1309
      %v1325 = vpack.c.b16 %v1322, %v1321
      %v1326 = vpack.c.b16 %v1324, %v1323
      %v1330 = vsel %vm487, %v1305, 0
      %1332 = vmatprep.subr.bf16.mxu0 0
      %1333 = vmatpush1.bf16.msra.mxu0 %v1325
      %1334 = vmatprep.subr.bf16.mxu0 0
      %1335 = vmatpush1.bf16.msra.mxu0 %v1326
      %1336 = vmatprep.subr.bf16.mxu0 0
      %1337 = vmatpush1.bf16.msra.mxu0 0
      %1338 = vmatprep.subr.bf16.mxu0 0
      %1339 = vmatpush1.bf16.msra.mxu0 0
      %1340 = vmatprep.subr.bf16.mxu0 0
      %1341 = vmatpush1.bf16.msra.mxu0 0
      %1342 = vmatprep.subr.bf16.mxu0 0
      %1343 = vmatpush1.bf16.msra.mxu0 0
      %1344 = vmatprep.subr.bf16.mxu0 0
      %1345 = vmatpush1.bf16.msra.mxu0 0
      %1346 = vmatprep.subr.bf16.mxu0 0
      %1347 = vmatpush1.bf16.msra.mxu0 0
      %1348 = vmatprep.subr.bf16.mxu0 0
      %1349 = vmatpush1.bf16.msra.mxu0 0
      %1350 = vmatprep.subr.bf16.mxu0 0
      %1351 = vmatpush1.bf16.msra.mxu0 0
      %1352 = vmatprep.subr.bf16.mxu0 0
      %1353 = vmatpush1.bf16.msra.mxu0 0
      %1354 = vmatprep.subr.bf16.mxu0 0
      %1355 = vmatpush1.bf16.msra.mxu0 0
      %1356 = vmatprep.subr.bf16.mxu0 0
      %1357 = vmatpush1.bf16.msra.mxu0 0
      %1358 = vmatprep.subr.bf16.mxu0 0
      %1359 = vmatpush1.bf16.msra.mxu0 0
      %1360 = vmatprep.subr.bf16.mxu0 0
      %1361 = vmatpush1.bf16.msra.mxu0 0
      %1362 = vmatprep.subr.bf16.mxu0 0
      %1363 = vmatpush1.bf16.msra.mxu0 0
      %1364 = vmatprep.mubr.bf16.mxu0 0
      %1365 = vmatmul.mubr.bf16.gmra.mrb[0].mxu0 %v1330
      %v1366 = vpop.f32.mrb[0].mxu0
      %v1367 = vadd.f32 %v1315, %v1366
      %v1368 = vpop.f32.mrb[0].mxu0
      %v1369 = vpop.f32.mrb[0].mxu0
      %v1370 = vadd.f32 %v1315, %v1369
      %v1371 = vpop.f32.mrb[0].mxu0
      %1372 = vdwg.mxu0
      %v1373 = vmul.f32 %v1367, %v1367
      %v1374 = vmul.f32 %v1370, %v1370
      %v1375 = vmul.f32 %v1367, %v1373
      %v1376 = vmul.f32 %v1370, %v1374
      %v1377 = vmul.f32 %v1375, 0.044715
      %v1378 = vmul.f32 %v1376, 0.044715
      %v1379 = vadd.f32 %v1367, %v1377
      %v1380 = vadd.f32 %v1370, %v1378
      %v1381 = vmul.f32 %v1379, 0.7978846
      %v1382 = vmul.f32 %v1380, 0.7978846
      %v1383 = vtanh.pop %v1381
      %v1384 = vtanh.pop %v1382
      %v1385 = vadd.f32 %v1383, 1.0
      %v1386 = vadd.f32 %v1384, 1.0
      %v1387 = vmul.f32 %v1385, 0.5
      %v1388 = vmul.f32 %v1386, 0.5
      %v1389 = vmul.f32 %v1367, %v1387
      %v1390 = vmul.f32 %v1370, %v1388
      %v1391 = vpack.c.bf16 %v1390, %v1389
      %v1392 = vld [vmem:[%s11] sm:$0xf]
      %v1393 = vld [vmem:[%s11 + $0x4] sm:$0xf]
      %v1394 = vld [vmem:[%s11 + $0x8] sm:$0xf]
      %v1395 = vld [vmem:[%s11 + $0xc] sm:$0xf]
      %v1396 = vld [vmem:[%s11 + $0x10] sm:$0xf]
      %v1397 = vld [vmem:[%s11 + $0x14] sm:$0xf]
      %v1398 = vld [vmem:[%s11 + $0x18] sm:$0xf]
      %v1399 = vld [vmem:[%s11 + $0x1c] sm:$0xf]
      %v1400 = vld [vmem:[%s12] sm:$0x1]
      %v1402 = vlaneseq
      %v1403 = vshrl.u32 %v1402, 7
      %v1404 = vsub.s32 0, %v1403
      %v1405 = vrot.slane %v1400, %v1404
      %v1415 = vunpack.c.l.b16 %v1392
      %v1416 = vunpack.c.l.b16 %v1393
      %v1417 = vunpack.c.l.b16 %v1394
      %v1418 = vunpack.c.l.b16 %v1395
      %v1419 = vunpack.c.l.b16 %v1396
      %v1420 = vunpack.c.l.b16 %v1397
      %v1421 = vunpack.c.l.b16 %v1398
      %v1422 = vunpack.c.l.b16 %v1399
      %v1423 = vpack.c.b16 %v1416, %v1415
      %v1424 = vpack.c.b16 %v1418, %v1417
      %v1425 = vpack.c.b16 %v1420, %v1419
      %v1426 = vpack.c.b16 %v1422, %v1421
      %vm1431 = vcmask 523264
      %v1433 = vsel %vm1431, %v1391, 0
      %1435 = vmatprep.subr.bf16.mxu0 0
      %1436 = vmatpush1.bf16.msra.mxu0 %v1423
      %1437 = vmatprep.subr.bf16.mxu0 0
      %1438 = vmatpush1.bf16.msra.mxu0 %v1424
      %1439 = vmatprep.subr.bf16.mxu0 0
      %1440 = vmatpush1.bf16.msra.mxu0 %v1425
      %1441 = vmatprep.subr.bf16.mxu0 0
      %1442 = vmatpush1.bf16.msra.mxu0 %v1426
      %1443 = vmatprep.subr.bf16.mxu0 0
      %1444 = vmatpush1.bf16.msra.mxu0 0
      %1445 = vmatprep.subr.bf16.mxu0 0
      %1446 = vmatpush1.bf16.msra.mxu0 0
      %1447 = vmatprep.subr.bf16.mxu0 0
      %1448 = vmatpush1.bf16.msra.mxu0 0
      %1449 = vmatprep.subr.bf16.mxu0 0
      %1450 = vmatpush1.bf16.msra.mxu0 0
      %1451 = vmatprep.subr.bf16.mxu0 0
      %1452 = vmatpush1.bf16.msra.mxu0 0
      %1453 = vmatprep.subr.bf16.mxu0 0
      %1454 = vmatpush1.bf16.msra.mxu0 0
      %1455 = vmatprep.subr.bf16.mxu0 0
      %1456 = vmatpush1.bf16.msra.mxu0 0
      %1457 = vmatprep.subr.bf16.mxu0 0
      %1458 = vmatpush1.bf16.msra.mxu0 0
      %1459 = vmatprep.subr.bf16.mxu0 0
      %1460 = vmatpush1.bf16.msra.mxu0 0
      %1461 = vmatprep.subr.bf16.mxu0 0
      %1462 = vmatpush1.bf16.msra.mxu0 0
      %1463 = vmatprep.subr.bf16.mxu0 0
      %1464 = vmatpush1.bf16.msra.mxu0 0
      %1465 = vmatprep.subr.bf16.mxu0 0
      %1466 = vmatpush1.bf16.msra.mxu0 0
      %1467 = vmatprep.mubr.bf16.mxu0 0
      %1468 = vmatmul.mubr.bf16.gmra.mrb[0].mxu0 %v1433
      %v1469 = vpop.f32.mrb[0].mxu0
      %v1470 = vadd.f32 %v1405, %v1469
      %v1471 = vpop.f32.mrb[0].mxu0
      %v1472 = vpop.f32.mrb[0].mxu0
      %v1473 = vadd.f32 %v1405, %v1472
      %v1474 = vpop.f32.mrb[0].mxu0
      %1475 = vdwg.mxu0
      %v1476 = vadd.f32 %v1259, %v1470
      %v1477 = vadd.f32 %v1260, %v1473
      %1478 = vst.msk [vmem:[%s481] sm:$0xff] %vm487, %v1476
      %1479 = vst.msk [vmem:[%s481 + $0x8] sm:$0xff] %vm487, %v1477
      %p1480 = scmp.lt.s32.totalorder %s25, 1
      %s1481 = scalar_select %p1480, %s25, 1
      %s1482 = smul.addr %s1481, 2
      %s1483 = smul.addr %s1482, 8
      %s1484 = scalar_lea.vmem %s14, %s1483
      // Predicated region
      $region77: #{_lambda_.11} parent=75 // pred_check
        %p1485 = pneg %p347
      $region78: #{_lambda_.11} parent=75 // pred_check_branch
        %1487 = sbr.rel (%p1485) target = $region80
      $region79: #{_lambda_.11} parent=75 // pred_region
        _
      $region80: #{_lambda_.11} parent=75 // pred_fallthru
        _
    $region76: #{_lambda_.11} parent=5 // pred_fallthru
      _
    %p1488 = scmp.le.s32.totalorder 2, %s20
    // Predicated region
    $region81: #{_lambda_.11} parent=5 // pred_check
      %p1489 = pneg %p1488
    $region82: #{_lambda_.11} parent=5 // pred_check_branch
      %1491 = sbr.rel (%p1489) target = $region84
    $region83: #{_lambda_.11} parent=5 // pred_region
      %s1492 = ssub.s32 %s20, 2
      // Predicated region
      $region85: #{_lambda_.11} parent=83 // pred_check
        %p1493 = pneg %p353
      $region86: #{_lambda_.11} parent=83 // pred_check_branch
        %1495 = sbr.rel (%p1493) target = $region88
      $region87: #{_lambda_.11} parent=83 // pred_region
        %p1496 = scmp.lt.s32.totalorder %s26, 1
        %s1497 = scalar_select %p1496, %s26, 1
        %s1498 = smul.addr %s1497, 2
        %s1499 = smul.addr %s1498, 8
        %s1500 = scalar_lea.vmem %s14, %s1499
      $region88: #{_lambda_.11} parent=83 // pred_fallthru
        _
    $region84: #{_lambda_.11} parent=5 // pred_fallthru
      _
  $region6: #{_lambda_.11} parent=0 // loop_footer
    %s24 = sadd.s32 1, %s20
  $region7: #{_lambda_.11} parent=0 // loop_footer_branch
    %19 = sbr.rel target = $region3
  $region8: #{_lambda_.11} parent=0 // loop_exit
    _

// kernel: _lambda_.13
$region0: #{_lambda_.13}
  #allocation0 [shape = 'u32[]', space=smem, size = 0x4, offset = 0x4, fixed_abs, tag = 'smem constant byte address 0x4 - core index']
  #allocation1 [shape = 'u32[144,128]{1,0:T(1,128)}', space=vmem, size = 0x12000, scoped, tag = 'internal scratch']
  #allocation2 [shape = 'f32[16,1]{1,0:T(8,128)}', space=vmem, size = 0x2000, scoped, tag = 'scratch operand']
  #allocation3 [shape = 'f32[16,1]{1,0:T(8,128)}', space=vmem, size = 0x2000, scoped, tag = 'scratch operand']
  #allocation4 [shape = 'f32[16,1]{1,0:T(8,128)}', space=vmem, size = 0x2000, scoped, tag = 'scratch operand']
  %s0 = inlined_call_operand.vmem [shape: f32[32,32], index: 0, kind: input, shape index: {}]
  %s1 = inlined_call_operand.vmem [shape: f32[1,32], index: 1, kind: input, shape index: {}]
  %s2 = inlined_call_operand.vmem [shape: f32[1,32], index: 2, kind: input, shape index: {}]
  %s3 = inlined_call_operand.vmem [shape: bf16[256,32], index: 3, kind: input, shape index: {}]
  %s4 = inlined_call_operand.vmem [shape: s32[32,1], index: 4, kind: input, shape index: {}]
  %s5 = inlined_call_operand.vmem [shape: f32[32,1], index: 5, kind: output, shape index: {}]
  %s6 = sld [smem:[#allocation0]]
  $region61: #{_lambda_.13} parent=0
    _
  %s8 = ssub.s32 1, %s6
  %s9 = scalar_select 0, %s8, %s6
  loop: start=0, step=1, limit=6
  $region2: #{_lambda_.13} parent=0 // loop_pre_header
    _
  $region3: #{_lambda_.13} parent=0 // loop_header
    %s11 = sphi 0, %s15
    %p12 = scmp.ge.s32.totalorder %s11, 6
    %s18 = sphi 0, %s30
    %s19 = sphi 0, %s26
    %s20 = sphi 0, %s18
    %s21 = sphi 0, %s19
    %s22 = sphi 0, %s20
    %s23 = sphi 0, %s21
    %s33 = sphi 0, %s35
    %s36 = sphi 0, %s33
    %s37 = sphi 0, %s36
    %s53 = sphi 0, %s37
    %s57 = sphi 0, %s57
    %s59 = sphi 0, %s57
    %s60 = sphi 0, %s59
    %s74 = sphi 0, %s60
    %s78 = sphi 0, %s78
    %s80 = sphi 0, %s78
    %s81 = sphi 0, %s80
    %s95 = sphi 0, %s81
    %s101 = sphi 0, %s103
    %s104 = sphi 0, %s101
    %s105 = sphi 0, %s104
    %s121 = sphi 0, %s105
    %s127 = sphi 0, %s129
    %s130 = sphi 0, %s127
    %s131 = sphi 0, %s130
    %s147 = sphi 0, %s131
    %s153 = sphi 0, %s155
    %s156 = sphi 0, %s153
    %s157 = sphi 0, %s156
    %s173 = sphi 0, %s157
  $region4: #{_lambda_.13} parent=0 // loop_header_branch
    %14 = sbr.rel (%p12) target = $region8
  $region5: #{_lambda_.13} parent=0 // loop_body
    %s16 = ssub.s32 %s11, 1
    %s17 = ssub.s32 %s11, 2
    %s24 = sadd.s32 1, %s19
    %p25 = scmp.ge.s32.totalorder %s24, 2
    %s26 = scalar_select %p25, 0, %s24
    %s27 = sadd.s32 1, %s18
    %s28 = scalar_select %p25, %s27, %s18
    %p29 = scmp.ge.s32.totalorder %s28, 2
    %s30 = scalar_select %p29, 0, %s28
    %s31 = ssub.s32 %s18, %s30
    %p32 = scmp.eq.s32.totalorder %s31, 0
    %s34 = sadd.s32 %s33, 1
    %s35 = scalar_select %p32, %s33, %s34
    %p38 = pneg %p32
    %p39 = scmp.eq.s32.totalorder %s11, 3
    %p40 = por %p38, %p39
    %p41 = scmp.ne.s32.totalorder %s33, %s36
    %p42 = scmp.eq.s32.totalorder %s11, 0
    %p43 = por %p41, %p42
    %p44 = scmp.ne.s32.totalorder %s33, %s36
    %p45 = scmp.eq.s32.totalorder %s16, 3
    %p46 = por %p44, %p45
    %p47 = scmp.ne.s32.totalorder %s36, %s37
    %p48 = scmp.eq.s32.totalorder %s16, 0
    %p49 = por %p47, %p48
    %p50 = scmp.ne.s32.totalorder %s36, %s37
    %p51 = scmp.eq.s32.totalorder %s17, 3
    %p52 = por %p50, %p51
    %p54 = scmp.ne.s32.totalorder %s37, %s53
    %p55 = scmp.eq.s32.totalorder %s17, 0
    %p56 = por %p54, %p55
    %s58 = sadd.s32 %s57, 1
    %p61 = scmp.eq.s32.totalorder %s11, 3
    %p62 = scmp.ne.s32.totalorder %s57, %s59
    %p63 = scmp.eq.s32.totalorder %s11, 0
    %p64 = por %p62, %p63
    %p65 = scmp.ne.s32.totalorder %s57, %s59
    %p66 = scmp.eq.s32.totalorder %s16, 3
    %p67 = por %p65, %p66
    %p68 = scmp.ne.s32.totalorder %s59, %s60
    %p69 = scmp.eq.s32.totalorder %s16, 0
    %p70 = por %p68, %p69
    %p71 = scmp.ne.s32.totalorder %s59, %s60
    %p72 = scmp.eq.s32.totalorder %s17, 3
    %p73 = por %p71, %p72
    %p75 = scmp.ne.s32.totalorder %s60, %s74
    %p76 = scmp.eq.s32.totalorder %s17, 0
    %p77 = por %p75, %p76
    %s79 = sadd.s32 %s78, 1
    %p82 = scmp.eq.s32.totalorder %s11, 3
    %p83 = scmp.ne.s32.totalorder %s78, %s80
    %p84 = scmp.eq.s32.totalorder %s11, 0
    %p85 = por %p83, %p84
    %p86 = scmp.ne.s32.totalorder %s78, %s80
    %p87 = scmp.eq.s32.totalorder %s16, 3
    %p88 = por %p86, %p87
    %p89 = scmp.ne.s32.totalorder %s80, %s81
    %p90 = scmp.eq.s32.totalorder %s16, 0
    %p91 = por %p89, %p90
    %p92 = scmp.ne.s32.totalorder %s80, %s81
    %p93 = scmp.eq.s32.totalorder %s17, 3
    %p94 = por %p92, %p93
    %p96 = scmp.ne.s32.totalorder %s81, %s95
    %p97 = scmp.eq.s32.totalorder %s17, 0
    %p98 = por %p96, %p97
    %s99 = ssub.s32 %s19, %s26
    %p100 = scmp.eq.s32.totalorder %s99, 0
    %s102 = sadd.s32 %s101, 1
    %s103 = scalar_select %p100, %s101, %s102
    %p106 = pneg %p100
    %p107 = scmp.eq.s32.totalorder %s11, 3
    %p108 = por %p106, %p107
    %p109 = scmp.ne.s32.totalorder %s101, %s104
    %p110 = scmp.eq.s32.totalorder %s11, 0
    %p111 = por %p109, %p110
    %p112 = scmp.ne.s32.totalorder %s101, %s104
    %p113 = scmp.eq.s32.totalorder %s16, 3
    %p114 = por %p112, %p113
    %p115 = scmp.ne.s32.totalorder %s104, %s105
    %p116 = scmp.eq.s32.totalorder %s16, 0
    %p117 = por %p115, %p116
    %p118 = scmp.ne.s32.totalorder %s104, %s105
    %p119 = scmp.eq.s32.totalorder %s17, 3
    %p120 = por %p118, %p119
    %p122 = scmp.ne.s32.totalorder %s105, %s121
    %p123 = scmp.eq.s32.totalorder %s17, 0
    %p124 = por %p122, %p123
    %s125 = ssub.s32 %s18, %s30
    %p126 = scmp.eq.s32.totalorder %s125, 0
    %s128 = sadd.s32 %s127, 1
    %s129 = scalar_select %p126, %s127, %s128
    %p132 = pneg %p126
    %p133 = scmp.eq.s32.totalorder %s11, 3
    %p134 = por %p132, %p133
    %p135 = scmp.ne.s32.totalorder %s127, %s130
    %p136 = scmp.eq.s32.totalorder %s11, 0
    %p137 = por %p135, %p136
    %p138 = scmp.ne.s32.totalorder %s127, %s130
    %p139 = scmp.eq.s32.totalorder %s16, 3
    %p140 = por %p138, %p139
    %p141 = scmp.ne.s32.totalorder %s130, %s131
    %p142 = scmp.eq.s32.totalorder %s16, 0
    %p143 = por %p141, %p142
    %p144 = scmp.ne.s32.totalorder %s130, %s131
    %p145 = scmp.eq.s32.totalorder %s17, 3
    %p146 = por %p144, %p145
    %p148 = scmp.ne.s32.totalorder %s131, %s147
    %p149 = scmp.eq.s32.totalorder %s17, 0
    %p150 = por %p148, %p149
    %s151 = ssub.s32 %s18, %s30
    %p152 = scmp.eq.s32.totalorder %s151, 0
    %s154 = sadd.s32 %s153, 1
    %s155 = scalar_select %p152, %s153, %s154
    %p158 = pneg %p152
    %p159 = scmp.eq.s32.totalorder %s11, 3
    %p160 = por %p158, %p159
    %p161 = scmp.ne.s32.totalorder %s153, %s156
    %p162 = scmp.eq.s32.totalorder %s11, 0
    %p163 = por %p161, %p162
    %p164 = scmp.ne.s32.totalorder %s153, %s156
    %p165 = scmp.eq.s32.totalorder %s16, 3
    %p166 = por %p164, %p165
    %p167 = scmp.ne.s32.totalorder %s156, %s157
    %p168 = scmp.eq.s32.totalorder %s16, 0
    %p169 = por %p167, %p168
    %p170 = scmp.ne.s32.totalorder %s156, %s157
    %p171 = scmp.eq.s32.totalorder %s17, 3
    %p172 = por %p170, %p171
    %p174 = scmp.ne.s32.totalorder %s157, %s173
    %p175 = scmp.eq.s32.totalorder %s17, 0
    %p176 = por %p174, %p175
    %p177 = scmp.le.s32.totalorder 1, %s11
    %p178 = scmp.lt.s32.totalorder %s11, 5
    %p179 = pnand %p177, %p178
    %p180 = pneg %p179
    // Predicated region
    $region9: #{_lambda_.13} parent=5 // pred_check
      _
    $region10: #{_lambda_.13} parent=5 // pred_check_branch
      %182 = sbr.rel (%p179) target = $region12
    $region11: #{_lambda_.13} parent=5 // pred_region
      %s183 = ssub.s32 %s11, 1
      // Predicated region
      $region13: #{_lambda_.13} parent=11 // pred_check
        %p184 = pneg %p70
      $region14: #{_lambda_.13} parent=11 // pred_check_branch
        %186 = sbr.rel (%p184) target = $region16
      $region15: #{_lambda_.13} parent=11 // pred_region
        _
      $region16: #{_lambda_.13} parent=11 // pred_fallthru
        _
      // Predicated region
      $region17: #{_lambda_.13} parent=11 // pred_check
        %p187 = pneg %p91
      $region18: #{_lambda_.13} parent=11 // pred_check_branch
        %189 = sbr.rel (%p187) target = $region20
      $region19: #{_lambda_.13} parent=11 // pred_region
        _
      $region20: #{_lambda_.13} parent=11 // pred_fallthru
        _
    $region12: #{_lambda_.13} parent=5 // pred_fallthru
      _
    %p190 = scmp.lt.s32.totalorder %s11, 4
    // Predicated region
    $region21: #{_lambda_.13} parent=5 // pred_check
      %p191 = pneg %p190
    $region22: #{_lambda_.13} parent=5 // pred_check_branch
      %193 = sbr.rel (%p191) target = $region24
    $region23: #{_lambda_.13} parent=5 // pred_region
      // Predicated region
      $region25: #{_lambda_.13} parent=23 // pred_check
        %p194 = pneg %p43
      $region26: #{_lambda_.13} parent=23 // pred_check_branch
        %196 = sbr.rel (%p194) target = $region28
      $region27: #{_lambda_.13} parent=23 // pred_region
        %s197 = smul.u32 2, %s18
        %p198 = scmp.lt.s32.totalorder %s197, 3
        %s199 = scalar_select %p198, %s197, 3
        %s200 = smul.addr %s199, 8
        %s201 = scalar_lea.vmem %s0, %s200
        %s202 = smul.u32 2, %s18
      $region28: #{_lambda_.13} parent=23 // pred_fallthru
        _
      // Predicated region
      $region29: #{_lambda_.13} parent=23 // pred_check
        %p203 = pneg %p111
      $region30: #{_lambda_.13} parent=23 // pred_check_branch
        %205 = sbr.rel (%p203) target = $region32
      $region31: #{_lambda_.13} parent=23 // pred_region
        %s206 = smul.u32 16, %s19
        %p207 = scmp.lt.s32.totalorder %s206, 31
        %s208 = scalar_select %p207, %s206, 31
        %s209 = smul.addr %s208, 4
        %s210 = scalar_lea.vmem %s3, %s209
        %s211 = smul.u32 16, %s19
      $region32: #{_lambda_.13} parent=23 // pred_fallthru
        _
      // Predicated region
      $region33: #{_lambda_.13} parent=23 // pred_check
        %p212 = pneg %p137
      $region34: #{_lambda_.13} parent=23 // pred_check_branch
        %214 = sbr.rel (%p212) target = $region36
      $region35: #{_lambda_.13} parent=23 // pred_region
        %s215 = smul.u32 2, %s18
        %p216 = scmp.lt.s32.totalorder %s215, 3
        %s217 = scalar_select %p216, %s215, 3
        %s218 = smul.addr %s217, 8
        %s219 = scalar_lea.vmem %s4, %s218
        %s220 = smul.u32 2, %s18
      $region36: #{_lambda_.13} parent=23 // pred_fallthru
        _
    $region24: #{_lambda_.13} parent=5 // pred_fallthru
      _
    %p221 = scmp.le.s32.totalorder 1, %s11
    %p222 = scmp.lt.s32.totalorder %s11, 5
    %p223 = pnand %p221, %p222
    %p224 = pneg %p223
    // Predicated region
    $region37: #{_lambda_.13} parent=5 // pred_check
      _
    $region38: #{_lambda_.13} parent=5 // pred_check_branch
      %226 = sbr.rel (%p223) target = $region40
    $region39: #{_lambda_.13} parent=5 // pred_region
      %s227 = ssub.s32 %s11, 1
      %s228 = smul.u32 2, %s20
      %p229 = scmp.lt.s32.totalorder %s228, 3
      %s230 = scalar_select %p229, %s228, 3
      %s231 = smul.addr %s230, 8
      %s232 = scalar_lea.vmem %s0, %s231
      %p233 = pneg %p49
      %p234 = pneg %p46
      %p235 = pneg %p70
      %p236 = pneg %p67
      %p237 = pneg %p91
      %p238 = pneg %p88
      %s239 = smul.u32 16, %s21
      %p240 = scmp.lt.s32.totalorder %s239, 31
      %s241 = scalar_select %p240, %s239, 31
      %s242 = smul.addr %s241, 4
      %s243 = scalar_lea.vmem %s3, %s242
      %p244 = pneg %p117
      %p245 = pneg %p114
      %s246 = smul.u32 2, %s20
      %p247 = scmp.lt.s32.totalorder %s246, 3
      %s248 = scalar_select %p247, %s246, 3
      %s249 = smul.addr %s248, 8
      %s250 = scalar_lea.vmem %s4, %s249
      %p251 = pneg %p143
      %p252 = pneg %p140
      %p253 = pneg %p169
      %p254 = pneg %p166
      %s255 = smul.u32 2, %s20
      %p256 = scmp.lt.s32.totalorder %s255, 3
      %s257 = scalar_select %p256, %s255, 3
      %s258 = smul.addr %s257, 8
      %s259 = scalar_lea.vmem %s5, %s258
      %s260 = smul.u32 2, %s20
      %p261 = scmp.lt.s32.totalorder %s260, 3
      %s262 = scalar_select %p261, %s260, 3
      %s263 = smul.addr %s262, 8
      %s264 = scalar_lea.vmem %s0, %s263
      %s265 = smul.u32 2, %s20
      %s266 = smul.u32 16, %s21
      %p267 = scmp.lt.s32.totalorder %s266, 31
      %s268 = scalar_select %p267, %s266, 31
      %s269 = smul.addr %s268, 4
      %s270 = scalar_lea.vmem %s3, %s269
      %s271 = smul.u32 16, %s21
      %s272 = smul.u32 2, %s20
      %p273 = scmp.lt.s32.totalorder %s272, 3
      %s274 = scalar_select %p273, %s272, 3
      %s275 = smul.addr %s274, 8
      %s276 = scalar_lea.vmem %s4, %s275
      %s277 = smul.u32 2, %s20
      %s278 = smul.u32 2, %s20
      %p279 = scmp.lt.s32.totalorder %s278, 3
      %s280 = scalar_select %p279, %s278, 3
      %s281 = smul.addr %s280, 8
      %s282 = scalar_lea.vmem %s5, %s281
      %s283 = smul.u32 2, %s20
      %p285 = scmp.eq.s32.totalorder %s21, 0
      // Predicated region
      $region41: #{_lambda_.13} parent=39 // pred_check
        %p286 = pneg %p285
      $region42: #{_lambda_.13} parent=39 // pred_check_branch
        %288 = sbr.rel (%p286) target = $region44
      $region43: #{_lambda_.13} parent=39 // pred_region
        %vm289 = vcmask 7168
        %290 = vst.msk [vmem:[#allocation2] sm:$0xff] %vm289, -inf
        %291 = vst.msk [vmem:[#allocation2 + $0x8] sm:$0xff] %vm289, -inf
        %292 = vst.msk [vmem:[#allocation3] sm:$0xff] %vm289, 0.0
        %293 = vst.msk [vmem:[#allocation3 + $0x8] sm:$0xff] %vm289, 0.0
        %294 = vst.msk [vmem:[#allocation4] sm:$0xff] %vm289, 0.0
        %295 = vst.msk [vmem:[#allocation4 + $0x8] sm:$0xff] %vm289, 0.0
      $region44: #{_lambda_.13} parent=39 // pred_fallthru
        _
      %v296 = vld [vmem:[%s264] sm:$0xff]
      %v297 = vld [vmem:[%s264 + $0x8] sm:$0xff]
      %v298 = vld [vmem:[%s1] sm:$0x1]
      %v299 = vld [vmem:[%s2] sm:$0x1]
      %vm300 = vcmask 261120
      %v301 = vsel %vm300, %v296, 0.0
      %302 = vadd.xlane.f32.xlu0 %v301
      %v303 = vpop.xlane.xlu0 %302
      %v304 = vsel %vm300, %v297, 0.0
      %305 = vadd.xlane.f32.xlu0 %v304
      %v306 = vpop.xlane.xlu0 %305
      %v307 = vrcp.pop 32.0
      %v308 = vmul.f32 %v303, %v307
      %v309 = vmul.f32 %v306, %v307
      %v310 = vsub.f32 %v296, %v308
      %v311 = vsub.f32 %v297, %v309
      %v312 = vmul.f32 %v310, %v310
      %v313 = vmul.f32 %v311, %v311
      %v314 = vsel %vm300, %v312, 0.0
      %315 = vadd.xlane.f32.xlu0 %v314
      %v316 = vpop.xlane.xlu0 %315
      %v317 = vsel %vm300, %v313, 0.0
      %318 = vadd.xlane.f32.xlu0 %v317
      %v319 = vpop.xlane.xlu0 %318
      %v320 = vmul.f32 %v316, %v307
      %v321 = vmul.f32 %v319, %v307
      %v322 = vadd.f32 %v320, 1e-05
      %v323 = vadd.f32 %v321, 1e-05
      %v324 = vrsqrt.pop %v322
      %v325 = vrsqrt.pop %v323
      %v326 = vmul.f32 %v310, %v324
      %v327 = vmul.f32 %v311, %v325
      %v329 = vlaneseq
      %v330 = vshrl.u32 %v329, 7
      %v331 = vsub.s32 0, %v330
      %v332 = vrot.slane %v298, %v331
      %v334 = vmul.f32 %v326, %v332
      %v335 = vmul.f32 %v327, %v332
      %v337 = vlaneseq
      %v338 = vshrl.u32 %v337, 7
      %v339 = vsub.s32 0, %v338
      %v340 = vrot.slane %v299, %v339
      %v342 = vadd.f32 %v334, %v340
      %v343 = vadd.f32 %v335, %v340
      %v344 = vpack.c.bf16 %v343, %v342
      %v345 = vld [vmem:[%s270] sm:$0xf]
      %v346 = vld [vmem:[%s270 + $0x4] sm:$0xf]
      %v347 = vld [vmem:[%s270 + $0x8] sm:$0xf]
      %v348 = vld [vmem:[%s270 + $0xc] sm:$0xf]
      %v349 = vld [vmem:[%s270 + $0x10] sm:$0xf]
      %v350 = vld [vmem:[%s270 + $0x14] sm:$0xf]
      %v351 = vld [vmem:[%s270 + $0x18] sm:$0xf]
      %v352 = vld [vmem:[%s270 + $0x1c] sm:$0xf]
      %v353 = vld [vmem:[%s270 + $0x20] sm:$0xf]
      %v354 = vld [vmem:[%s270 + $0x24] sm:$0xf]
      %v355 = vld [vmem:[%s270 + $0x28] sm:$0xf]
      %v356 = vld [vmem:[%s270 + $0x2c] sm:$0xf]
      %v357 = vld [vmem:[%s270 + $0x30] sm:$0xf]
      %v358 = vld [vmem:[%s270 + $0x34] sm:$0xf]
      %v359 = vld [vmem:[%s270 + $0x38] sm:$0xf]
      %v360 = vld [vmem:[%s270 + $0x3c] sm:$0xf]
      %v377 = vunpack.c.l.b16 %v345
      %v378 = vunpack.c.l.b16 %v346
      %v379 = vunpack.c.l.b16 %v347
      %v380 = vunpack.c.l.b16 %v348
      %v381 = vunpack.c.l.b16 %v349
      %v382 = vunpack.c.l.b16 %v350
      %v383 = vunpack.c.l.b16 %v351
      %v384 = vunpack.c.l.b16 %v352
      %v385 = vunpack.c.l.b16 %v353
      %v386 = vunpack.c.l.b16 %v354
      %v387 = vunpack.c.l.b16 %v355
      %v388 = vunpack.c.l.b16 %v356
      %v389 = vunpack.c.l.b16 %v357
      %v390 = vunpack.c.l.b16 %v358
      %v391 = vunpack.c.l.b16 %v359
      %v392 = vunpack.c.l.b16 %v360
      %v393 = vpack.c.b16 %v378, %v377
      %v394 = vpack.c.b16 %v380, %v379
      %v395 = vpack.c.b16 %v382, %v381
      %v396 = vpack.c.b16 %v384, %v383
      %v397 = vpack.c.b16 %v386, %v385
      %v398 = vpack.c.b16 %v388, %v387
      %v399 = vpack.c.b16 %v390, %v389
      %v400 = vpack.c.b16 %v392, %v391
      %v402 = vsel %vm300, %v344, 0
      %v405 = vsel %vm300, %v393, 0
      %v408 = vsel %vm300, %v394, 0
      %v411 = vsel %vm300, %v395, 0
      %v414 = vsel %vm300, %v396, 0
      %v417 = vsel %vm300, %v397, 0
      %v420 = vsel %vm300, %v398, 0
      %v423 = vsel %vm300, %v399, 0
      %v426 = vsel %vm300, %v400, 0
      %428 = vmatprep.subr.bf16.mxu0 0
      %429 = vmatpush1.bf16.xpose.msra.mxu0 %v405
      %430 = vmatprep.subr.bf16.mxu0 0
      %431 = vmatpush1.bf16.xpose.msra.mxu0 %v408
      %432 = vmatprep.subr.bf16.mxu0 0
      %433 = vmatpush1.bf16.xpose.msra.mxu0 %v411
      %434 = vmatprep.subr.bf16.mxu0 0
      %435 = vmatpush1.bf16.xpose.msra.mxu0 %v414
      %436 = vmatprep.subr.bf16.mxu0 0
      %437 = vmatpush1.bf16.xpose.msra.mxu0 %v417
      %438 = vmatprep.subr.bf16.mxu0 0
      %439 = vmatpush1.bf16.xpose.msra.mxu0 %v420
      %440 = vmatprep.subr.bf16.mxu0 0
      %441 = vmatpush1.bf16.xpose.msra.mxu0 %v423
      %442 = vmatprep.subr.bf16.mxu0 0
      %443 = vmatpush1.bf16.xpose.msra.mxu0 %v426
      %444 = vmatprep.subr.bf16.mxu0 0
      %445 = vmatpush1.bf16.xpose.msra.mxu0 0
      %446 = vmatprep.subr.bf16.mxu0 0
      %447 = vmatpush1.bf16.xpose.msra.mxu0 0
      %448 = vmatprep.subr.bf16.mxu0 0
      %449 = vmatpush1.bf16.xpose.msra.mxu0 0
      %450 = vmatprep.subr.bf16.mxu0 0
      %451 = vmatpush1.bf16.xpose.msra.mxu0 0
      %452 = vmatprep.subr.bf16.mxu0 0
      %453 = vmatpush1.bf16.xpose.msra.mxu0 0
      %454 = vmatprep.subr.bf16.mxu0 0
      %455 = vmatpush1.bf16.xpose.msra.mxu0 0
      %456 = vmatprep.subr.bf16.mxu0 0
      %457 = vmatpush1.bf16.xpose.msra.mxu0 0
      %458 = vmatprep.subr.bf16.mxu0 0
      %459 = vmatpush1.bf16.xpose.msra.mxu0 0
      %460 = vmatprep.mubr.bf16.mxu0 0
      %461 = vmatmul.mubr.bf16.gmra.mrb[0].mxu0 %v402
      %v462 = vpop.f32.mrb[0].mxu0
      %v463 = vadd.f32 0.0, %v462
      %v464 = vpop.f32.mrb[0].mxu0
      %v465 = vpop.f32.mrb[0].mxu0
      %v466 = vadd.f32 0.0, %v465
      %v467 = vpop.f32.mrb[0].mxu0
      %468 = vdwg.mxu0
      %v469 = vld [vmem:[%s276] sm:$0xff]
      %v470 = vld [vmem:[%s276 + $0x8] sm:$0xff]
      %v471 = vlaneseq
      %v472 = vand.u32 %v471, 127
      %s473 = smul.u32 %s21, 128
      %v474 = vstv %s473
      %v475 = vadd.s32 %v472, %v474
      %476 = vset.pattern.permute.xlu0 0
      %477 = vperm.xlu0 %476, %v469
      %v478 = vpop.permute.xlu0 %477
      %479 = vset.pattern.permute.xlu0 0
      %480 = vperm.xlu0 %479, %v470
      %v481 = vpop.permute.xlu0 %480
      %vm482 = vcmp.eq.s32.totalorder %v475, %v478
      %vm483 = vcmp.eq.s32.totalorder %v475, %v481
      %v484 = vsel %vm482, 1, 0
      %v485 = vsel %vm483, 1, 0
      %v486 = vcvt.s32.f32 %v484
      %v487 = vcvt.s32.f32 %v485
      %v488 = vld [vmem:[#allocation4] sm:$0xff]
      %v489 = vld [vmem:[#allocation4 + $0x8] sm:$0xff]
      %v490 = vmul.f32 %v463, %v486
      %v491 = vmul.f32 %v466, %v487
      %492 = vadd.xlane.f32.xlu0 %v490
      %v493 = vpop.xlane.xlu0 %492
      %494 = vadd.xlane.f32.xlu0 %v491
      %v495 = vpop.xlane.xlu0 %494
      %v496 = vadd.f32 %v488, %v493
      %v497 = vadd.f32 %v489, %v495
      %vm498 = vcmask 7168
      %499 = vst.msk [vmem:[#allocation4] sm:$0xff] %vm498, %v496
      %500 = vst.msk [vmem:[#allocation4 + $0x8] sm:$0xff] %vm498, %v497
      %v501 = vld [vmem:[#allocation2] sm:$0xff]
      %v502 = vld [vmem:[#allocation2 + $0x8] sm:$0xff]
      %503 = vmax.xlane.f32.xlu0 %v463
      %v504 = vpop.xlane.xlu0 %503
      %505 = vmax.xlane.f32.xlu0 %v466
      %v506 = vpop.xlane.xlu0 %505
      %v507 = vmax.f32 %v501, %v504
      %v508 = vmax.f32 %v502, %v506
      %v509 = vld [vmem:[#allocation3] sm:$0xff]
      %v510 = vld [vmem:[#allocation3 + $0x8] sm:$0xff]
      %v511 = vsub.f32 %v501, %v507
      %v512 = vsub.f32 %v502, %v508
      %v513 = vmul.f32 %v511, 1.442695
      %v514 = vpow.pop %v513
      %v515 = vmul.f32 %v512, 1.442695
      %v516 = vpow.pop %v515
      %v517 = vmul.f32 %v509, %v514
      %v518 = vmul.f32 %v510, %v516
      %520 = vset.pattern.permute.xlu0 0
      %521 = vperm.xlu0 %520, %v507
      %v522 = vpop.permute.xlu0 %521
      %525 = vset.pattern.permute.xlu0 0
      %526 = vperm.xlu0 %525, %v508
      %v527 = vpop.permute.xlu0 %526
      %v529 = vsub.f32 %v463, %v522
      %v530 = vsub.f32 %v466, %v527
      %v531 = vmul.f32 %v529, 1.442695
      %v532 = vpow.pop %v531
      %v533 = vmul.f32 %v530, 1.442695
      %v534 = vpow.pop %v533
      %535 = vadd.xlane.f32.xlu0 %v532
      %v536 = vpop.xlane.xlu0 %535
      %537 = vadd.xlane.f32.xlu0 %v534
      %v538 = vpop.xlane.xlu0 %537
      %v539 = vadd.f32 %v517, %v536
      %v540 = vadd.f32 %v518, %v538
      %541 = vst.msk [vmem:[#allocation3] sm:$0xff] %vm498, %v539
      %542 = vst.msk [vmem:[#allocation3 + $0x8] sm:$0xff] %vm498, %v540
      %543 = vst.msk [vmem:[#allocation2] sm:$0xff] %vm498, %v507
      %544 = vst.msk [vmem:[#allocation2 + $0x8] sm:$0xff] %vm498, %v508
      %p545 = scmp.eq.s32.totalorder %s21, 1
      // Predicated region
      $region45: #{_lambda_.13} parent=39 // pred_check
        %p546 = pneg %p545
      $region46: #{_lambda_.13} parent=39 // pred_check_branch
        %548 = sbr.rel (%p546) target = $region48
      $region47: #{_lambda_.13} parent=39 // pred_region
        %v549 = vld [vmem:[#allocation2] sm:$0xff]
        %v550 = vld [vmem:[#allocation2 + $0x8] sm:$0xff]
        %v551 = vld [vmem:[#allocation3] sm:$0xff]
        %v552 = vld [vmem:[#allocation3 + $0x8] sm:$0xff]
        %v553 = vlog2.pop %v551
        %v554 = vmul.f32 %v553, 0.6931472
        %v555 = vlog2.pop %v552
        %v556 = vmul.f32 %v555, 0.6931472
        %v557 = vadd.f32 %v549, %v554
        %v558 = vadd.f32 %v550, %v556
        %v559 = vld [vmem:[#allocation4] sm:$0xff]
        %v560 = vld [vmem:[#allocation4 + $0x8] sm:$0xff]
        %v561 = vsub.f32 %v557, %v559
        %v562 = vsub.f32 %v558, %v560
        %563 = vst.msk [vmem:[%s282] sm:$0xff] %vm498, %v561
        %564 = vst.msk [vmem:[%s282 + $0x8] sm:$0xff] %vm498, %v562
      $region48: #{_lambda_.13} parent=39 // pred_fallthru
        _
      %s565 = smul.u32 2, %s20
      %p566 = scmp.lt.s32.totalorder %s565, 3
      %s567 = scalar_select %p566, %s565, 3
      %s568 = smul.addr %s567, 8
      %s569 = scalar_lea.vmem %s5, %s568
      // Predicated region
      $region49: #{_lambda_.13} parent=39 // pred_check
        %p570 = pneg %p166
      $region50: #{_lambda_.13} parent=39 // pred_check_branch
        %572 = sbr.rel (%p570) target = $region52
      $region51: #{_lambda_.13} parent=39 // pred_region
        %s573 = smul.u32 2, %s20
      $region52: #{_lambda_.13} parent=39 // pred_fallthru
        _
    $region40: #{_lambda_.13} parent=5 // pred_fallthru
      _
    %p574 = scmp.le.s32.totalorder 2, %s11
    // Predicated region
    $region53: #{_lambda_.13} parent=5 // pred_check
      %p575 = pneg %p574
    $region54: #{_lambda_.13} parent=5 // pred_check_branch
      %577 = sbr.rel (%p575) target = $region56
    $region55: #{_lambda_.13} parent=5 // pred_region
      %s578 = ssub.s32 %s11, 2
      // Predicated region
      $region57: #{_lambda_.13} parent=55 // pred_check
        %p579 = pneg %p172
      $region58: #{_lambda_.13} parent=55 // pred_check_branch
        %581 = sbr.rel (%p579) target = $region60
      $region59: #{_lambda_.13} parent=55 // pred_region
        %s582 = smul.u32 2, %s22
        %p583 = scmp.lt.s32.totalorder %s582, 3
        %s584 = scalar_select %p583, %s582, 3
        %s585 = smul.addr %s584, 8
        %s586 = scalar_lea.vmem %s5, %s585
      $region60: #{_lambda_.13} parent=55 // pred_fallthru
        _
    $region56: #{_lambda_.13} parent=5 // pred_fallthru
      _
  $region6: #{_lambda_.13} parent=0 // loop_footer
    %s15 = sadd.s32 1, %s11
  $region7: #{_lambda_.13} parent=0 // loop_footer_branch
    %10 = sbr.rel target = $region3
  $region8: #{_lambda_.13} parent=0 // loop_exit
    _

</llo_original>
